<compile_context>
chip_gen: v7x
topology: tpu7x:2x2x1
jax: 0.10.0
libtpu: 0.0.40
codegen_flags: <defaults>
</compile_context>

<pallas_src>
import jax
import jax.numpy as jnp
from jax import lax
from jax.experimental import pallas as pl
from jax.experimental.pallas import tpu as pltpu


def _gru_block_kernel(x_ref, wih_ref, whh_ref, b_rzn_ref, b_hn_ref,
                      out_ref, h_ref, gi_ref):
    """One time-block of the GRU recurrence.

    x_ref     : (TB*Bp, D)     time-major input rows for this block
    wih_ref   : (D,  3*Hp)     fused input->hidden weights, column order [r|z|n]
    whh_ref   : (Hp, 3*Hp)     fused hidden->hidden weights, column order [r|z|n]
    b_rzn_ref : (1, 3*Hp)      [b_ih_r+b_hh_r | b_ih_z+b_hh_z | b_ih_n]
    b_hn_ref  : (1, Hp)        b_hh_n (stays inside the loop, gated by r)
    out_ref   : (TB*Bp, Hp)    output rows for this block
    h_ref     : (Bp, Hp)       hidden-state carry (VMEM scratch, persists across grid)
    gi_ref    : (TB*Bp, 3*Hp)  scratch for the hoisted fused input projection
    """
    i = pl.program_id(0)
    rows = x_ref.shape[0]
    batch, hp = h_ref.shape
    tb = rows // batch

    # regress_hidden_state = zeros(1, B, H)
    @pl.when(i == 0)
    def _():
        h_ref[...] = jnp.zeros_like(h_ref)

    # ---- Hoisted fused input projection: ONE (rows, D) x (D, 3Hp) MXU matmul per block ----
    gi_ref[...] = (jnp.dot(x_ref[...], wih_ref[...],
                           preferred_element_type=jnp.float32)
                   + b_rzn_ref[...])

    # Resident fused recurrent weights (loaded once per block, hoisted out of the loop).
    w_rzn = whh_ref[...]
    mm_dtype = w_rzn.dtype
    # Hoist the (1,Hp) -> (batch,Hp) broadcast out of the loop (JAX does not CSE it).
    b_hn = jnp.broadcast_to(b_hn_ref[...], (batch, hp))

    # ---- Sequential recurrence over the TB time steps of this block ----
    def step(j, h):
        row = pl.multiple_of(j * batch, batch)   # batch is a sublane multiple -> aligned slices
        sl = pl.ds(row, batch)
        # ONE fused (batch, Hp) x (Hp, 3Hp) matmul per step; lane-aligned gate slices.
        gh = jnp.dot(h.astype(mm_dtype), w_rzn, preferred_element_type=jnp.float32)
        r = jax.nn.sigmoid(gi_ref[sl, 0 * hp:1 * hp] + gh[:, 0 * hp:1 * hp])
        z = jax.nn.sigmoid(gi_ref[sl, 1 * hp:2 * hp] + gh[:, 1 * hp:2 * hp])
        n = jnp.tanh(gi_ref[sl, 2 * hp:3 * hp] + r * (gh[:, 2 * hp:3 * hp] + b_hn))
        h_new = (1.0 - z) * n + z * h
        out_ref[sl, :] = h_new.astype(out_ref.dtype)
        return h_new

    # Cap unrolling by the live-register footprint of one step (~7 live (Bp,Hp) f32 tensors).
    step_vregs = 7 * max(1, (batch * hp * 4) // 4096)
    if step_vregs <= 24:
        unroll = min(tb, 8)
    elif step_vregs <= 48:
        unroll = min(tb, 4)
    else:
        unroll = min(tb, 2)
    h_ref[...] = lax.fori_loop(0, tb, step, h_ref[...], unroll=max(1, unroll))


def autoregressor_forward(x, w_ih, w_hh, b_ih, b_hh, *,
                          use_bf16_matmul=False, max_block_rows=1024):
    """GRU forward pass (zero initial hidden state), returns the full output sequence.

    x    : (B, T, D) float32   (batch_first, PyTorch layout)
    w_ih : (3H, D)   PyTorch layout (gate order r, z, n)
    w_hh : (3H, H)
    b_ih : (3H,)
    b_hh : (3H,)
    returns (B, T, H) float32

    use_bf16_matmul: cast only the MXU inputs (x and weights) to bf16; keep f32
    accumulation, f32 hidden carry and f32 elementwise math.
    """
    B, T, D = x.shape
    H = w_hh.shape[1]
    Hp = ((H + 127) // 128) * 128                 # lane-dense hidden width
    sub = 16 if use_bf16_matmul else 8            # sublane multiple of the matmul dtype
    Bp = ((B + sub - 1) // sub) * sub             # sublane-dense batch

    f32 = jnp.float32
    mm = jnp.bfloat16 if use_bf16_matmul else f32
    itemsize = 2 if use_bf16_matmul else 4

    def pad_cols(m):                              # (.., H) -> (.., Hp), zero-padded lanes
        return jnp.pad(m, ((0, 0), (0, Hp - H)))

    # ---- Split fused gates (r, z, n), transpose to (in, out), lane-pad, re-fuse along out ----
    wih = w_ih.astype(f32)
    whh = w_hh.astype(f32)
    wih_rzn = jnp.concatenate(
        [pad_cols(wih[g * H:(g + 1) * H].T) for g in range(3)], axis=1)            # (D, 3Hp)
    whh_rzn = jnp.concatenate(
        [jnp.pad(whh[g * H:(g + 1) * H].T, ((0, Hp - H), (0, Hp - H)))
         for g in range(3)], axis=1)                                                # (Hp, 3Hp)

    bih = b_ih.astype(f32)
    bhh = b_hh.astype(f32)
    b_parts = (bih[0:H] + bhh[0:H],               # r: input+hidden biases fold exactly
               bih[H:2 * H] + bhh[H:2 * H],       # z: likewise
               bih[2 * H:3 * H])                  # n: input bias only (hidden part gated by r)
    b_rzn = jnp.concatenate([pad_cols(b.reshape(1, H)) for b in b_parts], axis=1)   # (1, 3Hp)
    b_hn = pad_cols(bhh[2 * H:3 * H].reshape(1, H))                                  # (1, Hp)

    # ---- Time-major layout + sublane-dense batch padding (plain XLA layout plumbing) ----
    x_tbd = jnp.transpose(x, (1, 0, 2)).astype(f32)       # (T, B, D)
    if Bp != B:
        x_tbd = jnp.pad(x_tbd, ((0, 0), (0, Bp - B), (0, 0)))
    # TODO(synk): for very long T, fold this transpose (and the output one) into 3-D BlockSpecs.

    # ---- Time-block size from a VMEM activation budget (gi scratch + pipelined x/out blocks) ----
    bytes_per_row = 3 * Hp * 4 + 2 * D * itemsize + 2 * Hp * 4
    act_budget = 24 << 20
    rows_cap = max(Bp, act_budget // max(1, bytes_per_row))
    max_rows = max(Bp, min(max_block_rows, rows_cap))
    tb = max(1, min(T, max_rows // Bp))
    n_blocks = -(-T // tb)
    t_pad = n_blocks * tb
    if t_pad != T:
        x_tbd = jnp.pad(x_tbd, ((0, t_pad - T), (0, 0), (0, 0)))
    x_rows = x_tbd.reshape(t_pad * Bp, D).astype(mm)
    rows_blk = tb * Bp

    # ---- Optional bf16 cast of MXU inputs only ----
    wih_rzn = wih_rzn.astype(mm)
    whh_rzn = whh_rzn.astype(mm)

    # ---- Scoped-VMEM budget: params (worst-case double-buffered) + block working set ----
    param_bytes = (wih_rzn.size + whh_rzn.size) * itemsize + (b_rzn.size + b_hn.size) * 4
    block_bytes = rows_blk * bytes_per_row + (Bp * Hp + rows_blk * 3 * Hp) * 4
    vmem_limit = int(min(max(2 * param_bytes + block_bytes + (8 << 20), 32 << 20), 100 << 20))

    def build(param_mode):
        kw = {} if param_mode is None else {"pipeline_mode": param_mode}

        def const2d(shape):
            # Resident parameters: constant block index across the sequential time grid.
            return pl.BlockSpec(shape, lambda i: (0, 0), **kw)

        return pl.pallas_call(
            _gru_block_kernel,
            out_shape=jax.ShapeDtypeStruct((t_pad * Bp, Hp), f32),
            grid_spec=pltpu.PrefetchScalarGridSpec(
                num_scalar_prefetch=0,
                grid=(n_blocks,),
                in_specs=[
                    pl.BlockSpec((rows_blk, D), lambda i: (i, 0)),   # x time-block
                    const2d((D, 3 * Hp)),                            # fused W_ih [r|z|n]
                    const2d((Hp, 3 * Hp)),                           # fused W_hh [r|z|n]
                    const2d((1, 3 * Hp)),                            # fused biases [r|z|n-in]
                    const2d((1, Hp)),                                # b_hh_n
                ],
                out_specs=pl.BlockSpec((rows_blk, Hp), lambda i: (i, 0)),
                scratch_shapes=[
                    pltpu.VMEM((Bp, Hp), f32),                 # hidden-state carry
                    pltpu.VMEM((rows_blk, 3 * Hp), f32),       # fused gi scratch
                ],
            ),
            compiler_params=pltpu.CompilerParams(
                dimension_semantics=("arbitrary",),   # recurrence: time blocks run in order
                vmem_limit_bytes=vmem_limit,
            ),
        )

    # TODO(synk): on v7x, add a leading "parallel" grid axis over batch halves to use both TCs.
    # TODO(synk): for very long sequences, precompute gi = X @ W_ih in a separate parallel pass
    #             (bf16 in HBM) and stream it here, freeing W_ih/x from the sequential kernel.
    # TODO(synk): for Hp <= 256, drive the MXU explicitly (matmul_push_rhs / acc_lhs / pop) to
    #             avoid re-streaming W_hh through the systolic array every time step.
    args = (x_rows, wih_rzn, whh_rzn, b_rzn, b_hn)
    try:
        # Single-buffer the never-changing resident parameters (halves their VMEM footprint).
        out_rows = jax.block_until_ready(build(pl.Buffered(1))(*args))
    except Exception:
        # Fallback for jax versions where BlockSpec pipeline_mode / Buffered(1) is unsupported.
        out_rows = build(None)(*args)

    out = out_rows.reshape(t_pad, Bp, Hp)[:T, :B, :H]
    return jnp.transpose(out, (1, 0, 2))                  # (B, T, H)


def _gru_reference(x, w_ih, w_hh, b_ih, b_hh):
    """Pure-JAX reference (lax.scan) matching torch.nn.GRU semantics."""
    B, T, D = x.shape
    H = w_hh.shape[1]

    def step(h, x_t):
        gi = x_t @ w_ih.T + b_ih
        gh = h @ w_hh.T + b_hh
        i_r, i_z, i_n = gi[:, :H], gi[:, H:2 * H], gi[:, 2 * H:]
        h_r, h_z, h_n = gh[:, :H], gh[:, H:2 * H], gh[:, 2 * H:]
        r = jax.nn.sigmoid(i_r + h_r)
        z = jax.nn.sigmoid(i_z + h_z)
        n = jnp.tanh(i_n + r * h_n)
        h_new = (1.0 - z) * n + z * h
        return h_new, h_new

    h0 = jnp.zeros((B, H), jnp.float32)
    _, ys = lax.scan(step, h0, jnp.transpose(x, (1, 0, 2)))
    return jnp.transpose(ys, (1, 0, 2))


if __name__ == "__main__":
    # Small shapes consistent with the module's forward: input (B, T, input_size), hidden_dim H.
    B, T, D, H = 2, 8, 16, 32

    key = jax.random.PRNGKey(0)
    kx, k1, k2, k3, k4 = jax.random.split(key, 5)

    x = jax.random.normal(kx, (B, T, D), dtype=jnp.float32)

    # Deterministic synthetic GRU parameters (PyTorch shapes: (3H, D), (3H, H), (3H,), (3H,)).
    bound = 1.0 / jnp.sqrt(H)
    w_ih = jax.random.uniform(k1, (3 * H, D), jnp.float32, -bound, bound)
    w_hh = jax.random.uniform(k2, (3 * H, H), jnp.float32, -bound, bound)
    b_ih = jax.random.uniform(k3, (3 * H,), jnp.float32, -bound, bound)
    b_hh = jax.random.uniform(k4, (3 * H,), jnp.float32, -bound, bound)

    ref = _gru_reference(x, w_ih, w_hh, b_ih, b_hh)

    # f32 MXU path: tight tolerance.
    out = jax.block_until_ready(autoregressor_forward(x, w_ih, w_hh, b_ih, b_hh))
    assert out.shape == (B, T, H), out.shape
    assert jnp.allclose(out, ref, atol=1e-5, rtol=1e-5), "f32 path mismatch vs reference"

    # bf16 MXU path (f32 accumulate / carry / elementwise): looser tolerance.
    out_bf16 = jax.block_until_ready(
        autoregressor_forward(x, w_ih, w_hh, b_ih, b_hh, use_bf16_matmul=True))
    assert out_bf16.shape == (B, T, H), out_bf16.shape
    assert jnp.allclose(out_bf16, ref, atol=5e-2, rtol=5e-2), "bf16 path mismatch vs reference"

    print("KERNEL_OK")
</pallas_src>

<mosaic_0001>
module attributes {stable_mosaic.version = 11 : i64} {
  func.func @_gru_block_kernel(%arg0: i32, %arg1: memref<64x16xf32, #tpu.memory_space<vmem>>, %arg2: memref<16x384xf32, #tpu.memory_space<vmem>>, %arg3: memref<128x384xf32, #tpu.memory_space<vmem>>, %arg4: memref<1x384xf32, #tpu.memory_space<vmem>>, %arg5: memref<1x128xf32, #tpu.memory_space<vmem>>, %arg6: memref<64x128xf32, #tpu.memory_space<vmem>>, %arg7: memref<8x128xf32, #tpu.memory_space<vmem>>, %arg8: memref<64x384xf32, #tpu.memory_space<vmem>>) attributes {dimension_semantics = [#tpu.dimension_semantics<arbitrary>], iteration_bounds = array<i64: 1>, scalar_prefetch = 0 : i64, scratch_operands = 2 : i64, tpu.core_type = #tpu.core_type<tc>, window_params = [{transform_indices = @transform_0, window_bounds = array<i64: 64, 16>}, {pipeline_mode = #tpu.pipeline_mode<synchronous>, transform_indices = @transform_1, window_bounds = array<i64: 16, 384>}, {pipeline_mode = #tpu.pipeline_mode<synchronous>, transform_indices = @transform_2, window_bounds = array<i64: 128, 384>}, {pipeline_mode = #tpu.pipeline_mode<synchronous>, transform_indices = @transform_3, window_bounds = array<i64: 1, 384>}, {pipeline_mode = #tpu.pipeline_mode<synchronous>, transform_indices = @transform_4, window_bounds = array<i64: 1, 128>}, {transform_indices = @transform_5, window_bounds = array<i64: 64, 128>}]} {
    %c0_i32 = arith.constant 0 : i32
    %0 = arith.cmpi eq, %arg0, %c0_i32 : i32
    %1 = arith.extui %0 : i1 to i32
    %c0_i32_0 = arith.constant 0 : i32
    %2 = arith.cmpi ne, %1, %c0_i32_0 : i32
    scf.if %2 {
      %cst_87 = arith.constant 0.000000e+00 : f32
      %296 = vector.broadcast %cst_87 : f32 to vector<8x128xf32>
      %c0_88 = arith.constant 0 : index
      %c0_89 = arith.constant 0 : index
      %297 = vector.load %arg7[%c0_88, %c0_89] : memref<8x128xf32, #tpu.memory_space<vmem>>, vector<8x128xf32>
      tpu.vector_store %arg7[%c0_88, %c0_89], %296 {strides = array<i32>} : memref<8x128xf32, #tpu.memory_space<vmem>>, vector<8x128xf32>,
    } else {
    }
    %c0 = arith.constant 0 : index
    %c0_1 = arith.constant 0 : index
    %3 = vector.load %arg1[%c0, %c0_1] : memref<64x16xf32, #tpu.memory_space<vmem>>, vector<64x16xf32>
    %c0_2 = arith.constant 0 : index
    %c0_3 = arith.constant 0 : index
    %4 = vector.load %arg2[%c0_2, %c0_3] : memref<16x384xf32, #tpu.memory_space<vmem>>, vector<16x384xf32>
    %cst = arith.constant dense<0.000000e+00> : vector<64x384xf32>
    %5 = tpu.matmul %3, %4, %cst {dimension_numbers = #tpu.dot_dimension_numbers<[1], [0], [0], [1], [0, 0, 1, 1], [], []>} : vector<64x16xf32>, vector<16x384xf32>, vector<64x384xf32> -> vector<64x384xf32>
    %c0_4 = arith.constant 0 : index
    %c0_5 = arith.constant 0 : index
    %6 = vector.load %arg4[%c0_4, %c0_5] : memref<1x384xf32, #tpu.memory_space<vmem>>, vector<1x384xf32>
    %7 = vector.broadcast %6 : vector<1x384xf32> to vector<64x384xf32>
    %8 = arith.addf %5, %7 : vector<64x384xf32>
    %c0_6 = arith.constant 0 : index
    %c0_7 = arith.constant 0 : index
    %9 = vector.load %arg8[%c0_6, %c0_7] : memref<64x384xf32, #tpu.memory_space<vmem>>, vector<64x384xf32>
    tpu.vector_store %arg8[%c0_6, %c0_7], %8 {strides = array<i32>} : memref<64x384xf32, #tpu.memory_space<vmem>>, vector<64x384xf32>,
    %c0_8 = arith.constant 0 : index
    %c0_9 = arith.constant 0 : index
    %10 = vector.load %arg3[%c0_8, %c0_9] : memref<128x384xf32, #tpu.memory_space<vmem>>, vector<128x384xf32>
    %c0_10 = arith.constant 0 : index
    %c0_11 = arith.constant 0 : index
    %11 = vector.load %arg5[%c0_10, %c0_11] : memref<1x128xf32, #tpu.memory_space<vmem>>, vector<1x128xf32>
    %12 = vector.shape_cast %11 : vector<1x128xf32> to vector<1x128xf32>
    %13 = vector.broadcast %12 : vector<1x128xf32> to vector<8x128xf32>
    %c0_12 = arith.constant 0 : index
    %c0_13 = arith.constant 0 : index
    %14 = vector.load %arg7[%c0_12, %c0_13] : memref<8x128xf32, #tpu.memory_space<vmem>>, vector<8x128xf32>
    %c0_i32_14 = arith.constant 0 : i32
    %c8_i32 = arith.constant 8 : i32
    %15 = arith.muli %c0_i32_14, %c8_i32 : i32
    %16 = tpu.assume_multiple %15, 8 : i32
    %cst_15 = arith.constant dense<0.000000e+00> : vector<8x384xf32>
    %17 = tpu.matmul %14, %10, %cst_15 {dimension_numbers = #tpu.dot_dimension_numbers<[1], [0], [0], [1], [0, 0, 1, 1], [], []>} : vector<8x128xf32>, vector<128x384xf32>, vector<8x384xf32> -> vector<8x384xf32>
    %18 = arith.index_cast %16 : i32 to index
    %c0_16 = arith.constant 0 : index
    %19 = vector.load %arg8[%18, %c0_16] : memref<64x384xf32, #tpu.memory_space<vmem>>, vector<8x128xf32>
    %20 = vector.extract_strided_slice %17 {offsets = [0, 0], sizes = [8, 128], strides = [1, 1]} : vector<8x384xf32> to vector<8x128xf32>
    %21 = arith.addf %19, %20 : vector<8x128xf32>
    %22 = arith.negf %21 : vector<8x128xf32>
    %23 = math.exp %22 : vector<8x128xf32>
    %cst_17 = arith.constant 1.000000e+00 : f32
    %24 = vector.broadcast %cst_17 : f32 to vector<8x128xf32>
    %25 = arith.addf %24, %23 : vector<8x128xf32>
    %26 = arith.divf %24, %25 : vector<8x128xf32>
    %27 = arith.index_cast %16 : i32 to index
    %c128 = arith.constant 128 : index
    %28 = vector.load %arg8[%27, %c128] : memref<64x384xf32, #tpu.memory_space<vmem>>, vector<8x128xf32>
    %29 = vector.extract_strided_slice %17 {offsets = [0, 128], sizes = [8, 128], strides = [1, 1]} : vector<8x384xf32> to vector<8x128xf32>
    %30 = arith.addf %28, %29 : vector<8x128xf32>
    %31 = arith.negf %30 : vector<8x128xf32>
    %32 = math.exp %31 : vector<8x128xf32>
    %cst_18 = arith.constant 1.000000e+00 : f32
    %33 = vector.broadcast %cst_18 : f32 to vector<8x128xf32>
    %34 = arith.addf %33, %32 : vector<8x128xf32>
    %35 = arith.divf %33, %34 : vector<8x128xf32>
    %36 = arith.index_cast %16 : i32 to index
    %c256 = arith.constant 256 : index
    %37 = vector.load %arg8[%36, %c256] : memref<64x384xf32, #tpu.memory_space<vmem>>, vector<8x128xf32>
    %38 = vector.extract_strided_slice %17 {offsets = [0, 256], sizes = [8, 128], strides = [1, 1]} : vector<8x384xf32> to vector<8x128xf32>
    %39 = arith.addf %38, %13 : vector<8x128xf32>
    %40 = arith.mulf %26, %39 : vector<8x128xf32>
    %41 = arith.addf %37, %40 : vector<8x128xf32>
    %42 = math.tanh %41 : vector<8x128xf32>
    %cst_19 = arith.constant 1.000000e+00 : f32
    %43 = vector.broadcast %cst_19 : f32 to vector<8x128xf32>
    %44 = arith.subf %43, %35 : vector<8x128xf32>
    %45 = arith.mulf %44, %42 : vector<8x128xf32>
    %46 = arith.mulf %35, %14 : vector<8x128xf32>
    %47 = arith.addf %45, %46 : vector<8x128xf32>
    %48 = arith.index_cast %16 : i32 to index
    %c0_20 = arith.constant 0 : index
    %49 = vector.load %arg6[%48, %c0_20] : memref<64x128xf32, #tpu.memory_space<vmem>>, vector<8x128xf32>
    tpu.vector_store %arg6[%48, %c0_20], %47 {strides = array<i32>} : memref<64x128xf32, #tpu.memory_space<vmem>>, vector<8x128xf32>,
    %c1_i32 = arith.constant 1 : i32
    %c8_i32_21 = arith.constant 8 : i32
    %50 = arith.muli %c1_i32, %c8_i32_21 : i32
    %51 = tpu.assume_multiple %50, 8 : i32
    %cst_22 = arith.constant dense<0.000000e+00> : vector<8x384xf32>
    %52 = tpu.matmul %47, %10, %cst_22 {dimension_numbers = #tpu.dot_dimension_numbers<[1], [0], [0], [1], [0, 0, 1, 1], [], []>} : vector<8x128xf32>, vector<128x384xf32>, vector<8x384xf32> -> vector<8x384xf32>
    %53 = arith.index_cast %51 : i32 to index
    %c0_23 = arith.constant 0 : index
    %54 = vector.load %arg8[%53, %c0_23] : memref<64x384xf32, #tpu.memory_space<vmem>>, vector<8x128xf32>
    %55 = vector.extract_strided_slice %52 {offsets = [0, 0], sizes = [8, 128], strides = [1, 1]} : vector<8x384xf32> to vector<8x128xf32>
    %56 = arith.addf %54, %55 : vector<8x128xf32>
    %57 = arith.negf %56 : vector<8x128xf32>
    %58 = math.exp %57 : vector<8x128xf32>
    %cst_24 = arith.constant 1.000000e+00 : f32
    %59 = vector.broadcast %cst_24 : f32 to vector<8x128xf32>
    %60 = arith.addf %59, %58 : vector<8x128xf32>
    %61 = arith.divf %59, %60 : vector<8x128xf32>
    %62 = arith.index_cast %51 : i32 to index
    %c128_25 = arith.constant 128 : index
    %63 = vector.load %arg8[%62, %c128_25] : memref<64x384xf32, #tpu.memory_space<vmem>>, vector<8x128xf32>
    %64 = vector.extract_strided_slice %52 {offsets = [0, 128], sizes = [8, 128], strides = [1, 1]} : vector<8x384xf32> to vector<8x128xf32>
    %65 = arith.addf %63, %64 : vector<8x128xf32>
    %66 = arith.negf %65 : vector<8x128xf32>
    %67 = math.exp %66 : vector<8x128xf32>
    %cst_26 = arith.constant 1.000000e+00 : f32
    %68 = vector.broadcast %cst_26 : f32 to vector<8x128xf32>
    %69 = arith.addf %68, %67 : vector<8x128xf32>
    %70 = arith.divf %68, %69 : vector<8x128xf32>
    %71 = arith.index_cast %51 : i32 to index
    %c256_27 = arith.constant 256 : index
    %72 = vector.load %arg8[%71, %c256_27] : memref<64x384xf32, #tpu.memory_space<vmem>>, vector<8x128xf32>
    %73 = vector.extract_strided_slice %52 {offsets = [0, 256], sizes = [8, 128], strides = [1, 1]} : vector<8x384xf32> to vector<8x128xf32>
    %74 = arith.addf %73, %13 : vector<8x128xf32>
    %75 = arith.mulf %61, %74 : vector<8x128xf32>
    %76 = arith.addf %72, %75 : vector<8x128xf32>
    %77 = math.tanh %76 : vector<8x128xf32>
    %cst_28 = arith.constant 1.000000e+00 : f32
    %78 = vector.broadcast %cst_28 : f32 to vector<8x128xf32>
    %79 = arith.subf %78, %70 : vector<8x128xf32>
    %80 = arith.mulf %79, %77 : vector<8x128xf32>
    %81 = arith.mulf %70, %47 : vector<8x128xf32>
    %82 = arith.addf %80, %81 : vector<8x128xf32>
    %83 = arith.index_cast %51 : i32 to index
    %c0_29 = arith.constant 0 : index
    %84 = vector.load %arg6[%83, %c0_29] : memref<64x128xf32, #tpu.memory_space<vmem>>, vector<8x128xf32>
    tpu.vector_store %arg6[%83, %c0_29], %82 {strides = array<i32>} : memref<64x128xf32, #tpu.memory_space<vmem>>, vector<8x128xf32>,
    %c2_i32 = arith.constant 2 : i32
    %c8_i32_30 = arith.constant 8 : i32
    %85 = arith.muli %c2_i32, %c8_i32_30 : i32
    %86 = tpu.assume_multiple %85, 8 : i32
    %cst_31 = arith.constant dense<0.000000e+00> : vector<8x384xf32>
    %87 = tpu.matmul %82, %10, %cst_31 {dimension_numbers = #tpu.dot_dimension_numbers<[1], [0], [0], [1], [0, 0, 1, 1], [], []>} : vector<8x128xf32>, vector<128x384xf32>, vector<8x384xf32> -> vector<8x384xf32>
    %88 = arith.index_cast %86 : i32 to index
    %c0_32 = arith.constant 0 : index
    %89 = vector.load %arg8[%88, %c0_32] : memref<64x384xf32, #tpu.memory_space<vmem>>, vector<8x128xf32>
    %90 = vector.extract_strided_slice %87 {offsets = [0, 0], sizes = [8, 128], strides = [1, 1]} : vector<8x384xf32> to vector<8x128xf32>
    %91 = arith.addf %89, %90 : vector<8x128xf32>
    %92 = arith.negf %91 : vector<8x128xf32>
    %93 = math.exp %92 : vector<8x128xf32>
    %cst_33 = arith.constant 1.000000e+00 : f32
    %94 = vector.broadcast %cst_33 : f32 to vector<8x128xf32>
    %95 = arith.addf %94, %93 : vector<8x128xf32>
    %96 = arith.divf %94, %95 : vector<8x128xf32>
    %97 = arith.index_cast %86 : i32 to index
    %c128_34 = arith.constant 128 : index
    %98 = vector.load %arg8[%97, %c128_34] : memref<64x384xf32, #tpu.memory_space<vmem>>, vector<8x128xf32>
    %99 = vector.extract_strided_slice %87 {offsets = [0, 128], sizes = [8, 128], strides = [1, 1]} : vector<8x384xf32> to vector<8x128xf32>
    %100 = arith.addf %98, %99 : vector<8x128xf32>
    %101 = arith.negf %100 : vector<8x128xf32>
    %102 = math.exp %101 : vector<8x128xf32>
    %cst_35 = arith.constant 1.000000e+00 : f32
    %103 = vector.broadcast %cst_35 : f32 to vector<8x128xf32>
    %104 = arith.addf %103, %102 : vector<8x128xf32>
    %105 = arith.divf %103, %104 : vector<8x128xf32>
    %106 = arith.index_cast %86 : i32 to index
    %c256_36 = arith.constant 256 : index
    %107 = vector.load %arg8[%106, %c256_36] : memref<64x384xf32, #tpu.memory_space<vmem>>, vector<8x128xf32>
    %108 = vector.extract_strided_slice %87 {offsets = [0, 256], sizes = [8, 128], strides = [1, 1]} : vector<8x384xf32> to vector<8x128xf32>
    %109 = arith.addf %108, %13 : vector<8x128xf32>
    %110 = arith.mulf %96, %109 : vector<8x128xf32>
    %111 = arith.addf %107, %110 : vector<8x128xf32>
    %112 = math.tanh %111 : vector<8x128xf32>
    %cst_37 = arith.constant 1.000000e+00 : f32
    %113 = vector.broadcast %cst_37 : f32 to vector<8x128xf32>
    %114 = arith.subf %113, %105 : vector<8x128xf32>
    %115 = arith.mulf %114, %112 : vector<8x128xf32>
    %116 = arith.mulf %105, %82 : vector<8x128xf32>
    %117 = arith.addf %115, %116 : vector<8x128xf32>
    %118 = arith.index_cast %86 : i32 to index
    %c0_38 = arith.constant 0 : index
    %119 = vector.load %arg6[%118, %c0_38] : memref<64x128xf32, #tpu.memory_space<vmem>>, vector<8x128xf32>
    tpu.vector_store %arg6[%118, %c0_38], %117 {strides = array<i32>} : memref<64x128xf32, #tpu.memory_space<vmem>>, vector<8x128xf32>,
    %c3_i32 = arith.constant 3 : i32
    %c8_i32_39 = arith.constant 8 : i32
    %120 = arith.muli %c3_i32, %c8_i32_39 : i32
    %121 = tpu.assume_multiple %120, 8 : i32
    %cst_40 = arith.constant dense<0.000000e+00> : vector<8x384xf32>
    %122 = tpu.matmul %117, %10, %cst_40 {dimension_numbers = #tpu.dot_dimension_numbers<[1], [0], [0], [1], [0, 0, 1, 1], [], []>} : vector<8x128xf32>, vector<128x384xf32>, vector<8x384xf32> -> vector<8x384xf32>
    %123 = arith.index_cast %121 : i32 to index
    %c0_41 = arith.constant 0 : index
    %124 = vector.load %arg8[%123, %c0_41] : memref<64x384xf32, #tpu.memory_space<vmem>>, vector<8x128xf32>
    %125 = vector.extract_strided_slice %122 {offsets = [0, 0], sizes = [8, 128], strides = [1, 1]} : vector<8x384xf32> to vector<8x128xf32>
    %126 = arith.addf %124, %125 : vector<8x128xf32>
    %127 = arith.negf %126 : vector<8x128xf32>
    %128 = math.exp %127 : vector<8x128xf32>
    %cst_42 = arith.constant 1.000000e+00 : f32
    %129 = vector.broadcast %cst_42 : f32 to vector<8x128xf32>
    %130 = arith.addf %129, %128 : vector<8x128xf32>
    %131 = arith.divf %129, %130 : vector<8x128xf32>
    %132 = arith.index_cast %121 : i32 to index
    %c128_43 = arith.constant 128 : index
    %133 = vector.load %arg8[%132, %c128_43] : memref<64x384xf32, #tpu.memory_space<vmem>>, vector<8x128xf32>
    %134 = vector.extract_strided_slice %122 {offsets = [0, 128], sizes = [8, 128], strides = [1, 1]} : vector<8x384xf32> to vector<8x128xf32>
    %135 = arith.addf %133, %134 : vector<8x128xf32>
    %136 = arith.negf %135 : vector<8x128xf32>
    %137 = math.exp %136 : vector<8x128xf32>
    %cst_44 = arith.constant 1.000000e+00 : f32
    %138 = vector.broadcast %cst_44 : f32 to vector<8x128xf32>
    %139 = arith.addf %138, %137 : vector<8x128xf32>
    %140 = arith.divf %138, %139 : vector<8x128xf32>
    %141 = arith.index_cast %121 : i32 to index
    %c256_45 = arith.constant 256 : index
    %142 = vector.load %arg8[%141, %c256_45] : memref<64x384xf32, #tpu.memory_space<vmem>>, vector<8x128xf32>
    %143 = vector.extract_strided_slice %122 {offsets = [0, 256], sizes = [8, 128], strides = [1, 1]} : vector<8x384xf32> to vector<8x128xf32>
    %144 = arith.addf %143, %13 : vector<8x128xf32>
    %145 = arith.mulf %131, %144 : vector<8x128xf32>
    %146 = arith.addf %142, %145 : vector<8x128xf32>
    %147 = math.tanh %146 : vector<8x128xf32>
    %cst_46 = arith.constant 1.000000e+00 : f32
    %148 = vector.broadcast %cst_46 : f32 to vector<8x128xf32>
    %149 = arith.subf %148, %140 : vector<8x128xf32>
    %150 = arith.mulf %149, %147 : vector<8x128xf32>
    %151 = arith.mulf %140, %117 : vector<8x128xf32>
    %152 = arith.addf %150, %151 : vector<8x128xf32>
    %153 = arith.index_cast %121 : i32 to index
    %c0_47 = arith.constant 0 : index
    %154 = vector.load %arg6[%153, %c0_47] : memref<64x128xf32, #tpu.memory_space<vmem>>, vector<8x128xf32>
    tpu.vector_store %arg6[%153, %c0_47], %152 {strides = array<i32>} : memref<64x128xf32, #tpu.memory_space<vmem>>, vector<8x128xf32>,
    %c4_i32 = arith.constant 4 : i32
    %c8_i32_48 = arith.constant 8 : i32
    %155 = arith.muli %c4_i32, %c8_i32_48 : i32
    %156 = tpu.assume_multiple %155, 8 : i32
    %cst_49 = arith.constant dense<0.000000e+00> : vector<8x384xf32>
    %157 = tpu.matmul %152, %10, %cst_49 {dimension_numbers = #tpu.dot_dimension_numbers<[1], [0], [0], [1], [0, 0, 1, 1], [], []>} : vector<8x128xf32>, vector<128x384xf32>, vector<8x384xf32> -> vector<8x384xf32>
    %158 = arith.index_cast %156 : i32 to index
    %c0_50 = arith.constant 0 : index
    %159 = vector.load %arg8[%158, %c0_50] : memref<64x384xf32, #tpu.memory_space<vmem>>, vector<8x128xf32>
    %160 = vector.extract_strided_slice %157 {offsets = [0, 0], sizes = [8, 128], strides = [1, 1]} : vector<8x384xf32> to vector<8x128xf32>
    %161 = arith.addf %159, %160 : vector<8x128xf32>
    %162 = arith.negf %161 : vector<8x128xf32>
    %163 = math.exp %162 : vector<8x128xf32>
    %cst_51 = arith.constant 1.000000e+00 : f32
    %164 = vector.broadcast %cst_51 : f32 to vector<8x128xf32>
    %165 = arith.addf %164, %163 : vector<8x128xf32>
    %166 = arith.divf %164, %165 : vector<8x128xf32>
    %167 = arith.index_cast %156 : i32 to index
    %c128_52 = arith.constant 128 : index
    %168 = vector.load %arg8[%167, %c128_52] : memref<64x384xf32, #tpu.memory_space<vmem>>, vector<8x128xf32>
    %169 = vector.extract_strided_slice %157 {offsets = [0, 128], sizes = [8, 128], strides = [1, 1]} : vector<8x384xf32> to vector<8x128xf32>
    %170 = arith.addf %168, %169 : vector<8x128xf32>
    %171 = arith.negf %170 : vector<8x128xf32>
    %172 = math.exp %171 : vector<8x128xf32>
    %cst_53 = arith.constant 1.000000e+00 : f32
    %173 = vector.broadcast %cst_53 : f32 to vector<8x128xf32>
    %174 = arith.addf %173, %172 : vector<8x128xf32>
    %175 = arith.divf %173, %174 : vector<8x128xf32>
    %176 = arith.index_cast %156 : i32 to index
    %c256_54 = arith.constant 256 : index
    %177 = vector.load %arg8[%176, %c256_54] : memref<64x384xf32, #tpu.memory_space<vmem>>, vector<8x128xf32>
    %178 = vector.extract_strided_slice %157 {offsets = [0, 256], sizes = [8, 128], strides = [1, 1]} : vector<8x384xf32> to vector<8x128xf32>
    %179 = arith.addf %178, %13 : vector<8x128xf32>
    %180 = arith.mulf %166, %179 : vector<8x128xf32>
    %181 = arith.addf %177, %180 : vector<8x128xf32>
    %182 = math.tanh %181 : vector<8x128xf32>
    %cst_55 = arith.constant 1.000000e+00 : f32
    %183 = vector.broadcast %cst_55 : f32 to vector<8x128xf32>
    %184 = arith.subf %183, %175 : vector<8x128xf32>
    %185 = arith.mulf %184, %182 : vector<8x128xf32>
    %186 = arith.mulf %175, %152 : vector<8x128xf32>
    %187 = arith.addf %185, %186 : vector<8x128xf32>
    %188 = arith.index_cast %156 : i32 to index
    %c0_56 = arith.constant 0 : index
    %189 = vector.load %arg6[%188, %c0_56] : memref<64x128xf32, #tpu.memory_space<vmem>>, vector<8x128xf32>
    tpu.vector_store %arg6[%188, %c0_56], %187 {strides = array<i32>} : memref<64x128xf32, #tpu.memory_space<vmem>>, vector<8x128xf32>,
    %c5_i32 = arith.constant 5 : i32
    %c8_i32_57 = arith.constant 8 : i32
    %190 = arith.muli %c5_i32, %c8_i32_57 : i32
    %191 = tpu.assume_multiple %190, 8 : i32
    %cst_58 = arith.constant dense<0.000000e+00> : vector<8x384xf32>
    %192 = tpu.matmul %187, %10, %cst_58 {dimension_numbers = #tpu.dot_dimension_numbers<[1], [0], [0], [1], [0, 0, 1, 1], [], []>} : vector<8x128xf32>, vector<128x384xf32>, vector<8x384xf32> -> vector<8x384xf32>
    %193 = arith.index_cast %191 : i32 to index
    %c0_59 = arith.constant 0 : index
    %194 = vector.load %arg8[%193, %c0_59] : memref<64x384xf32, #tpu.memory_space<vmem>>, vector<8x128xf32>
    %195 = vector.extract_strided_slice %192 {offsets = [0, 0], sizes = [8, 128], strides = [1, 1]} : vector<8x384xf32> to vector<8x128xf32>
    %196 = arith.addf %194, %195 : vector<8x128xf32>
    %197 = arith.negf %196 : vector<8x128xf32>
    %198 = math.exp %197 : vector<8x128xf32>
    %cst_60 = arith.constant 1.000000e+00 : f32
    %199 = vector.broadcast %cst_60 : f32 to vector<8x128xf32>
    %200 = arith.addf %199, %198 : vector<8x128xf32>
    %201 = arith.divf %199, %200 : vector<8x128xf32>
    %202 = arith.index_cast %191 : i32 to index
    %c128_61 = arith.constant 128 : index
    %203 = vector.load %arg8[%202, %c128_61] : memref<64x384xf32, #tpu.memory_space<vmem>>, vector<8x128xf32>
    %204 = vector.extract_strided_slice %192 {offsets = [0, 128], sizes = [8, 128], strides = [1, 1]} : vector<8x384xf32> to vector<8x128xf32>
    %205 = arith.addf %203, %204 : vector<8x128xf32>
    %206 = arith.negf %205 : vector<8x128xf32>
    %207 = math.exp %206 : vector<8x128xf32>
    %cst_62 = arith.constant 1.000000e+00 : f32
    %208 = vector.broadcast %cst_62 : f32 to vector<8x128xf32>
    %209 = arith.addf %208, %207 : vector<8x128xf32>
    %210 = arith.divf %208, %209 : vector<8x128xf32>
    %211 = arith.index_cast %191 : i32 to index
    %c256_63 = arith.constant 256 : index
    %212 = vector.load %arg8[%211, %c256_63] : memref<64x384xf32, #tpu.memory_space<vmem>>, vector<8x128xf32>
    %213 = vector.extract_strided_slice %192 {offsets = [0, 256], sizes = [8, 128], strides = [1, 1]} : vector<8x384xf32> to vector<8x128xf32>
    %214 = arith.addf %213, %13 : vector<8x128xf32>
    %215 = arith.mulf %201, %214 : vector<8x128xf32>
    %216 = arith.addf %212, %215 : vector<8x128xf32>
    %217 = math.tanh %216 : vector<8x128xf32>
    %cst_64 = arith.constant 1.000000e+00 : f32
    %218 = vector.broadcast %cst_64 : f32 to vector<8x128xf32>
    %219 = arith.subf %218, %210 : vector<8x128xf32>
    %220 = arith.mulf %219, %217 : vector<8x128xf32>
    %221 = arith.mulf %210, %187 : vector<8x128xf32>
    %222 = arith.addf %220, %221 : vector<8x128xf32>
    %223 = arith.index_cast %191 : i32 to index
    %c0_65 = arith.constant 0 : index
    %224 = vector.load %arg6[%223, %c0_65] : memref<64x128xf32, #tpu.memory_space<vmem>>, vector<8x128xf32>
    tpu.vector_store %arg6[%223, %c0_65], %222 {strides = array<i32>} : memref<64x128xf32, #tpu.memory_space<vmem>>, vector<8x128xf32>,
    %c6_i32 = arith.constant 6 : i32
    %c8_i32_66 = arith.constant 8 : i32
    %225 = arith.muli %c6_i32, %c8_i32_66 : i32
    %226 = tpu.assume_multiple %225, 8 : i32
    %cst_67 = arith.constant dense<0.000000e+00> : vector<8x384xf32>
    %227 = tpu.matmul %222, %10, %cst_67 {dimension_numbers = #tpu.dot_dimension_numbers<[1], [0], [0], [1], [0, 0, 1, 1], [], []>} : vector<8x128xf32>, vector<128x384xf32>, vector<8x384xf32> -> vector<8x384xf32>
    %228 = arith.index_cast %226 : i32 to index
    %c0_68 = arith.constant 0 : index
    %229 = vector.load %arg8[%228, %c0_68] : memref<64x384xf32, #tpu.memory_space<vmem>>, vector<8x128xf32>
    %230 = vector.extract_strided_slice %227 {offsets = [0, 0], sizes = [8, 128], strides = [1, 1]} : vector<8x384xf32> to vector<8x128xf32>
    %231 = arith.addf %229, %230 : vector<8x128xf32>
    %232 = arith.negf %231 : vector<8x128xf32>
    %233 = math.exp %232 : vector<8x128xf32>
    %cst_69 = arith.constant 1.000000e+00 : f32
    %234 = vector.broadcast %cst_69 : f32 to vector<8x128xf32>
    %235 = arith.addf %234, %233 : vector<8x128xf32>
    %236 = arith.divf %234, %235 : vector<8x128xf32>
    %237 = arith.index_cast %226 : i32 to index
    %c128_70 = arith.constant 128 : index
    %238 = vector.load %arg8[%237, %c128_70] : memref<64x384xf32, #tpu.memory_space<vmem>>, vector<8x128xf32>
    %239 = vector.extract_strided_slice %227 {offsets = [0, 128], sizes = [8, 128], strides = [1, 1]} : vector<8x384xf32> to vector<8x128xf32>
    %240 = arith.addf %238, %239 : vector<8x128xf32>
    %241 = arith.negf %240 : vector<8x128xf32>
    %242 = math.exp %241 : vector<8x128xf32>
    %cst_71 = arith.constant 1.000000e+00 : f32
    %243 = vector.broadcast %cst_71 : f32 to vector<8x128xf32>
    %244 = arith.addf %243, %242 : vector<8x128xf32>
    %245 = arith.divf %243, %244 : vector<8x128xf32>
    %246 = arith.index_cast %226 : i32 to index
    %c256_72 = arith.constant 256 : index
    %247 = vector.load %arg8[%246, %c256_72] : memref<64x384xf32, #tpu.memory_space<vmem>>, vector<8x128xf32>
    %248 = vector.extract_strided_slice %227 {offsets = [0, 256], sizes = [8, 128], strides = [1, 1]} : vector<8x384xf32> to vector<8x128xf32>
    %249 = arith.addf %248, %13 : vector<8x128xf32>
    %250 = arith.mulf %236, %249 : vector<8x128xf32>
    %251 = arith.addf %247, %250 : vector<8x128xf32>
    %252 = math.tanh %251 : vector<8x128xf32>
    %cst_73 = arith.constant 1.000000e+00 : f32
    %253 = vector.broadcast %cst_73 : f32 to vector<8x128xf32>
    %254 = arith.subf %253, %245 : vector<8x128xf32>
    %255 = arith.mulf %254, %252 : vector<8x128xf32>
    %256 = arith.mulf %245, %222 : vector<8x128xf32>
    %257 = arith.addf %255, %256 : vector<8x128xf32>
    %258 = arith.index_cast %226 : i32 to index
    %c0_74 = arith.constant 0 : index
    %259 = vector.load %arg6[%258, %c0_74] : memref<64x128xf32, #tpu.memory_space<vmem>>, vector<8x128xf32>
    tpu.vector_store %arg6[%258, %c0_74], %257 {strides = array<i32>} : memref<64x128xf32, #tpu.memory_space<vmem>>, vector<8x128xf32>,
    %c7_i32 = arith.constant 7 : i32
    %c8_i32_75 = arith.constant 8 : i32
    %260 = arith.muli %c7_i32, %c8_i32_75 : i32
    %261 = tpu.assume_multiple %260, 8 : i32
    %cst_76 = arith.constant dense<0.000000e+00> : vector<8x384xf32>
    %262 = tpu.matmul %257, %10, %cst_76 {dimension_numbers = #tpu.dot_dimension_numbers<[1], [0], [0], [1], [0, 0, 1, 1], [], []>} : vector<8x128xf32>, vector<128x384xf32>, vector<8x384xf32> -> vector<8x384xf32>
    %263 = arith.index_cast %261 : i32 to index
    %c0_77 = arith.constant 0 : index
    %264 = vector.load %arg8[%263, %c0_77] : memref<64x384xf32, #tpu.memory_space<vmem>>, vector<8x128xf32>
    %265 = vector.extract_strided_slice %262 {offsets = [0, 0], sizes = [8, 128], strides = [1, 1]} : vector<8x384xf32> to vector<8x128xf32>
    %266 = arith.addf %264, %265 : vector<8x128xf32>
    %267 = arith.negf %266 : vector<8x128xf32>
    %268 = math.exp %267 : vector<8x128xf32>
    %cst_78 = arith.constant 1.000000e+00 : f32
    %269 = vector.broadcast %cst_78 : f32 to vector<8x128xf32>
    %270 = arith.addf %269, %268 : vector<8x128xf32>
    %271 = arith.divf %269, %270 : vector<8x128xf32>
    %272 = arith.index_cast %261 : i32 to index
    %c128_79 = arith.constant 128 : index
    %273 = vector.load %arg8[%272, %c128_79] : memref<64x384xf32, #tpu.memory_space<vmem>>, vector<8x128xf32>
    %274 = vector.extract_strided_slice %262 {offsets = [0, 128], sizes = [8, 128], strides = [1, 1]} : vector<8x384xf32> to vector<8x128xf32>
    %275 = arith.addf %273, %274 : vector<8x128xf32>
    %276 = arith.negf %275 : vector<8x128xf32>
    %277 = math.exp %276 : vector<8x128xf32>
    %cst_80 = arith.constant 1.000000e+00 : f32
    %278 = vector.broadcast %cst_80 : f32 to vector<8x128xf32>
    %279 = arith.addf %278, %277 : vector<8x128xf32>
    %280 = arith.divf %278, %279 : vector<8x128xf32>
    %281 = arith.index_cast %261 : i32 to index
    %c256_81 = arith.constant 256 : index
    %282 = vector.load %arg8[%281, %c256_81] : memref<64x384xf32, #tpu.memory_space<vmem>>, vector<8x128xf32>
    %283 = vector.extract_strided_slice %262 {offsets = [0, 256], sizes = [8, 128], strides = [1, 1]} : vector<8x384xf32> to vector<8x128xf32>
    %284 = arith.addf %283, %13 : vector<8x128xf32>
    %285 = arith.mulf %271, %284 : vector<8x128xf32>
    %286 = arith.addf %282, %285 : vector<8x128xf32>
    %287 = math.tanh %286 : vector<8x128xf32>
    %cst_82 = arith.constant 1.000000e+00 : f32
    %288 = vector.broadcast %cst_82 : f32 to vector<8x128xf32>
    %289 = arith.subf %288, %280 : vector<8x128xf32>
    %290 = arith.mulf %289, %287 : vector<8x128xf32>
    %291 = arith.mulf %280, %257 : vector<8x128xf32>
    %292 = arith.addf %290, %291 : vector<8x128xf32>
    %293 = arith.index_cast %261 : i32 to index
    %c0_83 = arith.constant 0 : index
    %294 = vector.load %arg6[%293, %c0_83] : memref<64x128xf32, #tpu.memory_space<vmem>>, vector<8x128xf32>
    tpu.vector_store %arg6[%293, %c0_83], %292 {strides = array<i32>} : memref<64x128xf32, #tpu.memory_space<vmem>>, vector<8x128xf32>,
    %c8_i32_84 = arith.constant 8 : i32
    %c0_85 = arith.constant 0 : index
    %c0_86 = arith.constant 0 : index
    %295 = vector.load %arg7[%c0_85, %c0_86] : memref<8x128xf32, #tpu.memory_space<vmem>>, vector<8x128xf32>
    tpu.vector_store %arg7[%c0_85, %c0_86], %292 {strides = array<i32>} : memref<8x128xf32, #tpu.memory_space<vmem>>, vector<8x128xf32>,
    return
  }
  func.func @transform_0(%arg0: i32) -> (i32, i32) {
    %c0_i32 = arith.constant 0 : i32
    %c0_i32_0 = arith.constant 0 : i32
    return %arg0, %c0_i32 : i32, i32
  }
  func.func @transform_1(%arg0: i32) -> (i32, i32) {
    %c0_i32 = arith.constant 0 : i32
    %c0_i32_0 = arith.constant 0 : i32
    %c0_i32_1 = arith.constant 0 : i32
    return %c0_i32, %c0_i32_0 : i32, i32
  }
  func.func @transform_2(%arg0: i32) -> (i32, i32) {
    %c0_i32 = arith.constant 0 : i32
    %c0_i32_0 = arith.constant 0 : i32
    %c0_i32_1 = arith.constant 0 : i32
    return %c0_i32, %c0_i32_0 : i32, i32
  }
  func.func @transform_3(%arg0: i32) -> (i32, i32) {
    %c0_i32 = arith.constant 0 : i32
    %c0_i32_0 = arith.constant 0 : i32
    %c0_i32_1 = arith.constant 0 : i32
    return %c0_i32, %c0_i32_0 : i32, i32
  }
  func.func @transform_4(%arg0: i32) -> (i32, i32) {
    %c0_i32 = arith.constant 0 : i32
    %c0_i32_0 = arith.constant 0 : i32
    %c0_i32_1 = arith.constant 0 : i32
    return %c0_i32, %c0_i32_0 : i32, i32
  }
  func.func @transform_5(%arg0: i32) -> (i32, i32) {
    %c0_i32 = arith.constant 0 : i32
    %c0_i32_0 = arith.constant 0 : i32
    return %arg0, %c0_i32 : i32, i32
  }
}

module attributes {stable_mosaic.version = 11 : i64} {
  func.func @_gru_block_kernel(%arg0: i32, %arg1: memref<64x16xf32, #tpu.memory_space<vmem>>, %arg2: memref<16x384xf32, #tpu.memory_space<vmem>>, %arg3: memref<128x384xf32, #tpu.memory_space<vmem>>, %arg4: memref<1x384xf32, #tpu.memory_space<vmem>>, %arg5: memref<1x128xf32, #tpu.memory_space<vmem>>, %arg6: memref<64x128xf32, #tpu.memory_space<vmem>>, %arg7: memref<8x128xf32, #tpu.memory_space<vmem>>, %arg8: memref<64x384xf32, #tpu.memory_space<vmem>>) attributes {dimension_semantics = [#tpu.dimension_semantics<arbitrary>], iteration_bounds = array<i64: 1>, scalar_prefetch = 0 : i64, scratch_operands = 2 : i64, tpu.core_type = #tpu.core_type<tc>, window_params = [{transform_indices = @transform_0, window_bounds = array<i64: 64, 16>}, {pipeline_mode = #tpu.pipeline_mode<synchronous>, transform_indices = @transform_1, window_bounds = array<i64: 16, 384>}, {pipeline_mode = #tpu.pipeline_mode<synchronous>, transform_indices = @transform_2, window_bounds = array<i64: 128, 384>}, {pipeline_mode = #tpu.pipeline_mode<synchronous>, transform_indices = @transform_3, window_bounds = array<i64: 1, 384>}, {pipeline_mode = #tpu.pipeline_mode<synchronous>, transform_indices = @transform_4, window_bounds = array<i64: 1, 128>}, {transform_indices = @transform_5, window_bounds = array<i64: 64, 128>}]} {
    %c0_i32 = arith.constant 0 : i32
    %0 = arith.cmpi eq, %arg0, %c0_i32 : i32
    %1 = arith.extui %0 : i1 to i32
    %c0_i32_0 = arith.constant 0 : i32
    %2 = arith.cmpi ne, %1, %c0_i32_0 : i32
    scf.if %2 {
      %cst_87 = arith.constant 0.000000e+00 : f32
      %296 = vector.broadcast %cst_87 : f32 to vector<8x128xf32>
      %c0_88 = arith.constant 0 : index
      %c0_89 = arith.constant 0 : index
      %297 = vector.load %arg7[%c0_88, %c0_89] : memref<8x128xf32, #tpu.memory_space<vmem>>, vector<8x128xf32>
      tpu.vector_store %arg7[%c0_88, %c0_89], %296 {strides = array<i32>} : memref<8x128xf32, #tpu.memory_space<vmem>>, vector<8x128xf32>,
    } else {
    }
    %c0 = arith.constant 0 : index
    %c0_1 = arith.constant 0 : index
    %3 = vector.load %arg1[%c0, %c0_1] : memref<64x16xf32, #tpu.memory_space<vmem>>, vector<64x16xf32>
    %c0_2 = arith.constant 0 : index
    %c0_3 = arith.constant 0 : index
    %4 = vector.load %arg2[%c0_2, %c0_3] : memref<16x384xf32, #tpu.memory_space<vmem>>, vector<16x384xf32>
    %cst = arith.constant dense<0.000000e+00> : vector<64x384xf32>
    %5 = tpu.matmul %3, %4, %cst {dimension_numbers = #tpu.dot_dimension_numbers<[1], [0], [0], [1], [0, 0, 1, 1], [], []>} : vector<64x16xf32>, vector<16x384xf32>, vector<64x384xf32> -> vector<64x384xf32>
    %c0_4 = arith.constant 0 : index
    %c0_5 = arith.constant 0 : index
    %6 = vector.load %arg4[%c0_4, %c0_5] : memref<1x384xf32, #tpu.memory_space<vmem>>, vector<1x384xf32>
    %7 = vector.broadcast %6 : vector<1x384xf32> to vector<64x384xf32>
    %8 = arith.addf %5, %7 : vector<64x384xf32>
    %c0_6 = arith.constant 0 : index
    %c0_7 = arith.constant 0 : index
    %9 = vector.load %arg8[%c0_6, %c0_7] : memref<64x384xf32, #tpu.memory_space<vmem>>, vector<64x384xf32>
    tpu.vector_store %arg8[%c0_6, %c0_7], %8 {strides = array<i32>} : memref<64x384xf32, #tpu.memory_space<vmem>>, vector<64x384xf32>,
    %c0_8 = arith.constant 0 : index
    %c0_9 = arith.constant 0 : index
    %10 = vector.load %arg3[%c0_8, %c0_9] : memref<128x384xf32, #tpu.memory_space<vmem>>, vector<128x384xf32>
    %c0_10 = arith.constant 0 : index
    %c0_11 = arith.constant 0 : index
    %11 = vector.load %arg5[%c0_10, %c0_11] : memref<1x128xf32, #tpu.memory_space<vmem>>, vector<1x128xf32>
    %12 = vector.shape_cast %11 : vector<1x128xf32> to vector<1x128xf32>
    %13 = vector.broadcast %12 : vector<1x128xf32> to vector<8x128xf32>
    %c0_12 = arith.constant 0 : index
    %c0_13 = arith.constant 0 : index
    %14 = vector.load %arg7[%c0_12, %c0_13] : memref<8x128xf32, #tpu.memory_space<vmem>>, vector<8x128xf32>
    %c0_i32_14 = arith.constant 0 : i32
    %c8_i32 = arith.constant 8 : i32
    %15 = arith.muli %c0_i32_14, %c8_i32 : i32
    %16 = tpu.assume_multiple %15, 8 : i32
    %cst_15 = arith.constant dense<0.000000e+00> : vector<8x384xf32>
    %17 = tpu.matmul %14, %10, %cst_15 {dimension_numbers = #tpu.dot_dimension_numbers<[1], [0], [0], [1], [0, 0, 1, 1], [], []>} : vector<8x128xf32>, vector<128x384xf32>, vector<8x384xf32> -> vector<8x384xf32>
    %18 = arith.index_cast %16 : i32 to index
    %c0_16 = arith.constant 0 : index
    %19 = vector.load %arg8[%18, %c0_16] : memref<64x384xf32, #tpu.memory_space<vmem>>, vector<8x128xf32>
    %20 = vector.extract_strided_slice %17 {offsets = [0, 0], sizes = [8, 128], strides = [1, 1]} : vector<8x384xf32> to vector<8x128xf32>
    %21 = arith.addf %19, %20 : vector<8x128xf32>
    %22 = arith.negf %21 : vector<8x128xf32>
    %23 = math.exp %22 : vector<8x128xf32>
    %cst_17 = arith.constant 1.000000e+00 : f32
    %24 = vector.broadcast %cst_17 : f32 to vector<8x128xf32>
    %25 = arith.addf %24, %23 : vector<8x128xf32>
    %26 = arith.divf %24, %25 : vector<8x128xf32>
    %27 = arith.index_cast %16 : i32 to index
    %c128 = arith.constant 128 : index
    %28 = vector.load %arg8[%27, %c128] : memref<64x384xf32, #tpu.memory_space<vmem>>, vector<8x128xf32>
    %29 = vector.extract_strided_slice %17 {offsets = [0, 128], sizes = [8, 128], strides = [1, 1]} : vector<8x384xf32> to vector<8x128xf32>
    %30 = arith.addf %28, %29 : vector<8x128xf32>
    %31 = arith.negf %30 : vector<8x128xf32>
    %32 = math.exp %31 : vector<8x128xf32>
    %cst_18 = arith.constant 1.000000e+00 : f32
    %33 = vector.broadcast %cst_18 : f32 to vector<8x128xf32>
    %34 = arith.addf %33, %32 : vector<8x128xf32>
    %35 = arith.divf %33, %34 : vector<8x128xf32>
    %36 = arith.index_cast %16 : i32 to index
    %c256 = arith.constant 256 : index
    %37 = vector.load %arg8[%36, %c256] : memref<64x384xf32, #tpu.memory_space<vmem>>, vector<8x128xf32>
    %38 = vector.extract_strided_slice %17 {offsets = [0, 256], sizes = [8, 128], strides = [1, 1]} : vector<8x384xf32> to vector<8x128xf32>
    %39 = arith.addf %38, %13 : vector<8x128xf32>
    %40 = arith.mulf %26, %39 : vector<8x128xf32>
    %41 = arith.addf %37, %40 : vector<8x128xf32>
    %42 = math.tanh %41 : vector<8x128xf32>
    %cst_19 = arith.constant 1.000000e+00 : f32
    %43 = vector.broadcast %cst_19 : f32 to vector<8x128xf32>
    %44 = arith.subf %43, %35 : vector<8x128xf32>
    %45 = arith.mulf %44, %42 : vector<8x128xf32>
    %46 = arith.mulf %35, %14 : vector<8x128xf32>
    %47 = arith.addf %45, %46 : vector<8x128xf32>
    %48 = arith.index_cast %16 : i32 to index
    %c0_20 = arith.constant 0 : index
    %49 = vector.load %arg6[%48, %c0_20] : memref<64x128xf32, #tpu.memory_space<vmem>>, vector<8x128xf32>
    tpu.vector_store %arg6[%48, %c0_20], %47 {strides = array<i32>} : memref<64x128xf32, #tpu.memory_space<vmem>>, vector<8x128xf32>,
    %c1_i32 = arith.constant 1 : i32
    %c8_i32_21 = arith.constant 8 : i32
    %50 = arith.muli %c1_i32, %c8_i32_21 : i32
    %51 = tpu.assume_multiple %50, 8 : i32
    %cst_22 = arith.constant dense<0.000000e+00> : vector<8x384xf32>
    %52 = tpu.matmul %47, %10, %cst_22 {dimension_numbers = #tpu.dot_dimension_numbers<[1], [0], [0], [1], [0, 0, 1, 1], [], []>} : vector<8x128xf32>, vector<128x384xf32>, vector<8x384xf32> -> vector<8x384xf32>
    %53 = arith.index_cast %51 : i32 to index
    %c0_23 = arith.constant 0 : index
    %54 = vector.load %arg8[%53, %c0_23] : memref<64x384xf32, #tpu.memory_space<vmem>>, vector<8x128xf32>
    %55 = vector.extract_strided_slice %52 {offsets = [0, 0], sizes = [8, 128], strides = [1, 1]} : vector<8x384xf32> to vector<8x128xf32>
    %56 = arith.addf %54, %55 : vector<8x128xf32>
    %57 = arith.negf %56 : vector<8x128xf32>
    %58 = math.exp %57 : vector<8x128xf32>
    %cst_24 = arith.constant 1.000000e+00 : f32
    %59 = vector.broadcast %cst_24 : f32 to vector<8x128xf32>
    %60 = arith.addf %59, %58 : vector<8x128xf32>
    %61 = arith.divf %59, %60 : vector<8x128xf32>
    %62 = arith.index_cast %51 : i32 to index
    %c128_25 = arith.constant 128 : index
    %63 = vector.load %arg8[%62, %c128_25] : memref<64x384xf32, #tpu.memory_space<vmem>>, vector<8x128xf32>
    %64 = vector.extract_strided_slice %52 {offsets = [0, 128], sizes = [8, 128], strides = [1, 1]} : vector<8x384xf32> to vector<8x128xf32>
    %65 = arith.addf %63, %64 : vector<8x128xf32>
    %66 = arith.negf %65 : vector<8x128xf32>
    %67 = math.exp %66 : vector<8x128xf32>
    %cst_26 = arith.constant 1.000000e+00 : f32
    %68 = vector.broadcast %cst_26 : f32 to vector<8x128xf32>
    %69 = arith.addf %68, %67 : vector<8x128xf32>
    %70 = arith.divf %68, %69 : vector<8x128xf32>
    %71 = arith.index_cast %51 : i32 to index
    %c256_27 = arith.constant 256 : index
    %72 = vector.load %arg8[%71, %c256_27] : memref<64x384xf32, #tpu.memory_space<vmem>>, vector<8x128xf32>
    %73 = vector.extract_strided_slice %52 {offsets = [0, 256], sizes = [8, 128], strides = [1, 1]} : vector<8x384xf32> to vector<8x128xf32>
    %74 = arith.addf %73, %13 : vector<8x128xf32>
    %75 = arith.mulf %61, %74 : vector<8x128xf32>
    %76 = arith.addf %72, %75 : vector<8x128xf32>
    %77 = math.tanh %76 : vector<8x128xf32>
    %cst_28 = arith.constant 1.000000e+00 : f32
    %78 = vector.broadcast %cst_28 : f32 to vector<8x128xf32>
    %79 = arith.subf %78, %70 : vector<8x128xf32>
    %80 = arith.mulf %79, %77 : vector<8x128xf32>
    %81 = arith.mulf %70, %47 : vector<8x128xf32>
    %82 = arith.addf %80, %81 : vector<8x128xf32>
    %83 = arith.index_cast %51 : i32 to index
    %c0_29 = arith.constant 0 : index
    %84 = vector.load %arg6[%83, %c0_29] : memref<64x128xf32, #tpu.memory_space<vmem>>, vector<8x128xf32>
    tpu.vector_store %arg6[%83, %c0_29], %82 {strides = array<i32>} : memref<64x128xf32, #tpu.memory_space<vmem>>, vector<8x128xf32>,
    %c2_i32 = arith.constant 2 : i32
    %c8_i32_30 = arith.constant 8 : i32
    %85 = arith.muli %c2_i32, %c8_i32_30 : i32
    %86 = tpu.assume_multiple %85, 8 : i32
    %cst_31 = arith.constant dense<0.000000e+00> : vector<8x384xf32>
    %87 = tpu.matmul %82, %10, %cst_31 {dimension_numbers = #tpu.dot_dimension_numbers<[1], [0], [0], [1], [0, 0, 1, 1], [], []>} : vector<8x128xf32>, vector<128x384xf32>, vector<8x384xf32> -> vector<8x384xf32>
    %88 = arith.index_cast %86 : i32 to index
    %c0_32 = arith.constant 0 : index
    %89 = vector.load %arg8[%88, %c0_32] : memref<64x384xf32, #tpu.memory_space<vmem>>, vector<8x128xf32>
    %90 = vector.extract_strided_slice %87 {offsets = [0, 0], sizes = [8, 128], strides = [1, 1]} : vector<8x384xf32> to vector<8x128xf32>
    %91 = arith.addf %89, %90 : vector<8x128xf32>
    %92 = arith.negf %91 : vector<8x128xf32>
    %93 = math.exp %92 : vector<8x128xf32>
    %cst_33 = arith.constant 1.000000e+00 : f32
    %94 = vector.broadcast %cst_33 : f32 to vector<8x128xf32>
    %95 = arith.addf %94, %93 : vector<8x128xf32>
    %96 = arith.divf %94, %95 : vector<8x128xf32>
    %97 = arith.index_cast %86 : i32 to index
    %c128_34 = arith.constant 128 : index
    %98 = vector.load %arg8[%97, %c128_34] : memref<64x384xf32, #tpu.memory_space<vmem>>, vector<8x128xf32>
    %99 = vector.extract_strided_slice %87 {offsets = [0, 128], sizes = [8, 128], strides = [1, 1]} : vector<8x384xf32> to vector<8x128xf32>
    %100 = arith.addf %98, %99 : vector<8x128xf32>
    %101 = arith.negf %100 : vector<8x128xf32>
    %102 = math.exp %101 : vector<8x128xf32>
    %cst_35 = arith.constant 1.000000e+00 : f32
    %103 = vector.broadcast %cst_35 : f32 to vector<8x128xf32>
    %104 = arith.addf %103, %102 : vector<8x128xf32>
    %105 = arith.divf %103, %104 : vector<8x128xf32>
    %106 = arith.index_cast %86 : i32 to index
    %c256_36 = arith.constant 256 : index
    %107 = vector.load %arg8[%106, %c256_36] : memref<64x384xf32, #tpu.memory_space<vmem>>, vector<8x128xf32>
    %108 = vector.extract_strided_slice %87 {offsets = [0, 256], sizes = [8, 128], strides = [1, 1]} : vector<8x384xf32> to vector<8x128xf32>
    %109 = arith.addf %108, %13 : vector<8x128xf32>
    %110 = arith.mulf %96, %109 : vector<8x128xf32>
    %111 = arith.addf %107, %110 : vector<8x128xf32>
    %112 = math.tanh %111 : vector<8x128xf32>
    %cst_37 = arith.constant 1.000000e+00 : f32
    %113 = vector.broadcast %cst_37 : f32 to vector<8x128xf32>
    %114 = arith.subf %113, %105 : vector<8x128xf32>
    %115 = arith.mulf %114, %112 : vector<8x128xf32>
    %116 = arith.mulf %105, %82 : vector<8x128xf32>
    %117 = arith.addf %115, %116 : vector<8x128xf32>
    %118 = arith.index_cast %86 : i32 to index
    %c0_38 = arith.constant 0 : index
    %119 = vector.load %arg6[%118, %c0_38] : memref<64x128xf32, #tpu.memory_space<vmem>>, vector<8x128xf32>
    tpu.vector_store %arg6[%118, %c0_38], %117 {strides = array<i32>} : memref<64x128xf32, #tpu.memory_space<vmem>>, vector<8x128xf32>,
    %c3_i32 = arith.constant 3 : i32
    %c8_i32_39 = arith.constant 8 : i32
    %120 = arith.muli %c3_i32, %c8_i32_39 : i32
    %121 = tpu.assume_multiple %120, 8 : i32
    %cst_40 = arith.constant dense<0.000000e+00> : vector<8x384xf32>
    %122 = tpu.matmul %117, %10, %cst_40 {dimension_numbers = #tpu.dot_dimension_numbers<[1], [0], [0], [1], [0, 0, 1, 1], [], []>} : vector<8x128xf32>, vector<128x384xf32>, vector<8x384xf32> -> vector<8x384xf32>
    %123 = arith.index_cast %121 : i32 to index
    %c0_41 = arith.constant 0 : index
    %124 = vector.load %arg8[%123, %c0_41] : memref<64x384xf32, #tpu.memory_space<vmem>>, vector<8x128xf32>
    %125 = vector.extract_strided_slice %122 {offsets = [0, 0], sizes = [8, 128], strides = [1, 1]} : vector<8x384xf32> to vector<8x128xf32>
    %126 = arith.addf %124, %125 : vector<8x128xf32>
    %127 = arith.negf %126 : vector<8x128xf32>
    %128 = math.exp %127 : vector<8x128xf32>
    %cst_42 = arith.constant 1.000000e+00 : f32
    %129 = vector.broadcast %cst_42 : f32 to vector<8x128xf32>
    %130 = arith.addf %129, %128 : vector<8x128xf32>
    %131 = arith.divf %129, %130 : vector<8x128xf32>
    %132 = arith.index_cast %121 : i32 to index
    %c128_43 = arith.constant 128 : index
    %133 = vector.load %arg8[%132, %c128_43] : memref<64x384xf32, #tpu.memory_space<vmem>>, vector<8x128xf32>
    %134 = vector.extract_strided_slice %122 {offsets = [0, 128], sizes = [8, 128], strides = [1, 1]} : vector<8x384xf32> to vector<8x128xf32>
    %135 = arith.addf %133, %134 : vector<8x128xf32>
    %136 = arith.negf %135 : vector<8x128xf32>
    %137 = math.exp %136 : vector<8x128xf32>
    %cst_44 = arith.constant 1.000000e+00 : f32
    %138 = vector.broadcast %cst_44 : f32 to vector<8x128xf32>
    %139 = arith.addf %138, %137 : vector<8x128xf32>
    %140 = arith.divf %138, %139 : vector<8x128xf32>
    %141 = arith.index_cast %121 : i32 to index
    %c256_45 = arith.constant 256 : index
    %142 = vector.load %arg8[%141, %c256_45] : memref<64x384xf32, #tpu.memory_space<vmem>>, vector<8x128xf32>
    %143 = vector.extract_strided_slice %122 {offsets = [0, 256], sizes = [8, 128], strides = [1, 1]} : vector<8x384xf32> to vector<8x128xf32>
    %144 = arith.addf %143, %13 : vector<8x128xf32>
    %145 = arith.mulf %131, %144 : vector<8x128xf32>
    %146 = arith.addf %142, %145 : vector<8x128xf32>
    %147 = math.tanh %146 : vector<8x128xf32>
    %cst_46 = arith.constant 1.000000e+00 : f32
    %148 = vector.broadcast %cst_46 : f32 to vector<8x128xf32>
    %149 = arith.subf %148, %140 : vector<8x128xf32>
    %150 = arith.mulf %149, %147 : vector<8x128xf32>
    %151 = arith.mulf %140, %117 : vector<8x128xf32>
    %152 = arith.addf %150, %151 : vector<8x128xf32>
    %153 = arith.index_cast %121 : i32 to index
    %c0_47 = arith.constant 0 : index
    %154 = vector.load %arg6[%153, %c0_47] : memref<64x128xf32, #tpu.memory_space<vmem>>, vector<8x128xf32>
    tpu.vector_store %arg6[%153, %c0_47], %152 {strides = array<i32>} : memref<64x128xf32, #tpu.memory_space<vmem>>, vector<8x128xf32>,
    %c4_i32 = arith.constant 4 : i32
    %c8_i32_48 = arith.constant 8 : i32
    %155 = arith.muli %c4_i32, %c8_i32_48 : i32
    %156 = tpu.assume_multiple %155, 8 : i32
    %cst_49 = arith.constant dense<0.000000e+00> : vector<8x384xf32>
    %157 = tpu.matmul %152, %10, %cst_49 {dimension_numbers = #tpu.dot_dimension_numbers<[1], [0], [0], [1], [0, 0, 1, 1], [], []>} : vector<8x128xf32>, vector<128x384xf32>, vector<8x384xf32> -> vector<8x384xf32>
    %158 = arith.index_cast %156 : i32 to index
    %c0_50 = arith.constant 0 : index
    %159 = vector.load %arg8[%158, %c0_50] : memref<64x384xf32, #tpu.memory_space<vmem>>, vector<8x128xf32>
    %160 = vector.extract_strided_slice %157 {offsets = [0, 0], sizes = [8, 128], strides = [1, 1]} : vector<8x384xf32> to vector<8x128xf32>
    %161 = arith.addf %159, %160 : vector<8x128xf32>
    %162 = arith.negf %161 : vector<8x128xf32>
    %163 = math.exp %162 : vector<8x128xf32>
    %cst_51 = arith.constant 1.000000e+00 : f32
    %164 = vector.broadcast %cst_51 : f32 to vector<8x128xf32>
    %165 = arith.addf %164, %163 : vector<8x128xf32>
    %166 = arith.divf %164, %165 : vector<8x128xf32>
    %167 = arith.index_cast %156 : i32 to index
    %c128_52 = arith.constant 128 : index
    %168 = vector.load %arg8[%167, %c128_52] : memref<64x384xf32, #tpu.memory_space<vmem>>, vector<8x128xf32>
    %169 = vector.extract_strided_slice %157 {offsets = [0, 128], sizes = [8, 128], strides = [1, 1]} : vector<8x384xf32> to vector<8x128xf32>
    %170 = arith.addf %168, %169 : vector<8x128xf32>
    %171 = arith.negf %170 : vector<8x128xf32>
    %172 = math.exp %171 : vector<8x128xf32>
    %cst_53 = arith.constant 1.000000e+00 : f32
    %173 = vector.broadcast %cst_53 : f32 to vector<8x128xf32>
    %174 = arith.addf %173, %172 : vector<8x128xf32>
    %175 = arith.divf %173, %174 : vector<8x128xf32>
    %176 = arith.index_cast %156 : i32 to index
    %c256_54 = arith.constant 256 : index
    %177 = vector.load %arg8[%176, %c256_54] : memref<64x384xf32, #tpu.memory_space<vmem>>, vector<8x128xf32>
    %178 = vector.extract_strided_slice %157 {offsets = [0, 256], sizes = [8, 128], strides = [1, 1]} : vector<8x384xf32> to vector<8x128xf32>
    %179 = arith.addf %178, %13 : vector<8x128xf32>
    %180 = arith.mulf %166, %179 : vector<8x128xf32>
    %181 = arith.addf %177, %180 : vector<8x128xf32>
    %182 = math.tanh %181 : vector<8x128xf32>
    %cst_55 = arith.constant 1.000000e+00 : f32
    %183 = vector.broadcast %cst_55 : f32 to vector<8x128xf32>
    %184 = arith.subf %183, %175 : vector<8x128xf32>
    %185 = arith.mulf %184, %182 : vector<8x128xf32>
    %186 = arith.mulf %175, %152 : vector<8x128xf32>
    %187 = arith.addf %185, %186 : vector<8x128xf32>
    %188 = arith.index_cast %156 : i32 to index
    %c0_56 = arith.constant 0 : index
    %189 = vector.load %arg6[%188, %c0_56] : memref<64x128xf32, #tpu.memory_space<vmem>>, vector<8x128xf32>
    tpu.vector_store %arg6[%188, %c0_56], %187 {strides = array<i32>} : memref<64x128xf32, #tpu.memory_space<vmem>>, vector<8x128xf32>,
    %c5_i32 = arith.constant 5 : i32
    %c8_i32_57 = arith.constant 8 : i32
    %190 = arith.muli %c5_i32, %c8_i32_57 : i32
    %191 = tpu.assume_multiple %190, 8 : i32
    %cst_58 = arith.constant dense<0.000000e+00> : vector<8x384xf32>
    %192 = tpu.matmul %187, %10, %cst_58 {dimension_numbers = #tpu.dot_dimension_numbers<[1], [0], [0], [1], [0, 0, 1, 1], [], []>} : vector<8x128xf32>, vector<128x384xf32>, vector<8x384xf32> -> vector<8x384xf32>
    %193 = arith.index_cast %191 : i32 to index
    %c0_59 = arith.constant 0 : index
    %194 = vector.load %arg8[%193, %c0_59] : memref<64x384xf32, #tpu.memory_space<vmem>>, vector<8x128xf32>
    %195 = vector.extract_strided_slice %192 {offsets = [0, 0], sizes = [8, 128], strides = [1, 1]} : vector<8x384xf32> to vector<8x128xf32>
    %196 = arith.addf %194, %195 : vector<8x128xf32>
    %197 = arith.negf %196 : vector<8x128xf32>
    %198 = math.exp %197 : vector<8x128xf32>
    %cst_60 = arith.constant 1.000000e+00 : f32
    %199 = vector.broadcast %cst_60 : f32 to vector<8x128xf32>
    %200 = arith.addf %199, %198 : vector<8x128xf32>
    %201 = arith.divf %199, %200 : vector<8x128xf32>
    %202 = arith.index_cast %191 : i32 to index
    %c128_61 = arith.constant 128 : index
    %203 = vector.load %arg8[%202, %c128_61] : memref<64x384xf32, #tpu.memory_space<vmem>>, vector<8x128xf32>
    %204 = vector.extract_strided_slice %192 {offsets = [0, 128], sizes = [8, 128], strides = [1, 1]} : vector<8x384xf32> to vector<8x128xf32>
    %205 = arith.addf %203, %204 : vector<8x128xf32>
    %206 = arith.negf %205 : vector<8x128xf32>
    %207 = math.exp %206 : vector<8x128xf32>
    %cst_62 = arith.constant 1.000000e+00 : f32
    %208 = vector.broadcast %cst_62 : f32 to vector<8x128xf32>
    %209 = arith.addf %208, %207 : vector<8x128xf32>
    %210 = arith.divf %208, %209 : vector<8x128xf32>
    %211 = arith.index_cast %191 : i32 to index
    %c256_63 = arith.constant 256 : index
    %212 = vector.load %arg8[%211, %c256_63] : memref<64x384xf32, #tpu.memory_space<vmem>>, vector<8x128xf32>
    %213 = vector.extract_strided_slice %192 {offsets = [0, 256], sizes = [8, 128], strides = [1, 1]} : vector<8x384xf32> to vector<8x128xf32>
    %214 = arith.addf %213, %13 : vector<8x128xf32>
    %215 = arith.mulf %201, %214 : vector<8x128xf32>
    %216 = arith.addf %212, %215 : vector<8x128xf32>
    %217 = math.tanh %216 : vector<8x128xf32>
    %cst_64 = arith.constant 1.000000e+00 : f32
    %218 = vector.broadcast %cst_64 : f32 to vector<8x128xf32>
    %219 = arith.subf %218, %210 : vector<8x128xf32>
    %220 = arith.mulf %219, %217 : vector<8x128xf32>
    %221 = arith.mulf %210, %187 : vector<8x128xf32>
    %222 = arith.addf %220, %221 : vector<8x128xf32>
    %223 = arith.index_cast %191 : i32 to index
    %c0_65 = arith.constant 0 : index
    %224 = vector.load %arg6[%223, %c0_65] : memref<64x128xf32, #tpu.memory_space<vmem>>, vector<8x128xf32>
    tpu.vector_store %arg6[%223, %c0_65], %222 {strides = array<i32>} : memref<64x128xf32, #tpu.memory_space<vmem>>, vector<8x128xf32>,
    %c6_i32 = arith.constant 6 : i32
    %c8_i32_66 = arith.constant 8 : i32
    %225 = arith.muli %c6_i32, %c8_i32_66 : i32
    %226 = tpu.assume_multiple %225, 8 : i32
    %cst_67 = arith.constant dense<0.000000e+00> : vector<8x384xf32>
    %227 = tpu.matmul %222, %10, %cst_67 {dimension_numbers = #tpu.dot_dimension_numbers<[1], [0], [0], [1], [0, 0, 1, 1], [], []>} : vector<8x128xf32>, vector<128x384xf32>, vector<8x384xf32> -> vector<8x384xf32>
    %228 = arith.index_cast %226 : i32 to index
    %c0_68 = arith.constant 0 : index
    %229 = vector.load %arg8[%228, %c0_68] : memref<64x384xf32, #tpu.memory_space<vmem>>, vector<8x128xf32>
    %230 = vector.extract_strided_slice %227 {offsets = [0, 0], sizes = [8, 128], strides = [1, 1]} : vector<8x384xf32> to vector<8x128xf32>
    %231 = arith.addf %229, %230 : vector<8x128xf32>
    %232 = arith.negf %231 : vector<8x128xf32>
    %233 = math.exp %232 : vector<8x128xf32>
    %cst_69 = arith.constant 1.000000e+00 : f32
    %234 = vector.broadcast %cst_69 : f32 to vector<8x128xf32>
    %235 = arith.addf %234, %233 : vector<8x128xf32>
    %236 = arith.divf %234, %235 : vector<8x128xf32>
    %237 = arith.index_cast %226 : i32 to index
    %c128_70 = arith.constant 128 : index
    %238 = vector.load %arg8[%237, %c128_70] : memref<64x384xf32, #tpu.memory_space<vmem>>, vector<8x128xf32>
    %239 = vector.extract_strided_slice %227 {offsets = [0, 128], sizes = [8, 128], strides = [1, 1]} : vector<8x384xf32> to vector<8x128xf32>
    %240 = arith.addf %238, %239 : vector<8x128xf32>
    %241 = arith.negf %240 : vector<8x128xf32>
    %242 = math.exp %241 : vector<8x128xf32>
    %cst_71 = arith.constant 1.000000e+00 : f32
    %243 = vector.broadcast %cst_71 : f32 to vector<8x128xf32>
    %244 = arith.addf %243, %242 : vector<8x128xf32>
    %245 = arith.divf %243, %244 : vector<8x128xf32>
    %246 = arith.index_cast %226 : i32 to index
    %c256_72 = arith.constant 256 : index
    %247 = vector.load %arg8[%246, %c256_72] : memref<64x384xf32, #tpu.memory_space<vmem>>, vector<8x128xf32>
    %248 = vector.extract_strided_slice %227 {offsets = [0, 256], sizes = [8, 128], strides = [1, 1]} : vector<8x384xf32> to vector<8x128xf32>
    %249 = arith.addf %248, %13 : vector<8x128xf32>
    %250 = arith.mulf %236, %249 : vector<8x128xf32>
    %251 = arith.addf %247, %250 : vector<8x128xf32>
    %252 = math.tanh %251 : vector<8x128xf32>
    %cst_73 = arith.constant 1.000000e+00 : f32
    %253 = vector.broadcast %cst_73 : f32 to vector<8x128xf32>
    %254 = arith.subf %253, %245 : vector<8x128xf32>
    %255 = arith.mulf %254, %252 : vector<8x128xf32>
    %256 = arith.mulf %245, %222 : vector<8x128xf32>
    %257 = arith.addf %255, %256 : vector<8x128xf32>
    %258 = arith.index_cast %226 : i32 to index
    %c0_74 = arith.constant 0 : index
    %259 = vector.load %arg6[%258, %c0_74] : memref<64x128xf32, #tpu.memory_space<vmem>>, vector<8x128xf32>
    tpu.vector_store %arg6[%258, %c0_74], %257 {strides = array<i32>} : memref<64x128xf32, #tpu.memory_space<vmem>>, vector<8x128xf32>,
    %c7_i32 = arith.constant 7 : i32
    %c8_i32_75 = arith.constant 8 : i32
    %260 = arith.muli %c7_i32, %c8_i32_75 : i32
    %261 = tpu.assume_multiple %260, 8 : i32
    %cst_76 = arith.constant dense<0.000000e+00> : vector<8x384xf32>
    %262 = tpu.matmul %257, %10, %cst_76 {dimension_numbers = #tpu.dot_dimension_numbers<[1], [0], [0], [1], [0, 0, 1, 1], [], []>} : vector<8x128xf32>, vector<128x384xf32>, vector<8x384xf32> -> vector<8x384xf32>
    %263 = arith.index_cast %261 : i32 to index
    %c0_77 = arith.constant 0 : index
    %264 = vector.load %arg8[%263, %c0_77] : memref<64x384xf32, #tpu.memory_space<vmem>>, vector<8x128xf32>
    %265 = vector.extract_strided_slice %262 {offsets = [0, 0], sizes = [8, 128], strides = [1, 1]} : vector<8x384xf32> to vector<8x128xf32>
    %266 = arith.addf %264, %265 : vector<8x128xf32>
    %267 = arith.negf %266 : vector<8x128xf32>
    %268 = math.exp %267 : vector<8x128xf32>
    %cst_78 = arith.constant 1.000000e+00 : f32
    %269 = vector.broadcast %cst_78 : f32 to vector<8x128xf32>
    %270 = arith.addf %269, %268 : vector<8x128xf32>
    %271 = arith.divf %269, %270 : vector<8x128xf32>
    %272 = arith.index_cast %261 : i32 to index
    %c128_79 = arith.constant 128 : index
    %273 = vector.load %arg8[%272, %c128_79] : memref<64x384xf32, #tpu.memory_space<vmem>>, vector<8x128xf32>
    %274 = vector.extract_strided_slice %262 {offsets = [0, 128], sizes = [8, 128], strides = [1, 1]} : vector<8x384xf32> to vector<8x128xf32>
    %275 = arith.addf %273, %274 : vector<8x128xf32>
    %276 = arith.negf %275 : vector<8x128xf32>
    %277 = math.exp %276 : vector<8x128xf32>
    %cst_80 = arith.constant 1.000000e+00 : f32
    %278 = vector.broadcast %cst_80 : f32 to vector<8x128xf32>
    %279 = arith.addf %278, %277 : vector<8x128xf32>
    %280 = arith.divf %278, %279 : vector<8x128xf32>
    %281 = arith.index_cast %261 : i32 to index
    %c256_81 = arith.constant 256 : index
    %282 = vector.load %arg8[%281, %c256_81] : memref<64x384xf32, #tpu.memory_space<vmem>>, vector<8x128xf32>
    %283 = vector.extract_strided_slice %262 {offsets = [0, 256], sizes = [8, 128], strides = [1, 1]} : vector<8x384xf32> to vector<8x128xf32>
    %284 = arith.addf %283, %13 : vector<8x128xf32>
    %285 = arith.mulf %271, %284 : vector<8x128xf32>
    %286 = arith.addf %282, %285 : vector<8x128xf32>
    %287 = math.tanh %286 : vector<8x128xf32>
    %cst_82 = arith.constant 1.000000e+00 : f32
    %288 = vector.broadcast %cst_82 : f32 to vector<8x128xf32>
    %289 = arith.subf %288, %280 : vector<8x128xf32>
    %290 = arith.mulf %289, %287 : vector<8x128xf32>
    %291 = arith.mulf %280, %257 : vector<8x128xf32>
    %292 = arith.addf %290, %291 : vector<8x128xf32>
    %293 = arith.index_cast %261 : i32 to index
    %c0_83 = arith.constant 0 : index
    %294 = vector.load %arg6[%293, %c0_83] : memref<64x128xf32, #tpu.memory_space<vmem>>, vector<8x128xf32>
    tpu.vector_store %arg6[%293, %c0_83], %292 {strides = array<i32>} : memref<64x128xf32, #tpu.memory_space<vmem>>, vector<8x128xf32>,
    %c8_i32_84 = arith.constant 8 : i32
    %c0_85 = arith.constant 0 : index
    %c0_86 = arith.constant 0 : index
    %295 = vector.load %arg7[%c0_85, %c0_86] : memref<8x128xf32, #tpu.memory_space<vmem>>, vector<8x128xf32>
    tpu.vector_store %arg7[%c0_85, %c0_86], %292 {strides = array<i32>} : memref<8x128xf32, #tpu.memory_space<vmem>>, vector<8x128xf32>,
    return
  }
  func.func @transform_0(%arg0: i32) -> (i32, i32) {
    %c0_i32 = arith.constant 0 : i32
    %c0_i32_0 = arith.constant 0 : i32
    return %arg0, %c0_i32 : i32, i32
  }
  func.func @transform_1(%arg0: i32) -> (i32, i32) {
    %c0_i32 = arith.constant 0 : i32
    %c0_i32_0 = arith.constant 0 : i32
    %c0_i32_1 = arith.constant 0 : i32
    return %c0_i32, %c0_i32_0 : i32, i32
  }
  func.func @transform_2(%arg0: i32) -> (i32, i32) {
    %c0_i32 = arith.constant 0 : i32
    %c0_i32_0 = arith.constant 0 : i32
    %c0_i32_1 = arith.constant 0 : i32
    return %c0_i32, %c0_i32_0 : i32, i32
  }
  func.func @transform_3(%arg0: i32) -> (i32, i32) {
    %c0_i32 = arith.constant 0 : i32
    %c0_i32_0 = arith.constant 0 : i32
    %c0_i32_1 = arith.constant 0 : i32
    return %c0_i32, %c0_i32_0 : i32, i32
  }
  func.func @transform_4(%arg0: i32) -> (i32, i32) {
    %c0_i32 = arith.constant 0 : i32
    %c0_i32_0 = arith.constant 0 : i32
    %c0_i32_1 = arith.constant 0 : i32
    return %c0_i32, %c0_i32_0 : i32, i32
  }
  func.func @transform_5(%arg0: i32) -> (i32, i32) {
    %c0_i32 = arith.constant 0 : i32
    %c0_i32_0 = arith.constant 0 : i32
    return %arg0, %c0_i32 : i32, i32
  }
}

</mosaic_0001>

<llo_original>
// kernel: tpu_custom_call.1
$region0: #{tpu_custom_call.1}
  #allocation0 [shape = 'u32[]', space=smem, size = 0x4, offset = 0x4, fixed_abs, tag = 'smem constant byte address 0x4 - core index']
  #allocation1 [shape = 'u32[144,128]{1,0:T(1,128)}', space=vmem, size = 0x12000, scoped, tag = 'internal scratch']
  #allocation2 [shape = 'f32[8,128]{1,0:T(8,128)}', space=vmem, size = 0x1000, scoped, tag = 'scratch operand']
  #allocation3 [shape = 'f32[64,384]{1,0:T(8,128)}', space=vmem, size = 0x18000, scoped, tag = 'scratch operand']
  %s0 = inlined_call_operand.vmem [shape: f32[64,16], index: 0, kind: input, shape index: {}]
  %s1 = inlined_call_operand.vmem [shape: f32[16,384], index: 1, kind: input, shape index: {}]
  %s2 = inlined_call_operand.hbm [shape: f32[128,384], index: 2, kind: input, shape index: {}]
  %s3 = inlined_call_operand.vmem [shape: f32[1,384], index: 3, kind: input, shape index: {}]
  %s4 = inlined_call_operand.vmem [shape: f32[1,128], index: 4, kind: input, shape index: {}]
  %s5 = inlined_call_operand.hbm [shape: f32[64,128], index: 5, kind: output, shape index: {}]
  %s6 = sld [smem:[#allocation0]]
  $region38: #{tpu_custom_call.1} parent=0
    _
  %s8 = ssub.s32 1, %s6
  %s9 = scalar_select 0, %s8, %s6
  $region1: #{tpu_custom_call.1} parent=0
    #allocation4 [shape = 'u8[196608]{0}', space=vmem, size = 0x30000, scoped, tag = 'input window, operand 2, single buffered']
    #allocation5 [shape = 's32[1]{0}', space=sflag, size = 0x4, scoped, tag = 'scoped memory for tpu_custom_call.1']
    #allocation6 [shape = 's32[1]{0}', space=sflag, size = 0x4, scoped, tag = 'scoped memory for tpu_custom_call.1']
    #allocation7 [shape = 'u8[32768]{0}', space=vmem, size = 0x8000, scoped, tag = 'output window, operand 0, single buffered']
    %10 = vsyncpa [#allocation5], 0
    %11 = vsyncpa [#allocation6], 0
    // Predicated region
    $region2: #{tpu_custom_call.1} parent=1 // pred_check
      _
    $region3: #{tpu_custom_call.1} parent=1 // pred_check_branch
      %13 = sbr.rel (0) target = $region5
    $region4: #{tpu_custom_call.1} parent=1 // pred_region
      _
    $region5: #{tpu_custom_call.1} parent=1 // pred_fallthru
      _
    // Predicated region
    $region6: #{tpu_custom_call.1} parent=1 // pred_check
      _
    $region7: #{tpu_custom_call.1} parent=1 // pred_check_branch
      %15 = sbr.rel (0) target = $region9
    $region8: #{tpu_custom_call.1} parent=1 // pred_region
      _
    $region9: #{tpu_custom_call.1} parent=1 // pred_fallthru
      _
    // Predicated region
    $region10: #{tpu_custom_call.1} parent=1 // pred_check
      _
    $region11: #{tpu_custom_call.1} parent=1 // pred_check_branch
      %17 = sbr.rel (0) target = $region13
    $region12: #{tpu_custom_call.1} parent=1 // pred_region
      %s19 = ssub.s32 6144, 6144
      %20 = vsyncadd [#allocation5], %s19
      %s21 = sshll.u32 [#allocation4], 4
      %s22 = int_to_ptr.vmem [resolvable:$true] %s21
      %27 = dma.hbm_to_vmem [thread:$0]  %s2, 6144, %s22, [#allocation5], 384, 384, 24
    $region13: #{tpu_custom_call.1} parent=1 // pred_fallthru
      _
    // Predicated region
    $region14: #{tpu_custom_call.1} parent=1 // pred_check
      _
    $region15: #{tpu_custom_call.1} parent=1 // pred_check_branch
      %29 = sbr.rel (0) target = $region17
    $region16: #{tpu_custom_call.1} parent=1 // pred_region
      _
    $region17: #{tpu_custom_call.1} parent=1 // pred_fallthru
      _
    // Predicated region
    $region18: #{tpu_custom_call.1} parent=1 // pred_check
      _
    $region19: #{tpu_custom_call.1} parent=1 // pred_check_branch
      %31 = sbr.rel (0) target = $region21
    $region20: #{tpu_custom_call.1} parent=1 // pred_region
      _
    $region21: #{tpu_custom_call.1} parent=1 // pred_fallthru
      _
    // Predicated region
    $region22: #{tpu_custom_call.1} parent=1 // pred_check
      _
    $region23: #{tpu_custom_call.1} parent=1 // pred_check_branch
      %33 = sbr.rel (0) target = $region25
    $region24: #{tpu_custom_call.1} parent=1 // pred_region
      %34 = dma.done [#allocation5], 6144
    $region25: #{tpu_custom_call.1} parent=1 // pred_fallthru
      _
    %p35 = scmp.eq.s32.totalorder 0, 0
    // Predicated region
    $region26: #{tpu_custom_call.1} parent=1 // pred_check
      %p36 = pneg %p35
    $region27: #{tpu_custom_call.1} parent=1 // pred_check_branch
      %38 = sbr.rel (%p36) target = $region29
    $region28: #{tpu_custom_call.1} parent=1 // pred_region
      %39 = vst [vmem:[#allocation2] sm:$0xff] 0.0
    $region29: #{tpu_custom_call.1} parent=1 // pred_fallthru
      _
    %v40 = vld [vmem:[%s0] sm:$0xff]
    %v41 = vld [vmem:[%s0 + $0x8] sm:$0xff]
    %v42 = vld [vmem:[%s0 + $0x10] sm:$0xff]
    %v43 = vld [vmem:[%s0 + $0x18] sm:$0xff]
    %v44 = vld [vmem:[%s0 + $0x20] sm:$0xff]
    %v45 = vld [vmem:[%s0 + $0x28] sm:$0xff]
    %v46 = vld [vmem:[%s0 + $0x30] sm:$0xff]
    %v47 = vld [vmem:[%s0 + $0x38] sm:$0xff]
    %v48 = vld [vmem:[%s1] sm:$0xff]
    %v49 = vld [vmem:[%s1 + $0x8] sm:$0xff]
    %v50 = vld [vmem:[%s1 + $0x10] sm:$0xff]
    %v51 = vld [vmem:[%s1 + $0x18] sm:$0xff]
    %v52 = vld [vmem:[%s1 + $0x20] sm:$0xff]
    %v53 = vld [vmem:[%s1 + $0x28] sm:$0xff]
    %v54 = vld [vmem:[%s3] sm:$0x7]
    %v56 = vlaneseq
    %v57 = vshrl.u32 %v56, 7
    %v58 = vsub.s32 0, %v57
    %v59 = vrot.slane %v54, %v58
    %v60 = vlaneseq
    %v61 = vshrl.u32 %v60, 7
    %v62 = vsub.s32 1, %v61
    %v63 = vrot.slane %v54, %v62
    %v64 = vlaneseq
    %v65 = vshrl.u32 %v64, 7
    %v66 = vsub.s32 2, %v65
    %v67 = vrot.slane %v54, %v66
    %vm71 = vcmask 130048
    %v73 = vsel %vm71, %v40, 0
    %v76 = vsel %vm71, %v41, 0
    %v79 = vsel %vm71, %v42, 0
    %v82 = vsel %vm71, %v43, 0
    %v85 = vsel %vm71, %v44, 0
    %v88 = vsel %vm71, %v45, 0
    %v91 = vsel %vm71, %v46, 0
    %v94 = vsel %vm71, %v47, 0
    %96 = vmatprep.subr.mxu0 %v49
    %97 = vmatpush1.msra.mxu0 %v48
    %98 = vmatprep.subr.mxu0 %v52
    %99 = vmatpush1.msra.mxu0 %v51
    %100 = vmatprep.subr.mxu0 0.0
    %101 = vmatpush1.msra.mxu0 0.0
    %102 = vmatprep.subr.mxu0 0.0
    %103 = vmatpush1.msra.mxu0 0.0
    %104 = vmatprep.subr.mxu0 0.0
    %105 = vmatpush1.msra.mxu0 0.0
    %106 = vmatprep.subr.mxu0 0.0
    %107 = vmatpush1.msra.mxu0 0.0
    %108 = vmatprep.subr.mxu0 0.0
    %109 = vmatpush1.msra.mxu0 0.0
    %110 = vmatprep.subr.mxu0 0.0
    %111 = vmatpush1.msra.mxu0 0.0
    %112 = vmatprep.subr.mxu0 0.0
    %113 = vmatpush1.msra.mxu0 0.0
    %114 = vmatprep.subr.mxu0 0.0
    %115 = vmatpush1.msra.mxu0 0.0
    %116 = vmatprep.subr.mxu0 0.0
    %117 = vmatpush1.msra.mxu0 0.0
    %118 = vmatprep.subr.mxu0 0.0
    %119 = vmatpush1.msra.mxu0 0.0
    %120 = vmatprep.subr.mxu0 0.0
    %121 = vmatpush1.msra.mxu0 0.0
    %122 = vmatprep.subr.mxu0 0.0
    %123 = vmatpush1.msra.mxu0 0.0
    %124 = vmatprep.subr.mxu0 0.0
    %125 = vmatpush1.msra.mxu0 0.0
    %126 = vmatprep.subr.mxu0 0.0
    %127 = vmatpush1.msra.mxu0 0.0
    %128 = vmatprep.subr.mxu0 0.0
    %129 = vmatpush1.msra.mxu0 0.0
    %130 = vmatprep.subr.mxu0 0.0
    %131 = vmatpush1.msra.mxu0 0.0
    %132 = vmatprep.subr.mxu0 0.0
    %133 = vmatpush1.msra.mxu0 0.0
    %134 = vmatprep.subr.mxu0 0.0
    %135 = vmatpush1.msra.mxu0 0.0
    %136 = vmatprep.subr.mxu0 0.0
    %137 = vmatpush1.msra.mxu0 0.0
    %138 = vmatprep.subr.mxu0 0.0
    %139 = vmatpush1.msra.mxu0 0.0
    %140 = vmatprep.subr.mxu0 0.0
    %141 = vmatpush1.msra.mxu0 0.0
    %142 = vmatprep.subr.mxu0 0.0
    %143 = vmatpush1.msra.mxu0 0.0
    %144 = vmatprep.subr.mxu0 0.0
    %145 = vmatpush1.msra.mxu0 0.0
    %146 = vmatprep.subr.mxu0 0.0
    %147 = vmatpush1.msra.mxu0 0.0
    %148 = vmatprep.subr.mxu0 0.0
    %149 = vmatpush1.msra.mxu0 0.0
    %150 = vmatprep.subr.mxu0 0.0
    %151 = vmatpush1.msra.mxu0 0.0
    %152 = vmatprep.subr.mxu0 0.0
    %153 = vmatpush1.msra.mxu0 0.0
    %154 = vmatprep.subr.mxu0 0.0
    %155 = vmatpush1.msra.mxu0 0.0
    %156 = vmatprep.subr.mxu0 0.0
    %157 = vmatpush1.msra.mxu0 0.0
    %158 = vmatprep.subr.mxu0 0.0
    %159 = vmatpush1.msra.mxu0 0.0
    %160 = vmatprep.mubr.f32.mxu0 0.0
    %161 = vmatmul.mubr.f32.gmra.mrb[0].mxu0 %v73
    %v162 = vpop.f32.mrb[0].mxu0
    %v163 = vadd.f32 %v59, %v162
    %v164 = vpop.f32.mrb[0].mxu0
    %v165 = vadd.f32 %v63, %v164
    %166 = vmatprep.mubr.f32.mxu0 0.0
    %167 = vmatmul.mubr.f32.gmra.mrb[0].mxu0 %v76
    %v168 = vpop.f32.mrb[0].mxu0
    %v169 = vadd.f32 %v59, %v168
    %v170 = vpop.f32.mrb[0].mxu0
    %v171 = vadd.f32 %v63, %v170
    %172 = vmatprep.mubr.f32.mxu0 0.0
    %173 = vmatmul.mubr.f32.gmra.mrb[0].mxu0 %v79
    %v174 = vpop.f32.mrb[0].mxu0
    %v175 = vadd.f32 %v59, %v174
    %v176 = vpop.f32.mrb[0].mxu0
    %v177 = vadd.f32 %v63, %v176
    %178 = vmatprep.mubr.f32.mxu0 0.0
    %179 = vmatmul.mubr.f32.gmra.mrb[0].mxu0 %v82
    %v180 = vpop.f32.mrb[0].mxu0
    %v181 = vadd.f32 %v59, %v180
    %v182 = vpop.f32.mrb[0].mxu0
    %v183 = vadd.f32 %v63, %v182
    %184 = vmatprep.mubr.f32.mxu0 0.0
    %185 = vmatmul.mubr.f32.gmra.mrb[0].mxu0 %v85
    %v186 = vpop.f32.mrb[0].mxu0
    %v187 = vadd.f32 %v59, %v186
    %v188 = vpop.f32.mrb[0].mxu0
    %v189 = vadd.f32 %v63, %v188
    %190 = vmatprep.mubr.f32.mxu0 0.0
    %191 = vmatmul.mubr.f32.gmra.mrb[0].mxu0 %v88
    %v192 = vpop.f32.mrb[0].mxu0
    %v193 = vadd.f32 %v59, %v192
    %v194 = vpop.f32.mrb[0].mxu0
    %v195 = vadd.f32 %v63, %v194
    %196 = vmatprep.mubr.f32.mxu0 0.0
    %197 = vmatmul.mubr.f32.gmra.mrb[0].mxu0 %v91
    %v198 = vpop.f32.mrb[0].mxu0
    %v199 = vadd.f32 %v59, %v198
    %v200 = vpop.f32.mrb[0].mxu0
    %v201 = vadd.f32 %v63, %v200
    %202 = vmatprep.mubr.f32.mxu0 0.0
    %203 = vmatmul.mubr.f32.gmra.mrb[0].mxu0 %v94
    %v204 = vpop.f32.mrb[0].mxu0
    %v205 = vadd.f32 %v59, %v204
    %v206 = vpop.f32.mrb[0].mxu0
    %v207 = vadd.f32 %v63, %v206
    %208 = vdwg.mxu0
    %209 = vmatprep.subr.mxu0 0.0
    %210 = vmatpush1.msra.mxu0 %v50
    %211 = vmatprep.subr.mxu0 0.0
    %212 = vmatpush1.msra.mxu0 %v53
    %213 = vmatprep.subr.mxu0 0.0
    %214 = vmatpush1.msra.mxu0 0.0
    %215 = vmatprep.subr.mxu0 0.0
    %216 = vmatpush1.msra.mxu0 0.0
    %217 = vmatprep.subr.mxu0 0.0
    %218 = vmatpush1.msra.mxu0 0.0
    %219 = vmatprep.subr.mxu0 0.0
    %220 = vmatpush1.msra.mxu0 0.0
    %221 = vmatprep.subr.mxu0 0.0
    %222 = vmatpush1.msra.mxu0 0.0
    %223 = vmatprep.subr.mxu0 0.0
    %224 = vmatpush1.msra.mxu0 0.0
    %225 = vmatprep.subr.mxu0 0.0
    %226 = vmatpush1.msra.mxu0 0.0
    %227 = vmatprep.subr.mxu0 0.0
    %228 = vmatpush1.msra.mxu0 0.0
    %229 = vmatprep.subr.mxu0 0.0
    %230 = vmatpush1.msra.mxu0 0.0
    %231 = vmatprep.subr.mxu0 0.0
    %232 = vmatpush1.msra.mxu0 0.0
    %233 = vmatprep.subr.mxu0 0.0
    %234 = vmatpush1.msra.mxu0 0.0
    %235 = vmatprep.subr.mxu0 0.0
    %236 = vmatpush1.msra.mxu0 0.0
    %237 = vmatprep.subr.mxu0 0.0
    %238 = vmatpush1.msra.mxu0 0.0
    %239 = vmatprep.subr.mxu0 0.0
    %240 = vmatpush1.msra.mxu0 0.0
    %241 = vmatprep.subr.mxu0 0.0
    %242 = vmatpush1.msra.mxu0 0.0
    %243 = vmatprep.subr.mxu0 0.0
    %244 = vmatpush1.msra.mxu0 0.0
    %245 = vmatprep.subr.mxu0 0.0
    %246 = vmatpush1.msra.mxu0 0.0
    %247 = vmatprep.subr.mxu0 0.0
    %248 = vmatpush1.msra.mxu0 0.0
    %249 = vmatprep.subr.mxu0 0.0
    %250 = vmatpush1.msra.mxu0 0.0
    %251 = vmatprep.subr.mxu0 0.0
    %252 = vmatpush1.msra.mxu0 0.0
    %253 = vmatprep.subr.mxu0 0.0
    %254 = vmatpush1.msra.mxu0 0.0
    %255 = vmatprep.subr.mxu0 0.0
    %256 = vmatpush1.msra.mxu0 0.0
    %257 = vmatprep.subr.mxu0 0.0
    %258 = vmatpush1.msra.mxu0 0.0
    %259 = vmatprep.subr.mxu0 0.0
    %260 = vmatpush1.msra.mxu0 0.0
    %261 = vmatprep.subr.mxu0 0.0
    %262 = vmatpush1.msra.mxu0 0.0
    %263 = vmatprep.subr.mxu0 0.0
    %264 = vmatpush1.msra.mxu0 0.0
    %265 = vmatprep.subr.mxu0 0.0
    %266 = vmatpush1.msra.mxu0 0.0
    %267 = vmatprep.subr.mxu0 0.0
    %268 = vmatpush1.msra.mxu0 0.0
    %269 = vmatprep.subr.mxu0 0.0
    %270 = vmatpush1.msra.mxu0 0.0
    %271 = vmatprep.subr.mxu0 0.0
    %272 = vmatpush1.msra.mxu0 0.0
    %273 = vmatprep.mubr.f32.mxu0 0.0
    %274 = vmatmul.mubr.f32.gmra.mrb[0].mxu0 %v73
    %v275 = vpop.f32.mrb[0].mxu0
    %v276 = vadd.f32 %v67, %v275
    %v277 = vpop.f32.mrb[0].mxu0
    %278 = vmatprep.mubr.f32.mxu0 0.0
    %279 = vmatmul.mubr.f32.gmra.mrb[0].mxu0 %v76
    %v280 = vpop.f32.mrb[0].mxu0
    %v281 = vadd.f32 %v67, %v280
    %v282 = vpop.f32.mrb[0].mxu0
    %283 = vmatprep.mubr.f32.mxu0 0.0
    %284 = vmatmul.mubr.f32.gmra.mrb[0].mxu0 %v79
    %v285 = vpop.f32.mrb[0].mxu0
    %v286 = vadd.f32 %v67, %v285
    %v287 = vpop.f32.mrb[0].mxu0
    %288 = vmatprep.mubr.f32.mxu0 0.0
    %289 = vmatmul.mubr.f32.gmra.mrb[0].mxu0 %v82
    %v290 = vpop.f32.mrb[0].mxu0
    %v291 = vadd.f32 %v67, %v290
    %v292 = vpop.f32.mrb[0].mxu0
    %293 = vmatprep.mubr.f32.mxu0 0.0
    %294 = vmatmul.mubr.f32.gmra.mrb[0].mxu0 %v85
    %v295 = vpop.f32.mrb[0].mxu0
    %v296 = vadd.f32 %v67, %v295
    %v297 = vpop.f32.mrb[0].mxu0
    %298 = vmatprep.mubr.f32.mxu0 0.0
    %299 = vmatmul.mubr.f32.gmra.mrb[0].mxu0 %v88
    %v300 = vpop.f32.mrb[0].mxu0
    %v301 = vadd.f32 %v67, %v300
    %v302 = vpop.f32.mrb[0].mxu0
    %303 = vmatprep.mubr.f32.mxu0 0.0
    %304 = vmatmul.mubr.f32.gmra.mrb[0].mxu0 %v91
    %v305 = vpop.f32.mrb[0].mxu0
    %v306 = vadd.f32 %v67, %v305
    %v307 = vpop.f32.mrb[0].mxu0
    %308 = vmatprep.mubr.f32.mxu0 0.0
    %309 = vmatmul.mubr.f32.gmra.mrb[0].mxu0 %v94
    %v310 = vpop.f32.mrb[0].mxu0
    %v311 = vadd.f32 %v67, %v310
    %v312 = vpop.f32.mrb[0].mxu0
    %313 = vdwg.mxu0
    %314 = vst [vmem:[#allocation3] sm:$0xff] %v163
    %315 = vst [vmem:[#allocation3 + $0x8] sm:$0xff] %v165
    %316 = vst [vmem:[#allocation3 + $0x10] sm:$0xff] %v276
    %317 = vst [vmem:[#allocation3 + $0x18] sm:$0xff] %v169
    %318 = vst [vmem:[#allocation3 + $0x20] sm:$0xff] %v171
    %319 = vst [vmem:[#allocation3 + $0x28] sm:$0xff] %v281
    %320 = vst [vmem:[#allocation3 + $0x30] sm:$0xff] %v175
    %321 = vst [vmem:[#allocation3 + $0x38] sm:$0xff] %v177
    %322 = vst [vmem:[#allocation3 + $0x40] sm:$0xff] %v286
    %323 = vst [vmem:[#allocation3 + $0x48] sm:$0xff] %v181
    %324 = vst [vmem:[#allocation3 + $0x50] sm:$0xff] %v183
    %325 = vst [vmem:[#allocation3 + $0x58] sm:$0xff] %v291
    %326 = vst [vmem:[#allocation3 + $0x60] sm:$0xff] %v187
    %327 = vst [vmem:[#allocation3 + $0x68] sm:$0xff] %v189
    %328 = vst [vmem:[#allocation3 + $0x70] sm:$0xff] %v296
    %329 = vst [vmem:[#allocation3 + $0x78] sm:$0xff] %v193
    %330 = vst [vmem:[#allocation3 + $0x80] sm:$0xff] %v195
    %331 = vst [vmem:[#allocation3 + $0x88] sm:$0xff] %v301
    %332 = vst [vmem:[#allocation3 + $0x90] sm:$0xff] %v199
    %333 = vst [vmem:[#allocation3 + $0x98] sm:$0xff] %v201
    %334 = vst [vmem:[#allocation3 + $0xa0] sm:$0xff] %v306
    %335 = vst [vmem:[#allocation3 + $0xa8] sm:$0xff] %v205
    %336 = vst [vmem:[#allocation3 + $0xb0] sm:$0xff] %v207
    %337 = vst [vmem:[#allocation3 + $0xb8] sm:$0xff] %v311
    %v338 = vld [vmem:[#allocation4] sm:$0xff]
    %v339 = vld [vmem:[#allocation4 + $0x8] sm:$0xff]
    %v340 = vld [vmem:[#allocation4 + $0x10] sm:$0xff]
    %v341 = vld [vmem:[#allocation4 + $0x18] sm:$0xff]
    %v342 = vld [vmem:[#allocation4 + $0x20] sm:$0xff]
    %v343 = vld [vmem:[#allocation4 + $0x28] sm:$0xff]
    %v344 = vld [vmem:[#allocation4 + $0x30] sm:$0xff]
    %v345 = vld [vmem:[#allocation4 + $0x38] sm:$0xff]
    %v346 = vld [vmem:[#allocation4 + $0x40] sm:$0xff]
    %v347 = vld [vmem:[#allocation4 + $0x48] sm:$0xff]
    %v348 = vld [vmem:[#allocation4 + $0x50] sm:$0xff]
    %v349 = vld [vmem:[#allocation4 + $0x58] sm:$0xff]
    %v350 = vld [vmem:[#allocation4 + $0x60] sm:$0xff]
    %v351 = vld [vmem:[#allocation4 + $0x68] sm:$0xff]
    %v352 = vld [vmem:[#allocation4 + $0x70] sm:$0xff]
    %v353 = vld [vmem:[#allocation4 + $0x78] sm:$0xff]
    %v354 = vld [vmem:[#allocation4 + $0x80] sm:$0xff]
    %v355 = vld [vmem:[#allocation4 + $0x88] sm:$0xff]
    %v356 = vld [vmem:[#allocation4 + $0x90] sm:$0xff]
    %v357 = vld [vmem:[#allocation4 + $0x98] sm:$0xff]
    %v358 = vld [vmem:[#allocation4 + $0xa0] sm:$0xff]
    %v359 = vld [vmem:[#allocation4 + $0xa8] sm:$0xff]
    %v360 = vld [vmem:[#allocation4 + $0xb0] sm:$0xff]
    %v361 = vld [vmem:[#allocation4 + $0xb8] sm:$0xff]
    %v362 = vld [vmem:[#allocation4 + $0xc0] sm:$0xff]
    %v363 = vld [vmem:[#allocation4 + $0xc8] sm:$0xff]
    %v364 = vld [vmem:[#allocation4 + $0xd0] sm:$0xff]
    %v365 = vld [vmem:[#allocation4 + $0xd8] sm:$0xff]
    %v366 = vld [vmem:[#allocation4 + $0xe0] sm:$0xff]
    %v367 = vld [vmem:[#allocation4 + $0xe8] sm:$0xff]
    %v368 = vld [vmem:[#allocation4 + $0xf0] sm:$0xff]
    %v369 = vld [vmem:[#allocation4 + $0xf8] sm:$0xff]
    %v370 = vld [vmem:[#allocation4 + $0x100] sm:$0xff]
    %v371 = vld [vmem:[#allocation4 + $0x108] sm:$0xff]
    %v372 = vld [vmem:[#allocation4 + $0x110] sm:$0xff]
    %v373 = vld [vmem:[#allocation4 + $0x118] sm:$0xff]
    %v374 = vld [vmem:[#allocation4 + $0x120] sm:$0xff]
    %v375 = vld [vmem:[#allocation4 + $0x128] sm:$0xff]
    %v376 = vld [vmem:[#allocation4 + $0x130] sm:$0xff]
    %v377 = vld [vmem:[#allocation4 + $0x138] sm:$0xff]
    %v378 = vld [vmem:[#allocation4 + $0x140] sm:$0xff]
    %v379 = vld [vmem:[#allocation4 + $0x148] sm:$0xff]
    %v380 = vld [vmem:[#allocation4 + $0x150] sm:$0xff]
    %v381 = vld [vmem:[#allocation4 + $0x158] sm:$0xff]
    %v382 = vld [vmem:[#allocation4 + $0x160] sm:$0xff]
    %v383 = vld [vmem:[#allocation4 + $0x168] sm:$0xff]
    %v384 = vld [vmem:[#allocation4 + $0x170] sm:$0xff]
    %v385 = vld [vmem:[#allocation4 + $0x178] sm:$0xff]
    %v386 = vld [vmem:[%s4] sm:$0x1]
    %v388 = vlaneseq
    %v389 = vshrl.u32 %v388, 7
    %v390 = vsub.s32 0, %v389
    %v391 = vrot.slane %v386, %v390
    %v393 = vld [vmem:[#allocation2] sm:$0xff]
    %394 = vmatprep.subr.mxu0 %v339
    %395 = vmatpush1.msra.mxu0 %v338
    %396 = vmatprep.subr.mxu0 %v342
    %397 = vmatpush1.msra.mxu0 %v341
    %398 = vmatprep.subr.mxu0 %v345
    %399 = vmatpush1.msra.mxu0 %v344
    %400 = vmatprep.subr.mxu0 %v348
    %401 = vmatpush1.msra.mxu0 %v347
    %402 = vmatprep.subr.mxu0 %v351
    %403 = vmatpush1.msra.mxu0 %v350
    %404 = vmatprep.subr.mxu0 %v354
    %405 = vmatpush1.msra.mxu0 %v353
    %406 = vmatprep.subr.mxu0 %v357
    %407 = vmatpush1.msra.mxu0 %v356
    %408 = vmatprep.subr.mxu0 %v360
    %409 = vmatpush1.msra.mxu0 %v359
    %410 = vmatprep.subr.mxu0 %v363
    %411 = vmatpush1.msra.mxu0 %v362
    %412 = vmatprep.subr.mxu0 %v366
    %413 = vmatpush1.msra.mxu0 %v365
    %414 = vmatprep.subr.mxu0 %v369
    %415 = vmatpush1.msra.mxu0 %v368
    %416 = vmatprep.subr.mxu0 %v372
    %417 = vmatpush1.msra.mxu0 %v371
    %418 = vmatprep.subr.mxu0 %v375
    %419 = vmatpush1.msra.mxu0 %v374
    %420 = vmatprep.subr.mxu0 %v378
    %421 = vmatpush1.msra.mxu0 %v377
    %422 = vmatprep.subr.mxu0 %v381
    %423 = vmatpush1.msra.mxu0 %v380
    %424 = vmatprep.subr.mxu0 %v384
    %425 = vmatpush1.msra.mxu0 %v383
    %426 = vmatprep.subr.mxu0 0.0
    %427 = vmatpush1.msra.mxu0 0.0
    %428 = vmatprep.subr.mxu0 0.0
    %429 = vmatpush1.msra.mxu0 0.0
    %430 = vmatprep.subr.mxu0 0.0
    %431 = vmatpush1.msra.mxu0 0.0
    %432 = vmatprep.subr.mxu0 0.0
    %433 = vmatpush1.msra.mxu0 0.0
    %434 = vmatprep.subr.mxu0 0.0
    %435 = vmatpush1.msra.mxu0 0.0
    %436 = vmatprep.subr.mxu0 0.0
    %437 = vmatpush1.msra.mxu0 0.0
    %438 = vmatprep.subr.mxu0 0.0
    %439 = vmatpush1.msra.mxu0 0.0
    %440 = vmatprep.subr.mxu0 0.0
    %441 = vmatpush1.msra.mxu0 0.0
    %442 = vmatprep.subr.mxu0 0.0
    %443 = vmatpush1.msra.mxu0 0.0
    %444 = vmatprep.subr.mxu0 0.0
    %445 = vmatpush1.msra.mxu0 0.0
    %446 = vmatprep.subr.mxu0 0.0
    %447 = vmatpush1.msra.mxu0 0.0
    %448 = vmatprep.subr.mxu0 0.0
    %449 = vmatpush1.msra.mxu0 0.0
    %450 = vmatprep.subr.mxu0 0.0
    %451 = vmatpush1.msra.mxu0 0.0
    %452 = vmatprep.subr.mxu0 0.0
    %453 = vmatpush1.msra.mxu0 0.0
    %454 = vmatprep.subr.mxu0 0.0
    %455 = vmatpush1.msra.mxu0 0.0
    %456 = vmatprep.subr.mxu0 0.0
    %457 = vmatpush1.msra.mxu0 0.0
    %458 = vmatprep.mubr.f32.mxu0 0.0
    %459 = vmatmul.mubr.f32.gmra.mrb[0].mxu0 %v393
    %v460 = vpop.f32.mrb[0].mxu0
    %v461 = vadd.f32 0.0, %v460
    %v462 = vpop.f32.mrb[0].mxu0
    %v463 = vadd.f32 0.0, %v462
    %464 = vdwg.mxu0
    %465 = vmatprep.subr.mxu0 0.0
    %466 = vmatpush1.msra.mxu0 %v340
    %467 = vmatprep.subr.mxu0 0.0
    %468 = vmatpush1.msra.mxu0 %v343
    %469 = vmatprep.subr.mxu0 0.0
    %470 = vmatpush1.msra.mxu0 %v346
    %471 = vmatprep.subr.mxu0 0.0
    %472 = vmatpush1.msra.mxu0 %v349
    %473 = vmatprep.subr.mxu0 0.0
    %474 = vmatpush1.msra.mxu0 %v352
    %475 = vmatprep.subr.mxu0 0.0
    %476 = vmatpush1.msra.mxu0 %v355
    %477 = vmatprep.subr.mxu0 0.0
    %478 = vmatpush1.msra.mxu0 %v358
    %479 = vmatprep.subr.mxu0 0.0
    %480 = vmatpush1.msra.mxu0 %v361
    %481 = vmatprep.subr.mxu0 0.0
    %482 = vmatpush1.msra.mxu0 %v364
    %483 = vmatprep.subr.mxu0 0.0
    %484 = vmatpush1.msra.mxu0 %v367
    %485 = vmatprep.subr.mxu0 0.0
    %486 = vmatpush1.msra.mxu0 %v370
    %487 = vmatprep.subr.mxu0 0.0
    %488 = vmatpush1.msra.mxu0 %v373
    %489 = vmatprep.subr.mxu0 0.0
    %490 = vmatpush1.msra.mxu0 %v376
    %491 = vmatprep.subr.mxu0 0.0
    %492 = vmatpush1.msra.mxu0 %v379
    %493 = vmatprep.subr.mxu0 0.0
    %494 = vmatpush1.msra.mxu0 %v382
    %495 = vmatprep.subr.mxu0 0.0
    %496 = vmatpush1.msra.mxu0 %v385
    %497 = vmatprep.subr.mxu0 0.0
    %498 = vmatpush1.msra.mxu0 0.0
    %499 = vmatprep.subr.mxu0 0.0
    %500 = vmatpush1.msra.mxu0 0.0
    %501 = vmatprep.subr.mxu0 0.0
    %502 = vmatpush1.msra.mxu0 0.0
    %503 = vmatprep.subr.mxu0 0.0
    %504 = vmatpush1.msra.mxu0 0.0
    %505 = vmatprep.subr.mxu0 0.0
    %506 = vmatpush1.msra.mxu0 0.0
    %507 = vmatprep.subr.mxu0 0.0
    %508 = vmatpush1.msra.mxu0 0.0
    %509 = vmatprep.subr.mxu0 0.0
    %510 = vmatpush1.msra.mxu0 0.0
    %511 = vmatprep.subr.mxu0 0.0
    %512 = vmatpush1.msra.mxu0 0.0
    %513 = vmatprep.subr.mxu0 0.0
    %514 = vmatpush1.msra.mxu0 0.0
    %515 = vmatprep.subr.mxu0 0.0
    %516 = vmatpush1.msra.mxu0 0.0
    %517 = vmatprep.subr.mxu0 0.0
    %518 = vmatpush1.msra.mxu0 0.0
    %519 = vmatprep.subr.mxu0 0.0
    %520 = vmatpush1.msra.mxu0 0.0
    %521 = vmatprep.subr.mxu0 0.0
    %522 = vmatpush1.msra.mxu0 0.0
    %523 = vmatprep.subr.mxu0 0.0
    %524 = vmatpush1.msra.mxu0 0.0
    %525 = vmatprep.subr.mxu0 0.0
    %526 = vmatpush1.msra.mxu0 0.0
    %527 = vmatprep.subr.mxu0 0.0
    %528 = vmatpush1.msra.mxu0 0.0
    %529 = vmatprep.mubr.f32.mxu0 0.0
    %530 = vmatmul.mubr.f32.gmra.mrb[0].mxu0 %v393
    %v531 = vpop.f32.mrb[0].mxu0
    %v532 = vadd.f32 0.0, %v531
    %v533 = vpop.f32.mrb[0].mxu0
    %534 = vdwg.mxu0
    %s535 = smul.u32 0, 3
    %s536 = smul.addr %s535, 8
    %s537 = scalar_lea.vmem [#allocation3], %s536
    %v538 = vld [vmem:[%s537] sm:$0xff]
    %v539 = vadd.f32 %v538, %v461
    %v540 = vxor.u32 %v539, 2147483648
    %v541 = vmul.f32 %v540, 1.442695
    %v542 = vpow.pop %v541
    %v543 = vadd.f32 %v542, 1.0
    %v544 = vrcp.pop %v543
    %v545 = vmul.f32 1.0, %v544
    %v546 = vld [vmem:[%s537 + $0x8] sm:$0xff]
    %v547 = vadd.f32 %v546, %v463
    %v548 = vxor.u32 %v547, 2147483648
    %v549 = vmul.f32 %v548, 1.442695
    %v550 = vpow.pop %v549
    %v551 = vadd.f32 %v550, 1.0
    %v552 = vrcp.pop %v551
    %v553 = vmul.f32 1.0, %v552
    %v554 = vld [vmem:[%s537 + $0x10] sm:$0xff]
    %v555 = vadd.f32 %v532, %v391
    %v556 = vmul.f32 %v545, %v555
    %v557 = vadd.f32 %v554, %v556
    %v558 = vtanh.pop %v557
    %v559 = vsub.f32 1.0, %v553
    %v560 = vmul.f32 %v559, %v558
    %v561 = vmul.f32 %v553, %v393
    %v562 = vadd.f32 %v560, %v561
    %563 = vst [vmem:[#allocation7] sm:$0xff] %v562
    %564 = vmatprep.subr.mxu0 %v339
    %565 = vmatpush1.msra.mxu0 %v338
    %566 = vmatprep.subr.mxu0 %v342
    %567 = vmatpush1.msra.mxu0 %v341
    %568 = vmatprep.subr.mxu0 %v345
    %569 = vmatpush1.msra.mxu0 %v344
    %570 = vmatprep.subr.mxu0 %v348
    %571 = vmatpush1.msra.mxu0 %v347
    %572 = vmatprep.subr.mxu0 %v351
    %573 = vmatpush1.msra.mxu0 %v350
    %574 = vmatprep.subr.mxu0 %v354
    %575 = vmatpush1.msra.mxu0 %v353
    %576 = vmatprep.subr.mxu0 %v357
    %577 = vmatpush1.msra.mxu0 %v356
    %578 = vmatprep.subr.mxu0 %v360
    %579 = vmatpush1.msra.mxu0 %v359
    %580 = vmatprep.subr.mxu0 %v363
    %581 = vmatpush1.msra.mxu0 %v362
    %582 = vmatprep.subr.mxu0 %v366
    %583 = vmatpush1.msra.mxu0 %v365
    %584 = vmatprep.subr.mxu0 %v369
    %585 = vmatpush1.msra.mxu0 %v368
    %586 = vmatprep.subr.mxu0 %v372
    %587 = vmatpush1.msra.mxu0 %v371
    %588 = vmatprep.subr.mxu0 %v375
    %589 = vmatpush1.msra.mxu0 %v374
    %590 = vmatprep.subr.mxu0 %v378
    %591 = vmatpush1.msra.mxu0 %v377
    %592 = vmatprep.subr.mxu0 %v381
    %593 = vmatpush1.msra.mxu0 %v380
    %594 = vmatprep.subr.mxu0 %v384
    %595 = vmatpush1.msra.mxu0 %v383
    %596 = vmatprep.subr.mxu0 0.0
    %597 = vmatpush1.msra.mxu0 0.0
    %598 = vmatprep.subr.mxu0 0.0
    %599 = vmatpush1.msra.mxu0 0.0
    %600 = vmatprep.subr.mxu0 0.0
    %601 = vmatpush1.msra.mxu0 0.0
    %602 = vmatprep.subr.mxu0 0.0
    %603 = vmatpush1.msra.mxu0 0.0
    %604 = vmatprep.subr.mxu0 0.0
    %605 = vmatpush1.msra.mxu0 0.0
    %606 = vmatprep.subr.mxu0 0.0
    %607 = vmatpush1.msra.mxu0 0.0
    %608 = vmatprep.subr.mxu0 0.0
    %609 = vmatpush1.msra.mxu0 0.0
    %610 = vmatprep.subr.mxu0 0.0
    %611 = vmatpush1.msra.mxu0 0.0
    %612 = vmatprep.subr.mxu0 0.0
    %613 = vmatpush1.msra.mxu0 0.0
    %614 = vmatprep.subr.mxu0 0.0
    %615 = vmatpush1.msra.mxu0 0.0
    %616 = vmatprep.subr.mxu0 0.0
    %617 = vmatpush1.msra.mxu0 0.0
    %618 = vmatprep.subr.mxu0 0.0
    %619 = vmatpush1.msra.mxu0 0.0
    %620 = vmatprep.subr.mxu0 0.0
    %621 = vmatpush1.msra.mxu0 0.0
    %622 = vmatprep.subr.mxu0 0.0
    %623 = vmatpush1.msra.mxu0 0.0
    %624 = vmatprep.subr.mxu0 0.0
    %625 = vmatpush1.msra.mxu0 0.0
    %626 = vmatprep.subr.mxu0 0.0
    %627 = vmatpush1.msra.mxu0 0.0
    %628 = vmatprep.mubr.f32.mxu0 0.0
    %629 = vmatmul.mubr.f32.gmra.mrb[0].mxu0 %v562
    %v630 = vpop.f32.mrb[0].mxu0
    %v631 = vadd.f32 0.0, %v630
    %v632 = vpop.f32.mrb[0].mxu0
    %v633 = vadd.f32 0.0, %v632
    %634 = vdwg.mxu0
    %635 = vmatprep.subr.mxu0 0.0
    %636 = vmatpush1.msra.mxu0 %v340
    %637 = vmatprep.subr.mxu0 0.0
    %638 = vmatpush1.msra.mxu0 %v343
    %639 = vmatprep.subr.mxu0 0.0
    %640 = vmatpush1.msra.mxu0 %v346
    %641 = vmatprep.subr.mxu0 0.0
    %642 = vmatpush1.msra.mxu0 %v349
    %643 = vmatprep.subr.mxu0 0.0
    %644 = vmatpush1.msra.mxu0 %v352
    %645 = vmatprep.subr.mxu0 0.0
    %646 = vmatpush1.msra.mxu0 %v355
    %647 = vmatprep.subr.mxu0 0.0
    %648 = vmatpush1.msra.mxu0 %v358
    %649 = vmatprep.subr.mxu0 0.0
    %650 = vmatpush1.msra.mxu0 %v361
    %651 = vmatprep.subr.mxu0 0.0
    %652 = vmatpush1.msra.mxu0 %v364
    %653 = vmatprep.subr.mxu0 0.0
    %654 = vmatpush1.msra.mxu0 %v367
    %655 = vmatprep.subr.mxu0 0.0
    %656 = vmatpush1.msra.mxu0 %v370
    %657 = vmatprep.subr.mxu0 0.0
    %658 = vmatpush1.msra.mxu0 %v373
    %659 = vmatprep.subr.mxu0 0.0
    %660 = vmatpush1.msra.mxu0 %v376
    %661 = vmatprep.subr.mxu0 0.0
    %662 = vmatpush1.msra.mxu0 %v379
    %663 = vmatprep.subr.mxu0 0.0
    %664 = vmatpush1.msra.mxu0 %v382
    %665 = vmatprep.subr.mxu0 0.0
    %666 = vmatpush1.msra.mxu0 %v385
    %667 = vmatprep.subr.mxu0 0.0
    %668 = vmatpush1.msra.mxu0 0.0
    %669 = vmatprep.subr.mxu0 0.0
    %670 = vmatpush1.msra.mxu0 0.0
    %671 = vmatprep.subr.mxu0 0.0
    %672 = vmatpush1.msra.mxu0 0.0
    %673 = vmatprep.subr.mxu0 0.0
    %674 = vmatpush1.msra.mxu0 0.0
    %675 = vmatprep.subr.mxu0 0.0
    %676 = vmatpush1.msra.mxu0 0.0
    %677 = vmatprep.subr.mxu0 0.0
    %678 = vmatpush1.msra.mxu0 0.0
    %679 = vmatprep.subr.mxu0 0.0
    %680 = vmatpush1.msra.mxu0 0.0
    %681 = vmatprep.subr.mxu0 0.0
    %682 = vmatpush1.msra.mxu0 0.0
    %683 = vmatprep.subr.mxu0 0.0
    %684 = vmatpush1.msra.mxu0 0.0
    %685 = vmatprep.subr.mxu0 0.0
    %686 = vmatpush1.msra.mxu0 0.0
    %687 = vmatprep.subr.mxu0 0.0
    %688 = vmatpush1.msra.mxu0 0.0
    %689 = vmatprep.subr.mxu0 0.0
    %690 = vmatpush1.msra.mxu0 0.0
    %691 = vmatprep.subr.mxu0 0.0
    %692 = vmatpush1.msra.mxu0 0.0
    %693 = vmatprep.subr.mxu0 0.0
    %694 = vmatpush1.msra.mxu0 0.0
    %695 = vmatprep.subr.mxu0 0.0
    %696 = vmatpush1.msra.mxu0 0.0
    %697 = vmatprep.subr.mxu0 0.0
    %698 = vmatpush1.msra.mxu0 0.0
    %699 = vmatprep.mubr.f32.mxu0 0.0
    %700 = vmatmul.mubr.f32.gmra.mrb[0].mxu0 %v562
    %v701 = vpop.f32.mrb[0].mxu0
    %v702 = vadd.f32 0.0, %v701
    %v703 = vpop.f32.mrb[0].mxu0
    %704 = vdwg.mxu0
    %s705 = smul.u32 1, 3
    %s706 = smul.addr %s705, 8
    %s707 = scalar_lea.vmem [#allocation3], %s706
    %v708 = vld [vmem:[%s707] sm:$0xff]
    %v709 = vadd.f32 %v708, %v631
    %v710 = vxor.u32 %v709, 2147483648
    %v711 = vmul.f32 %v710, 1.442695
    %v712 = vpow.pop %v711
    %v713 = vadd.f32 %v712, 1.0
    %v714 = vrcp.pop %v713
    %v715 = vmul.f32 1.0, %v714
    %v716 = vld [vmem:[%s707 + $0x8] sm:$0xff]
    %v717 = vadd.f32 %v716, %v633
    %v718 = vxor.u32 %v717, 2147483648
    %v719 = vmul.f32 %v718, 1.442695
    %v720 = vpow.pop %v719
    %v721 = vadd.f32 %v720, 1.0
    %v722 = vrcp.pop %v721
    %v723 = vmul.f32 1.0, %v722
    %v724 = vld [vmem:[%s707 + $0x10] sm:$0xff]
    %v725 = vadd.f32 %v702, %v391
    %v726 = vmul.f32 %v715, %v725
    %v727 = vadd.f32 %v724, %v726
    %v728 = vtanh.pop %v727
    %v729 = vsub.f32 1.0, %v723
    %v730 = vmul.f32 %v729, %v728
    %v731 = vmul.f32 %v723, %v562
    %v732 = vadd.f32 %v730, %v731
    %s733 = scalar_lea.vmem [#allocation7], 8
    %734 = vst [vmem:[%s733] sm:$0xff] %v732
    %735 = vmatprep.subr.mxu0 %v339
    %736 = vmatpush1.msra.mxu0 %v338
    %737 = vmatprep.subr.mxu0 %v342
    %738 = vmatpush1.msra.mxu0 %v341
    %739 = vmatprep.subr.mxu0 %v345
    %740 = vmatpush1.msra.mxu0 %v344
    %741 = vmatprep.subr.mxu0 %v348
    %742 = vmatpush1.msra.mxu0 %v347
    %743 = vmatprep.subr.mxu0 %v351
    %744 = vmatpush1.msra.mxu0 %v350
    %745 = vmatprep.subr.mxu0 %v354
    %746 = vmatpush1.msra.mxu0 %v353
    %747 = vmatprep.subr.mxu0 %v357
    %748 = vmatpush1.msra.mxu0 %v356
    %749 = vmatprep.subr.mxu0 %v360
    %750 = vmatpush1.msra.mxu0 %v359
    %751 = vmatprep.subr.mxu0 %v363
    %752 = vmatpush1.msra.mxu0 %v362
    %753 = vmatprep.subr.mxu0 %v366
    %754 = vmatpush1.msra.mxu0 %v365
    %755 = vmatprep.subr.mxu0 %v369
    %756 = vmatpush1.msra.mxu0 %v368
    %757 = vmatprep.subr.mxu0 %v372
    %758 = vmatpush1.msra.mxu0 %v371
    %759 = vmatprep.subr.mxu0 %v375
    %760 = vmatpush1.msra.mxu0 %v374
    %761 = vmatprep.subr.mxu0 %v378
    %762 = vmatpush1.msra.mxu0 %v377
    %763 = vmatprep.subr.mxu0 %v381
    %764 = vmatpush1.msra.mxu0 %v380
    %765 = vmatprep.subr.mxu0 %v384
    %766 = vmatpush1.msra.mxu0 %v383
    %767 = vmatprep.subr.mxu0 0.0
    %768 = vmatpush1.msra.mxu0 0.0
    %769 = vmatprep.subr.mxu0 0.0
    %770 = vmatpush1.msra.mxu0 0.0
    %771 = vmatprep.subr.mxu0 0.0
    %772 = vmatpush1.msra.mxu0 0.0
    %773 = vmatprep.subr.mxu0 0.0
    %774 = vmatpush1.msra.mxu0 0.0
    %775 = vmatprep.subr.mxu0 0.0
    %776 = vmatpush1.msra.mxu0 0.0
    %777 = vmatprep.subr.mxu0 0.0
    %778 = vmatpush1.msra.mxu0 0.0
    %779 = vmatprep.subr.mxu0 0.0
    %780 = vmatpush1.msra.mxu0 0.0
    %781 = vmatprep.subr.mxu0 0.0
    %782 = vmatpush1.msra.mxu0 0.0
    %783 = vmatprep.subr.mxu0 0.0
    %784 = vmatpush1.msra.mxu0 0.0
    %785 = vmatprep.subr.mxu0 0.0
    %786 = vmatpush1.msra.mxu0 0.0
    %787 = vmatprep.subr.mxu0 0.0
    %788 = vmatpush1.msra.mxu0 0.0
    %789 = vmatprep.subr.mxu0 0.0
    %790 = vmatpush1.msra.mxu0 0.0
    %791 = vmatprep.subr.mxu0 0.0
    %792 = vmatpush1.msra.mxu0 0.0
    %793 = vmatprep.subr.mxu0 0.0
    %794 = vmatpush1.msra.mxu0 0.0
    %795 = vmatprep.subr.mxu0 0.0
    %796 = vmatpush1.msra.mxu0 0.0
    %797 = vmatprep.subr.mxu0 0.0
    %798 = vmatpush1.msra.mxu0 0.0
    %799 = vmatprep.mubr.f32.mxu0 0.0
    %800 = vmatmul.mubr.f32.gmra.mrb[0].mxu0 %v732
    %v801 = vpop.f32.mrb[0].mxu0
    %v802 = vadd.f32 0.0, %v801
    %v803 = vpop.f32.mrb[0].mxu0
    %v804 = vadd.f32 0.0, %v803
    %805 = vdwg.mxu0
    %806 = vmatprep.subr.mxu0 0.0
    %807 = vmatpush1.msra.mxu0 %v340
    %808 = vmatprep.subr.mxu0 0.0
    %809 = vmatpush1.msra.mxu0 %v343
    %810 = vmatprep.subr.mxu0 0.0
    %811 = vmatpush1.msra.mxu0 %v346
    %812 = vmatprep.subr.mxu0 0.0
    %813 = vmatpush1.msra.mxu0 %v349
    %814 = vmatprep.subr.mxu0 0.0
    %815 = vmatpush1.msra.mxu0 %v352
    %816 = vmatprep.subr.mxu0 0.0
    %817 = vmatpush1.msra.mxu0 %v355
    %818 = vmatprep.subr.mxu0 0.0
    %819 = vmatpush1.msra.mxu0 %v358
    %820 = vmatprep.subr.mxu0 0.0
    %821 = vmatpush1.msra.mxu0 %v361
    %822 = vmatprep.subr.mxu0 0.0
    %823 = vmatpush1.msra.mxu0 %v364
    %824 = vmatprep.subr.mxu0 0.0
    %825 = vmatpush1.msra.mxu0 %v367
    %826 = vmatprep.subr.mxu0 0.0
    %827 = vmatpush1.msra.mxu0 %v370
    %828 = vmatprep.subr.mxu0 0.0
    %829 = vmatpush1.msra.mxu0 %v373
    %830 = vmatprep.subr.mxu0 0.0
    %831 = vmatpush1.msra.mxu0 %v376
    %832 = vmatprep.subr.mxu0 0.0
    %833 = vmatpush1.msra.mxu0 %v379
    %834 = vmatprep.subr.mxu0 0.0
    %835 = vmatpush1.msra.mxu0 %v382
    %836 = vmatprep.subr.mxu0 0.0
    %837 = vmatpush1.msra.mxu0 %v385
    %838 = vmatprep.subr.mxu0 0.0
    %839 = vmatpush1.msra.mxu0 0.0
    %840 = vmatprep.subr.mxu0 0.0
    %841 = vmatpush1.msra.mxu0 0.0
    %842 = vmatprep.subr.mxu0 0.0
    %843 = vmatpush1.msra.mxu0 0.0
    %844 = vmatprep.subr.mxu0 0.0
    %845 = vmatpush1.msra.mxu0 0.0
    %846 = vmatprep.subr.mxu0 0.0
    %847 = vmatpush1.msra.mxu0 0.0
    %848 = vmatprep.subr.mxu0 0.0
    %849 = vmatpush1.msra.mxu0 0.0
    %850 = vmatprep.subr.mxu0 0.0
    %851 = vmatpush1.msra.mxu0 0.0
    %852 = vmatprep.subr.mxu0 0.0
    %853 = vmatpush1.msra.mxu0 0.0
    %854 = vmatprep.subr.mxu0 0.0
    %855 = vmatpush1.msra.mxu0 0.0
    %856 = vmatprep.subr.mxu0 0.0
    %857 = vmatpush1.msra.mxu0 0.0
    %858 = vmatprep.subr.mxu0 0.0
    %859 = vmatpush1.msra.mxu0 0.0
    %860 = vmatprep.subr.mxu0 0.0
    %861 = vmatpush1.msra.mxu0 0.0
    %862 = vmatprep.subr.mxu0 0.0
    %863 = vmatpush1.msra.mxu0 0.0
    %864 = vmatprep.subr.mxu0 0.0
    %865 = vmatpush1.msra.mxu0 0.0
    %866 = vmatprep.subr.mxu0 0.0
    %867 = vmatpush1.msra.mxu0 0.0
    %868 = vmatprep.subr.mxu0 0.0
    %869 = vmatpush1.msra.mxu0 0.0
    %870 = vmatprep.mubr.f32.mxu0 0.0
    %871 = vmatmul.mubr.f32.gmra.mrb[0].mxu0 %v732
    %v872 = vpop.f32.mrb[0].mxu0
    %v873 = vadd.f32 0.0, %v872
    %v874 = vpop.f32.mrb[0].mxu0
    %875 = vdwg.mxu0
    %s876 = smul.u32 2, 3
    %s877 = smul.addr %s876, 8
    %s878 = scalar_lea.vmem [#allocation3], %s877
    %v879 = vld [vmem:[%s878] sm:$0xff]
    %v880 = vadd.f32 %v879, %v802
    %v881 = vxor.u32 %v880, 2147483648
    %v882 = vmul.f32 %v881, 1.442695
    %v883 = vpow.pop %v882
    %v884 = vadd.f32 %v883, 1.0
    %v885 = vrcp.pop %v884
    %v886 = vmul.f32 1.0, %v885
    %v887 = vld [vmem:[%s878 + $0x8] sm:$0xff]
    %v888 = vadd.f32 %v887, %v804
    %v889 = vxor.u32 %v888, 2147483648
    %v890 = vmul.f32 %v889, 1.442695
    %v891 = vpow.pop %v890
    %v892 = vadd.f32 %v891, 1.0
    %v893 = vrcp.pop %v892
    %v894 = vmul.f32 1.0, %v893
    %v895 = vld [vmem:[%s878 + $0x10] sm:$0xff]
    %v896 = vadd.f32 %v873, %v391
    %v897 = vmul.f32 %v886, %v896
    %v898 = vadd.f32 %v895, %v897
    %v899 = vtanh.pop %v898
    %v900 = vsub.f32 1.0, %v894
    %v901 = vmul.f32 %v900, %v899
    %v902 = vmul.f32 %v894, %v732
    %v903 = vadd.f32 %v901, %v902
    %s904 = scalar_lea.vmem [#allocation7], 16
    %905 = vst [vmem:[%s904] sm:$0xff] %v903
    %906 = vmatprep.subr.mxu0 %v339
    %907 = vmatpush1.msra.mxu0 %v338
    %908 = vmatprep.subr.mxu0 %v342
    %909 = vmatpush1.msra.mxu0 %v341
    %910 = vmatprep.subr.mxu0 %v345
    %911 = vmatpush1.msra.mxu0 %v344
    %912 = vmatprep.subr.mxu0 %v348
    %913 = vmatpush1.msra.mxu0 %v347
    %914 = vmatprep.subr.mxu0 %v351
    %915 = vmatpush1.msra.mxu0 %v350
    %916 = vmatprep.subr.mxu0 %v354
    %917 = vmatpush1.msra.mxu0 %v353
    %918 = vmatprep.subr.mxu0 %v357
    %919 = vmatpush1.msra.mxu0 %v356
    %920 = vmatprep.subr.mxu0 %v360
    %921 = vmatpush1.msra.mxu0 %v359
    %922 = vmatprep.subr.mxu0 %v363
    %923 = vmatpush1.msra.mxu0 %v362
    %924 = vmatprep.subr.mxu0 %v366
    %925 = vmatpush1.msra.mxu0 %v365
    %926 = vmatprep.subr.mxu0 %v369
    %927 = vmatpush1.msra.mxu0 %v368
    %928 = vmatprep.subr.mxu0 %v372
    %929 = vmatpush1.msra.mxu0 %v371
    %930 = vmatprep.subr.mxu0 %v375
    %931 = vmatpush1.msra.mxu0 %v374
    %932 = vmatprep.subr.mxu0 %v378
    %933 = vmatpush1.msra.mxu0 %v377
    %934 = vmatprep.subr.mxu0 %v381
    %935 = vmatpush1.msra.mxu0 %v380
    %936 = vmatprep.subr.mxu0 %v384
    %937 = vmatpush1.msra.mxu0 %v383
    %938 = vmatprep.subr.mxu0 0.0
    %939 = vmatpush1.msra.mxu0 0.0
    %940 = vmatprep.subr.mxu0 0.0
    %941 = vmatpush1.msra.mxu0 0.0
    %942 = vmatprep.subr.mxu0 0.0
    %943 = vmatpush1.msra.mxu0 0.0
    %944 = vmatprep.subr.mxu0 0.0
    %945 = vmatpush1.msra.mxu0 0.0
    %946 = vmatprep.subr.mxu0 0.0
    %947 = vmatpush1.msra.mxu0 0.0
    %948 = vmatprep.subr.mxu0 0.0
    %949 = vmatpush1.msra.mxu0 0.0
    %950 = vmatprep.subr.mxu0 0.0
    %951 = vmatpush1.msra.mxu0 0.0
    %952 = vmatprep.subr.mxu0 0.0
    %953 = vmatpush1.msra.mxu0 0.0
    %954 = vmatprep.subr.mxu0 0.0
    %955 = vmatpush1.msra.mxu0 0.0
    %956 = vmatprep.subr.mxu0 0.0
    %957 = vmatpush1.msra.mxu0 0.0
    %958 = vmatprep.subr.mxu0 0.0
    %959 = vmatpush1.msra.mxu0 0.0
    %960 = vmatprep.subr.mxu0 0.0
    %961 = vmatpush1.msra.mxu0 0.0
    %962 = vmatprep.subr.mxu0 0.0
    %963 = vmatpush1.msra.mxu0 0.0
    %964 = vmatprep.subr.mxu0 0.0
    %965 = vmatpush1.msra.mxu0 0.0
    %966 = vmatprep.subr.mxu0 0.0
    %967 = vmatpush1.msra.mxu0 0.0
    %968 = vmatprep.subr.mxu0 0.0
    %969 = vmatpush1.msra.mxu0 0.0
    %970 = vmatprep.mubr.f32.mxu0 0.0
    %971 = vmatmul.mubr.f32.gmra.mrb[0].mxu0 %v903
    %v972 = vpop.f32.mrb[0].mxu0
    %v973 = vadd.f32 0.0, %v972
    %v974 = vpop.f32.mrb[0].mxu0
    %v975 = vadd.f32 0.0, %v974
    %976 = vdwg.mxu0
    %977 = vmatprep.subr.mxu0 0.0
    %978 = vmatpush1.msra.mxu0 %v340
    %979 = vmatprep.subr.mxu0 0.0
    %980 = vmatpush1.msra.mxu0 %v343
    %981 = vmatprep.subr.mxu0 0.0
    %982 = vmatpush1.msra.mxu0 %v346
    %983 = vmatprep.subr.mxu0 0.0
    %984 = vmatpush1.msra.mxu0 %v349
    %985 = vmatprep.subr.mxu0 0.0
    %986 = vmatpush1.msra.mxu0 %v352
    %987 = vmatprep.subr.mxu0 0.0
    %988 = vmatpush1.msra.mxu0 %v355
    %989 = vmatprep.subr.mxu0 0.0
    %990 = vmatpush1.msra.mxu0 %v358
    %991 = vmatprep.subr.mxu0 0.0
    %992 = vmatpush1.msra.mxu0 %v361
    %993 = vmatprep.subr.mxu0 0.0
    %994 = vmatpush1.msra.mxu0 %v364
    %995 = vmatprep.subr.mxu0 0.0
    %996 = vmatpush1.msra.mxu0 %v367
    %997 = vmatprep.subr.mxu0 0.0
    %998 = vmatpush1.msra.mxu0 %v370
    %999 = vmatprep.subr.mxu0 0.0
    %1000 = vmatpush1.msra.mxu0 %v373
    %1001 = vmatprep.subr.mxu0 0.0
    %1002 = vmatpush1.msra.mxu0 %v376
    %1003 = vmatprep.subr.mxu0 0.0
    %1004 = vmatpush1.msra.mxu0 %v379
    %1005 = vmatprep.subr.mxu0 0.0
    %1006 = vmatpush1.msra.mxu0 %v382
    %1007 = vmatprep.subr.mxu0 0.0
    %1008 = vmatpush1.msra.mxu0 %v385
    %1009 = vmatprep.subr.mxu0 0.0
    %1010 = vmatpush1.msra.mxu0 0.0
    %1011 = vmatprep.subr.mxu0 0.0
    %1012 = vmatpush1.msra.mxu0 0.0
    %1013 = vmatprep.subr.mxu0 0.0
    %1014 = vmatpush1.msra.mxu0 0.0
    %1015 = vmatprep.subr.mxu0 0.0
    %1016 = vmatpush1.msra.mxu0 0.0
    %1017 = vmatprep.subr.mxu0 0.0
    %1018 = vmatpush1.msra.mxu0 0.0
    %1019 = vmatprep.subr.mxu0 0.0
    %1020 = vmatpush1.msra.mxu0 0.0
    %1021 = vmatprep.subr.mxu0 0.0
    %1022 = vmatpush1.msra.mxu0 0.0
    %1023 = vmatprep.subr.mxu0 0.0
    %1024 = vmatpush1.msra.mxu0 0.0
    %1025 = vmatprep.subr.mxu0 0.0
    %1026 = vmatpush1.msra.mxu0 0.0
    %1027 = vmatprep.subr.mxu0 0.0
    %1028 = vmatpush1.msra.mxu0 0.0
    %1029 = vmatprep.subr.mxu0 0.0
    %1030 = vmatpush1.msra.mxu0 0.0
    %1031 = vmatprep.subr.mxu0 0.0
    %1032 = vmatpush1.msra.mxu0 0.0
    %1033 = vmatprep.subr.mxu0 0.0
    %1034 = vmatpush1.msra.mxu0 0.0
    %1035 = vmatprep.subr.mxu0 0.0
    %1036 = vmatpush1.msra.mxu0 0.0
    %1037 = vmatprep.subr.mxu0 0.0
    %1038 = vmatpush1.msra.mxu0 0.0
    %1039 = vmatprep.subr.mxu0 0.0
    %1040 = vmatpush1.msra.mxu0 0.0
    %1041 = vmatprep.mubr.f32.mxu0 0.0
    %1042 = vmatmul.mubr.f32.gmra.mrb[0].mxu0 %v903
    %v1043 = vpop.f32.mrb[0].mxu0
    %v1044 = vadd.f32 0.0, %v1043
    %v1045 = vpop.f32.mrb[0].mxu0
    %1046 = vdwg.mxu0
    %s1047 = smul.u32 3, 3
    %s1048 = smul.addr %s1047, 8
    %s1049 = scalar_lea.vmem [#allocation3], %s1048
    %v1050 = vld [vmem:[%s1049] sm:$0xff]
    %v1051 = vadd.f32 %v1050, %v973
    %v1052 = vxor.u32 %v1051, 2147483648
    %v1053 = vmul.f32 %v1052, 1.442695
    %v1054 = vpow.pop %v1053
    %v1055 = vadd.f32 %v1054, 1.0
    %v1056 = vrcp.pop %v1055
    %v1057 = vmul.f32 1.0, %v1056
    %v1058 = vld [vmem:[%s1049 + $0x8] sm:$0xff]
    %v1059 = vadd.f32 %v1058, %v975
    %v1060 = vxor.u32 %v1059, 2147483648
    %v1061 = vmul.f32 %v1060, 1.442695
    %v1062 = vpow.pop %v1061
    %v1063 = vadd.f32 %v1062, 1.0
    %v1064 = vrcp.pop %v1063
    %v1065 = vmul.f32 1.0, %v1064
    %v1066 = vld [vmem:[%s1049 + $0x10] sm:$0xff]
    %v1067 = vadd.f32 %v1044, %v391
    %v1068 = vmul.f32 %v1057, %v1067
    %v1069 = vadd.f32 %v1066, %v1068
    %v1070 = vtanh.pop %v1069
    %v1071 = vsub.f32 1.0, %v1065
    %v1072 = vmul.f32 %v1071, %v1070
    %v1073 = vmul.f32 %v1065, %v903
    %v1074 = vadd.f32 %v1072, %v1073
    %s1075 = scalar_lea.vmem [#allocation7], 24
    %1076 = vst [vmem:[%s1075] sm:$0xff] %v1074
    %1077 = vmatprep.subr.mxu0 %v339
    %1078 = vmatpush1.msra.mxu0 %v338
    %1079 = vmatprep.subr.mxu0 %v342
    %1080 = vmatpush1.msra.mxu0 %v341
    %1081 = vmatprep.subr.mxu0 %v345
    %1082 = vmatpush1.msra.mxu0 %v344
    %1083 = vmatprep.subr.mxu0 %v348
    %1084 = vmatpush1.msra.mxu0 %v347
    %1085 = vmatprep.subr.mxu0 %v351
    %1086 = vmatpush1.msra.mxu0 %v350
    %1087 = vmatprep.subr.mxu0 %v354
    %1088 = vmatpush1.msra.mxu0 %v353
    %1089 = vmatprep.subr.mxu0 %v357
    %1090 = vmatpush1.msra.mxu0 %v356
    %1091 = vmatprep.subr.mxu0 %v360
    %1092 = vmatpush1.msra.mxu0 %v359
    %1093 = vmatprep.subr.mxu0 %v363
    %1094 = vmatpush1.msra.mxu0 %v362
    %1095 = vmatprep.subr.mxu0 %v366
    %1096 = vmatpush1.msra.mxu0 %v365
    %1097 = vmatprep.subr.mxu0 %v369
    %1098 = vmatpush1.msra.mxu0 %v368
    %1099 = vmatprep.subr.mxu0 %v372
    %1100 = vmatpush1.msra.mxu0 %v371
    %1101 = vmatprep.subr.mxu0 %v375
    %1102 = vmatpush1.msra.mxu0 %v374
    %1103 = vmatprep.subr.mxu0 %v378
    %1104 = vmatpush1.msra.mxu0 %v377
    %1105 = vmatprep.subr.mxu0 %v381
    %1106 = vmatpush1.msra.mxu0 %v380
    %1107 = vmatprep.subr.mxu0 %v384
    %1108 = vmatpush1.msra.mxu0 %v383
    %1109 = vmatprep.subr.mxu0 0.0
    %1110 = vmatpush1.msra.mxu0 0.0
    %1111 = vmatprep.subr.mxu0 0.0
    %1112 = vmatpush1.msra.mxu0 0.0
    %1113 = vmatprep.subr.mxu0 0.0
    %1114 = vmatpush1.msra.mxu0 0.0
    %1115 = vmatprep.subr.mxu0 0.0
    %1116 = vmatpush1.msra.mxu0 0.0
    %1117 = vmatprep.subr.mxu0 0.0
    %1118 = vmatpush1.msra.mxu0 0.0
    %1119 = vmatprep.subr.mxu0 0.0
    %1120 = vmatpush1.msra.mxu0 0.0
    %1121 = vmatprep.subr.mxu0 0.0
    %1122 = vmatpush1.msra.mxu0 0.0
    %1123 = vmatprep.subr.mxu0 0.0
    %1124 = vmatpush1.msra.mxu0 0.0
    %1125 = vmatprep.subr.mxu0 0.0
    %1126 = vmatpush1.msra.mxu0 0.0
    %1127 = vmatprep.subr.mxu0 0.0
    %1128 = vmatpush1.msra.mxu0 0.0
    %1129 = vmatprep.subr.mxu0 0.0
    %1130 = vmatpush1.msra.mxu0 0.0
    %1131 = vmatprep.subr.mxu0 0.0
    %1132 = vmatpush1.msra.mxu0 0.0
    %1133 = vmatprep.subr.mxu0 0.0
    %1134 = vmatpush1.msra.mxu0 0.0
    %1135 = vmatprep.subr.mxu0 0.0
    %1136 = vmatpush1.msra.mxu0 0.0
    %1137 = vmatprep.subr.mxu0 0.0
    %1138 = vmatpush1.msra.mxu0 0.0
    %1139 = vmatprep.subr.mxu0 0.0
    %1140 = vmatpush1.msra.mxu0 0.0
    %1141 = vmatprep.mubr.f32.mxu0 0.0
    %1142 = vmatmul.mubr.f32.gmra.mrb[0].mxu0 %v1074
    %v1143 = vpop.f32.mrb[0].mxu0
    %v1144 = vadd.f32 0.0, %v1143
    %v1145 = vpop.f32.mrb[0].mxu0
    %v1146 = vadd.f32 0.0, %v1145
    %1147 = vdwg.mxu0
    %1148 = vmatprep.subr.mxu0 0.0
    %1149 = vmatpush1.msra.mxu0 %v340
    %1150 = vmatprep.subr.mxu0 0.0
    %1151 = vmatpush1.msra.mxu0 %v343
    %1152 = vmatprep.subr.mxu0 0.0
    %1153 = vmatpush1.msra.mxu0 %v346
    %1154 = vmatprep.subr.mxu0 0.0
    %1155 = vmatpush1.msra.mxu0 %v349
    %1156 = vmatprep.subr.mxu0 0.0
    %1157 = vmatpush1.msra.mxu0 %v352
    %1158 = vmatprep.subr.mxu0 0.0
    %1159 = vmatpush1.msra.mxu0 %v355
    %1160 = vmatprep.subr.mxu0 0.0
    %1161 = vmatpush1.msra.mxu0 %v358
    %1162 = vmatprep.subr.mxu0 0.0
    %1163 = vmatpush1.msra.mxu0 %v361
    %1164 = vmatprep.subr.mxu0 0.0
    %1165 = vmatpush1.msra.mxu0 %v364
    %1166 = vmatprep.subr.mxu0 0.0
    %1167 = vmatpush1.msra.mxu0 %v367
    %1168 = vmatprep.subr.mxu0 0.0
    %1169 = vmatpush1.msra.mxu0 %v370
    %1170 = vmatprep.subr.mxu0 0.0
    %1171 = vmatpush1.msra.mxu0 %v373
    %1172 = vmatprep.subr.mxu0 0.0
    %1173 = vmatpush1.msra.mxu0 %v376
    %1174 = vmatprep.subr.mxu0 0.0
    %1175 = vmatpush1.msra.mxu0 %v379
    %1176 = vmatprep.subr.mxu0 0.0
    %1177 = vmatpush1.msra.mxu0 %v382
    %1178 = vmatprep.subr.mxu0 0.0
    %1179 = vmatpush1.msra.mxu0 %v385
    %1180 = vmatprep.subr.mxu0 0.0
    %1181 = vmatpush1.msra.mxu0 0.0
    %1182 = vmatprep.subr.mxu0 0.0
    %1183 = vmatpush1.msra.mxu0 0.0
    %1184 = vmatprep.subr.mxu0 0.0
    %1185 = vmatpush1.msra.mxu0 0.0
    %1186 = vmatprep.subr.mxu0 0.0
    %1187 = vmatpush1.msra.mxu0 0.0
    %1188 = vmatprep.subr.mxu0 0.0
    %1189 = vmatpush1.msra.mxu0 0.0
    %1190 = vmatprep.subr.mxu0 0.0
    %1191 = vmatpush1.msra.mxu0 0.0
    %1192 = vmatprep.subr.mxu0 0.0
    %1193 = vmatpush1.msra.mxu0 0.0
    %1194 = vmatprep.subr.mxu0 0.0
    %1195 = vmatpush1.msra.mxu0 0.0
    %1196 = vmatprep.subr.mxu0 0.0
    %1197 = vmatpush1.msra.mxu0 0.0
    %1198 = vmatprep.subr.mxu0 0.0
    %1199 = vmatpush1.msra.mxu0 0.0
    %1200 = vmatprep.subr.mxu0 0.0
    %1201 = vmatpush1.msra.mxu0 0.0
    %1202 = vmatprep.subr.mxu0 0.0
    %1203 = vmatpush1.msra.mxu0 0.0
    %1204 = vmatprep.subr.mxu0 0.0
    %1205 = vmatpush1.msra.mxu0 0.0
    %1206 = vmatprep.subr.mxu0 0.0
    %1207 = vmatpush1.msra.mxu0 0.0
    %1208 = vmatprep.subr.mxu0 0.0
    %1209 = vmatpush1.msra.mxu0 0.0
    %1210 = vmatprep.subr.mxu0 0.0
    %1211 = vmatpush1.msra.mxu0 0.0
    %1212 = vmatprep.mubr.f32.mxu0 0.0
    %1213 = vmatmul.mubr.f32.gmra.mrb[0].mxu0 %v1074
    %v1214 = vpop.f32.mrb[0].mxu0
    %v1215 = vadd.f32 0.0, %v1214
    %v1216 = vpop.f32.mrb[0].mxu0
    %1217 = vdwg.mxu0
    %s1218 = smul.u32 4, 3
    %s1219 = smul.addr %s1218, 8
    %s1220 = scalar_lea.vmem [#allocation3], %s1219
    %v1221 = vld [vmem:[%s1220] sm:$0xff]
    %v1222 = vadd.f32 %v1221, %v1144
    %v1223 = vxor.u32 %v1222, 2147483648
    %v1224 = vmul.f32 %v1223, 1.442695
    %v1225 = vpow.pop %v1224
    %v1226 = vadd.f32 %v1225, 1.0
    %v1227 = vrcp.pop %v1226
    %v1228 = vmul.f32 1.0, %v1227
    %v1229 = vld [vmem:[%s1220 + $0x8] sm:$0xff]
    %v1230 = vadd.f32 %v1229, %v1146
    %v1231 = vxor.u32 %v1230, 2147483648
    %v1232 = vmul.f32 %v1231, 1.442695
    %v1233 = vpow.pop %v1232
    %v1234 = vadd.f32 %v1233, 1.0
    %v1235 = vrcp.pop %v1234
    %v1236 = vmul.f32 1.0, %v1235
    %v1237 = vld [vmem:[%s1220 + $0x10] sm:$0xff]
    %v1238 = vadd.f32 %v1215, %v391
    %v1239 = vmul.f32 %v1228, %v1238
    %v1240 = vadd.f32 %v1237, %v1239
    %v1241 = vtanh.pop %v1240
    %v1242 = vsub.f32 1.0, %v1236
    %v1243 = vmul.f32 %v1242, %v1241
    %v1244 = vmul.f32 %v1236, %v1074
    %v1245 = vadd.f32 %v1243, %v1244
    %s1246 = scalar_lea.vmem [#allocation7], 32
    %1247 = vst [vmem:[%s1246] sm:$0xff] %v1245
    %1248 = vmatprep.subr.mxu0 %v339
    %1249 = vmatpush1.msra.mxu0 %v338
    %1250 = vmatprep.subr.mxu0 %v342
    %1251 = vmatpush1.msra.mxu0 %v341
    %1252 = vmatprep.subr.mxu0 %v345
    %1253 = vmatpush1.msra.mxu0 %v344
    %1254 = vmatprep.subr.mxu0 %v348
    %1255 = vmatpush1.msra.mxu0 %v347
    %1256 = vmatprep.subr.mxu0 %v351
    %1257 = vmatpush1.msra.mxu0 %v350
    %1258 = vmatprep.subr.mxu0 %v354
    %1259 = vmatpush1.msra.mxu0 %v353
    %1260 = vmatprep.subr.mxu0 %v357
    %1261 = vmatpush1.msra.mxu0 %v356
    %1262 = vmatprep.subr.mxu0 %v360
    %1263 = vmatpush1.msra.mxu0 %v359
    %1264 = vmatprep.subr.mxu0 %v363
    %1265 = vmatpush1.msra.mxu0 %v362
    %1266 = vmatprep.subr.mxu0 %v366
    %1267 = vmatpush1.msra.mxu0 %v365
    %1268 = vmatprep.subr.mxu0 %v369
    %1269 = vmatpush1.msra.mxu0 %v368
    %1270 = vmatprep.subr.mxu0 %v372
    %1271 = vmatpush1.msra.mxu0 %v371
    %1272 = vmatprep.subr.mxu0 %v375
    %1273 = vmatpush1.msra.mxu0 %v374
    %1274 = vmatprep.subr.mxu0 %v378
    %1275 = vmatpush1.msra.mxu0 %v377
    %1276 = vmatprep.subr.mxu0 %v381
    %1277 = vmatpush1.msra.mxu0 %v380
    %1278 = vmatprep.subr.mxu0 %v384
    %1279 = vmatpush1.msra.mxu0 %v383
    %1280 = vmatprep.subr.mxu0 0.0
    %1281 = vmatpush1.msra.mxu0 0.0
    %1282 = vmatprep.subr.mxu0 0.0
    %1283 = vmatpush1.msra.mxu0 0.0
    %1284 = vmatprep.subr.mxu0 0.0
    %1285 = vmatpush1.msra.mxu0 0.0
    %1286 = vmatprep.subr.mxu0 0.0
    %1287 = vmatpush1.msra.mxu0 0.0
    %1288 = vmatprep.subr.mxu0 0.0
    %1289 = vmatpush1.msra.mxu0 0.0
    %1290 = vmatprep.subr.mxu0 0.0
    %1291 = vmatpush1.msra.mxu0 0.0
    %1292 = vmatprep.subr.mxu0 0.0
    %1293 = vmatpush1.msra.mxu0 0.0
    %1294 = vmatprep.subr.mxu0 0.0
    %1295 = vmatpush1.msra.mxu0 0.0
    %1296 = vmatprep.subr.mxu0 0.0
    %1297 = vmatpush1.msra.mxu0 0.0
    %1298 = vmatprep.subr.mxu0 0.0
    %1299 = vmatpush1.msra.mxu0 0.0
    %1300 = vmatprep.subr.mxu0 0.0
    %1301 = vmatpush1.msra.mxu0 0.0
    %1302 = vmatprep.subr.mxu0 0.0
    %1303 = vmatpush1.msra.mxu0 0.0
    %1304 = vmatprep.subr.mxu0 0.0
    %1305 = vmatpush1.msra.mxu0 0.0
    %1306 = vmatprep.subr.mxu0 0.0
    %1307 = vmatpush1.msra.mxu0 0.0
    %1308 = vmatprep.subr.mxu0 0.0
    %1309 = vmatpush1.msra.mxu0 0.0
    %1310 = vmatprep.subr.mxu0 0.0
    %1311 = vmatpush1.msra.mxu0 0.0
    %1312 = vmatprep.mubr.f32.mxu0 0.0
    %1313 = vmatmul.mubr.f32.gmra.mrb[0].mxu0 %v1245
    %v1314 = vpop.f32.mrb[0].mxu0
    %v1315 = vadd.f32 0.0, %v1314
    %v1316 = vpop.f32.mrb[0].mxu0
    %v1317 = vadd.f32 0.0, %v1316
    %1318 = vdwg.mxu0
    %1319 = vmatprep.subr.mxu0 0.0
    %1320 = vmatpush1.msra.mxu0 %v340
    %1321 = vmatprep.subr.mxu0 0.0
    %1322 = vmatpush1.msra.mxu0 %v343
    %1323 = vmatprep.subr.mxu0 0.0
    %1324 = vmatpush1.msra.mxu0 %v346
    %1325 = vmatprep.subr.mxu0 0.0
    %1326 = vmatpush1.msra.mxu0 %v349
    %1327 = vmatprep.subr.mxu0 0.0
    %1328 = vmatpush1.msra.mxu0 %v352
    %1329 = vmatprep.subr.mxu0 0.0
    %1330 = vmatpush1.msra.mxu0 %v355
    %1331 = vmatprep.subr.mxu0 0.0
    %1332 = vmatpush1.msra.mxu0 %v358
    %1333 = vmatprep.subr.mxu0 0.0
    %1334 = vmatpush1.msra.mxu0 %v361
    %1335 = vmatprep.subr.mxu0 0.0
    %1336 = vmatpush1.msra.mxu0 %v364
    %1337 = vmatprep.subr.mxu0 0.0
    %1338 = vmatpush1.msra.mxu0 %v367
    %1339 = vmatprep.subr.mxu0 0.0
    %1340 = vmatpush1.msra.mxu0 %v370
    %1341 = vmatprep.subr.mxu0 0.0
    %1342 = vmatpush1.msra.mxu0 %v373
    %1343 = vmatprep.subr.mxu0 0.0
    %1344 = vmatpush1.msra.mxu0 %v376
    %1345 = vmatprep.subr.mxu0 0.0
    %1346 = vmatpush1.msra.mxu0 %v379
    %1347 = vmatprep.subr.mxu0 0.0
    %1348 = vmatpush1.msra.mxu0 %v382
    %1349 = vmatprep.subr.mxu0 0.0
    %1350 = vmatpush1.msra.mxu0 %v385
    %1351 = vmatprep.subr.mxu0 0.0
    %1352 = vmatpush1.msra.mxu0 0.0
    %1353 = vmatprep.subr.mxu0 0.0
    %1354 = vmatpush1.msra.mxu0 0.0
    %1355 = vmatprep.subr.mxu0 0.0
    %1356 = vmatpush1.msra.mxu0 0.0
    %1357 = vmatprep.subr.mxu0 0.0
    %1358 = vmatpush1.msra.mxu0 0.0
    %1359 = vmatprep.subr.mxu0 0.0
    %1360 = vmatpush1.msra.mxu0 0.0
    %1361 = vmatprep.subr.mxu0 0.0
    %1362 = vmatpush1.msra.mxu0 0.0
    %1363 = vmatprep.subr.mxu0 0.0
    %1364 = vmatpush1.msra.mxu0 0.0
    %1365 = vmatprep.subr.mxu0 0.0
    %1366 = vmatpush1.msra.mxu0 0.0
    %1367 = vmatprep.subr.mxu0 0.0
    %1368 = vmatpush1.msra.mxu0 0.0
    %1369 = vmatprep.subr.mxu0 0.0
    %1370 = vmatpush1.msra.mxu0 0.0
    %1371 = vmatprep.subr.mxu0 0.0
    %1372 = vmatpush1.msra.mxu0 0.0
    %1373 = vmatprep.subr.mxu0 0.0
    %1374 = vmatpush1.msra.mxu0 0.0
    %1375 = vmatprep.subr.mxu0 0.0
    %1376 = vmatpush1.msra.mxu0 0.0
    %1377 = vmatprep.subr.mxu0 0.0
    %1378 = vmatpush1.msra.mxu0 0.0
    %1379 = vmatprep.subr.mxu0 0.0
    %1380 = vmatpush1.msra.mxu0 0.0
    %1381 = vmatprep.subr.mxu0 0.0
    %1382 = vmatpush1.msra.mxu0 0.0
    %1383 = vmatprep.mubr.f32.mxu0 0.0
    %1384 = vmatmul.mubr.f32.gmra.mrb[0].mxu0 %v1245
    %v1385 = vpop.f32.mrb[0].mxu0
    %v1386 = vadd.f32 0.0, %v1385
    %v1387 = vpop.f32.mrb[0].mxu0
    %1388 = vdwg.mxu0
    %s1389 = smul.u32 5, 3
    %s1390 = smul.addr %s1389, 8
    %s1391 = scalar_lea.vmem [#allocation3], %s1390
    %v1392 = vld [vmem:[%s1391] sm:$0xff]
    %v1393 = vadd.f32 %v1392, %v1315
    %v1394 = vxor.u32 %v1393, 2147483648
    %v1395 = vmul.f32 %v1394, 1.442695
    %v1396 = vpow.pop %v1395
    %v1397 = vadd.f32 %v1396, 1.0
    %v1398 = vrcp.pop %v1397
    %v1399 = vmul.f32 1.0, %v1398
    %v1400 = vld [vmem:[%s1391 + $0x8] sm:$0xff]
    %v1401 = vadd.f32 %v1400, %v1317
    %v1402 = vxor.u32 %v1401, 2147483648
    %v1403 = vmul.f32 %v1402, 1.442695
    %v1404 = vpow.pop %v1403
    %v1405 = vadd.f32 %v1404, 1.0
    %v1406 = vrcp.pop %v1405
    %v1407 = vmul.f32 1.0, %v1406
    %v1408 = vld [vmem:[%s1391 + $0x10] sm:$0xff]
    %v1409 = vadd.f32 %v1386, %v391
    %v1410 = vmul.f32 %v1399, %v1409
    %v1411 = vadd.f32 %v1408, %v1410
    %v1412 = vtanh.pop %v1411
    %v1413 = vsub.f32 1.0, %v1407
    %v1414 = vmul.f32 %v1413, %v1412
    %v1415 = vmul.f32 %v1407, %v1245
    %v1416 = vadd.f32 %v1414, %v1415
    %s1417 = scalar_lea.vmem [#allocation7], 40
    %1418 = vst [vmem:[%s1417] sm:$0xff] %v1416
    %1419 = vmatprep.subr.mxu0 %v339
    %1420 = vmatpush1.msra.mxu0 %v338
    %1421 = vmatprep.subr.mxu0 %v342
    %1422 = vmatpush1.msra.mxu0 %v341
    %1423 = vmatprep.subr.mxu0 %v345
    %1424 = vmatpush1.msra.mxu0 %v344
    %1425 = vmatprep.subr.mxu0 %v348
    %1426 = vmatpush1.msra.mxu0 %v347
    %1427 = vmatprep.subr.mxu0 %v351
    %1428 = vmatpush1.msra.mxu0 %v350
    %1429 = vmatprep.subr.mxu0 %v354
    %1430 = vmatpush1.msra.mxu0 %v353
    %1431 = vmatprep.subr.mxu0 %v357
    %1432 = vmatpush1.msra.mxu0 %v356
    %1433 = vmatprep.subr.mxu0 %v360
    %1434 = vmatpush1.msra.mxu0 %v359
    %1435 = vmatprep.subr.mxu0 %v363
    %1436 = vmatpush1.msra.mxu0 %v362
    %1437 = vmatprep.subr.mxu0 %v366
    %1438 = vmatpush1.msra.mxu0 %v365
    %1439 = vmatprep.subr.mxu0 %v369
    %1440 = vmatpush1.msra.mxu0 %v368
    %1441 = vmatprep.subr.mxu0 %v372
    %1442 = vmatpush1.msra.mxu0 %v371
    %1443 = vmatprep.subr.mxu0 %v375
    %1444 = vmatpush1.msra.mxu0 %v374
    %1445 = vmatprep.subr.mxu0 %v378
    %1446 = vmatpush1.msra.mxu0 %v377
    %1447 = vmatprep.subr.mxu0 %v381
    %1448 = vmatpush1.msra.mxu0 %v380
    %1449 = vmatprep.subr.mxu0 %v384
    %1450 = vmatpush1.msra.mxu0 %v383
    %1451 = vmatprep.subr.mxu0 0.0
    %1452 = vmatpush1.msra.mxu0 0.0
    %1453 = vmatprep.subr.mxu0 0.0
    %1454 = vmatpush1.msra.mxu0 0.0
    %1455 = vmatprep.subr.mxu0 0.0
    %1456 = vmatpush1.msra.mxu0 0.0
    %1457 = vmatprep.subr.mxu0 0.0
    %1458 = vmatpush1.msra.mxu0 0.0
    %1459 = vmatprep.subr.mxu0 0.0
    %1460 = vmatpush1.msra.mxu0 0.0
    %1461 = vmatprep.subr.mxu0 0.0
    %1462 = vmatpush1.msra.mxu0 0.0
    %1463 = vmatprep.subr.mxu0 0.0
    %1464 = vmatpush1.msra.mxu0 0.0
    %1465 = vmatprep.subr.mxu0 0.0
    %1466 = vmatpush1.msra.mxu0 0.0
    %1467 = vmatprep.subr.mxu0 0.0
    %1468 = vmatpush1.msra.mxu0 0.0
    %1469 = vmatprep.subr.mxu0 0.0
    %1470 = vmatpush1.msra.mxu0 0.0
    %1471 = vmatprep.subr.mxu0 0.0
    %1472 = vmatpush1.msra.mxu0 0.0
    %1473 = vmatprep.subr.mxu0 0.0
    %1474 = vmatpush1.msra.mxu0 0.0
    %1475 = vmatprep.subr.mxu0 0.0
    %1476 = vmatpush1.msra.mxu0 0.0
    %1477 = vmatprep.subr.mxu0 0.0
    %1478 = vmatpush1.msra.mxu0 0.0
    %1479 = vmatprep.subr.mxu0 0.0
    %1480 = vmatpush1.msra.mxu0 0.0
    %1481 = vmatprep.subr.mxu0 0.0
    %1482 = vmatpush1.msra.mxu0 0.0
    %1483 = vmatprep.mubr.f32.mxu0 0.0
    %1484 = vmatmul.mubr.f32.gmra.mrb[0].mxu0 %v1416
    %v1485 = vpop.f32.mrb[0].mxu0
    %v1486 = vadd.f32 0.0, %v1485
    %v1487 = vpop.f32.mrb[0].mxu0
    %v1488 = vadd.f32 0.0, %v1487
    %1489 = vdwg.mxu0
    %1490 = vmatprep.subr.mxu0 0.0
    %1491 = vmatpush1.msra.mxu0 %v340
    %1492 = vmatprep.subr.mxu0 0.0
    %1493 = vmatpush1.msra.mxu0 %v343
    %1494 = vmatprep.subr.mxu0 0.0
    %1495 = vmatpush1.msra.mxu0 %v346
    %1496 = vmatprep.subr.mxu0 0.0
    %1497 = vmatpush1.msra.mxu0 %v349
    %1498 = vmatprep.subr.mxu0 0.0
    %1499 = vmatpush1.msra.mxu0 %v352
    %1500 = vmatprep.subr.mxu0 0.0
    %1501 = vmatpush1.msra.mxu0 %v355
    %1502 = vmatprep.subr.mxu0 0.0
    %1503 = vmatpush1.msra.mxu0 %v358
    %1504 = vmatprep.subr.mxu0 0.0
    %1505 = vmatpush1.msra.mxu0 %v361
    %1506 = vmatprep.subr.mxu0 0.0
    %1507 = vmatpush1.msra.mxu0 %v364
    %1508 = vmatprep.subr.mxu0 0.0
    %1509 = vmatpush1.msra.mxu0 %v367
    %1510 = vmatprep.subr.mxu0 0.0
    %1511 = vmatpush1.msra.mxu0 %v370
    %1512 = vmatprep.subr.mxu0 0.0
    %1513 = vmatpush1.msra.mxu0 %v373
    %1514 = vmatprep.subr.mxu0 0.0
    %1515 = vmatpush1.msra.mxu0 %v376
    %1516 = vmatprep.subr.mxu0 0.0
    %1517 = vmatpush1.msra.mxu0 %v379
    %1518 = vmatprep.subr.mxu0 0.0
    %1519 = vmatpush1.msra.mxu0 %v382
    %1520 = vmatprep.subr.mxu0 0.0
    %1521 = vmatpush1.msra.mxu0 %v385
    %1522 = vmatprep.subr.mxu0 0.0
    %1523 = vmatpush1.msra.mxu0 0.0
    %1524 = vmatprep.subr.mxu0 0.0
    %1525 = vmatpush1.msra.mxu0 0.0
    %1526 = vmatprep.subr.mxu0 0.0
    %1527 = vmatpush1.msra.mxu0 0.0
    %1528 = vmatprep.subr.mxu0 0.0
    %1529 = vmatpush1.msra.mxu0 0.0
    %1530 = vmatprep.subr.mxu0 0.0
    %1531 = vmatpush1.msra.mxu0 0.0
    %1532 = vmatprep.subr.mxu0 0.0
    %1533 = vmatpush1.msra.mxu0 0.0
    %1534 = vmatprep.subr.mxu0 0.0
    %1535 = vmatpush1.msra.mxu0 0.0
    %1536 = vmatprep.subr.mxu0 0.0
    %1537 = vmatpush1.msra.mxu0 0.0
    %1538 = vmatprep.subr.mxu0 0.0
    %1539 = vmatpush1.msra.mxu0 0.0
    %1540 = vmatprep.subr.mxu0 0.0
    %1541 = vmatpush1.msra.mxu0 0.0
    %1542 = vmatprep.subr.mxu0 0.0
    %1543 = vmatpush1.msra.mxu0 0.0
    %1544 = vmatprep.subr.mxu0 0.0
    %1545 = vmatpush1.msra.mxu0 0.0
    %1546 = vmatprep.subr.mxu0 0.0
    %1547 = vmatpush1.msra.mxu0 0.0
    %1548 = vmatprep.subr.mxu0 0.0
    %1549 = vmatpush1.msra.mxu0 0.0
    %1550 = vmatprep.subr.mxu0 0.0
    %1551 = vmatpush1.msra.mxu0 0.0
    %1552 = vmatprep.subr.mxu0 0.0
    %1553 = vmatpush1.msra.mxu0 0.0
    %1554 = vmatprep.mubr.f32.mxu0 0.0
    %1555 = vmatmul.mubr.f32.gmra.mrb[0].mxu0 %v1416
    %v1556 = vpop.f32.mrb[0].mxu0
    %v1557 = vadd.f32 0.0, %v1556
    %v1558 = vpop.f32.mrb[0].mxu0
    %1559 = vdwg.mxu0
    %s1560 = smul.u32 6, 3
    %s1561 = smul.addr %s1560, 8
    %s1562 = scalar_lea.vmem [#allocation3], %s1561
    %v1563 = vld [vmem:[%s1562] sm:$0xff]
    %v1564 = vadd.f32 %v1563, %v1486
    %v1565 = vxor.u32 %v1564, 2147483648
    %v1566 = vmul.f32 %v1565, 1.442695
    %v1567 = vpow.pop %v1566
    %v1568 = vadd.f32 %v1567, 1.0
    %v1569 = vrcp.pop %v1568
    %v1570 = vmul.f32 1.0, %v1569
    %v1571 = vld [vmem:[%s1562 + $0x8] sm:$0xff]
    %v1572 = vadd.f32 %v1571, %v1488
    %v1573 = vxor.u32 %v1572, 2147483648
    %v1574 = vmul.f32 %v1573, 1.442695
    %v1575 = vpow.pop %v1574
    %v1576 = vadd.f32 %v1575, 1.0
    %v1577 = vrcp.pop %v1576
    %v1578 = vmul.f32 1.0, %v1577
    %v1579 = vld [vmem:[%s1562 + $0x10] sm:$0xff]
    %v1580 = vadd.f32 %v1557, %v391
    %v1581 = vmul.f32 %v1570, %v1580
    %v1582 = vadd.f32 %v1579, %v1581
    %v1583 = vtanh.pop %v1582
    %v1584 = vsub.f32 1.0, %v1578
    %v1585 = vmul.f32 %v1584, %v1583
    %v1586 = vmul.f32 %v1578, %v1416
    %v1587 = vadd.f32 %v1585, %v1586
    %s1588 = scalar_lea.vmem [#allocation7], 48
    %1589 = vst [vmem:[%s1588] sm:$0xff] %v1587
    %1590 = vmatprep.subr.mxu0 %v339
    %1591 = vmatpush1.msra.mxu0 %v338
    %1592 = vmatprep.subr.mxu0 %v342
    %1593 = vmatpush1.msra.mxu0 %v341
    %1594 = vmatprep.subr.mxu0 %v345
    %1595 = vmatpush1.msra.mxu0 %v344
    %1596 = vmatprep.subr.mxu0 %v348
    %1597 = vmatpush1.msra.mxu0 %v347
    %1598 = vmatprep.subr.mxu0 %v351
    %1599 = vmatpush1.msra.mxu0 %v350
    %1600 = vmatprep.subr.mxu0 %v354
    %1601 = vmatpush1.msra.mxu0 %v353
    %1602 = vmatprep.subr.mxu0 %v357
    %1603 = vmatpush1.msra.mxu0 %v356
    %1604 = vmatprep.subr.mxu0 %v360
    %1605 = vmatpush1.msra.mxu0 %v359
    %1606 = vmatprep.subr.mxu0 %v363
    %1607 = vmatpush1.msra.mxu0 %v362
    %1608 = vmatprep.subr.mxu0 %v366
    %1609 = vmatpush1.msra.mxu0 %v365
    %1610 = vmatprep.subr.mxu0 %v369
    %1611 = vmatpush1.msra.mxu0 %v368
    %1612 = vmatprep.subr.mxu0 %v372
    %1613 = vmatpush1.msra.mxu0 %v371
    %1614 = vmatprep.subr.mxu0 %v375
    %1615 = vmatpush1.msra.mxu0 %v374
    %1616 = vmatprep.subr.mxu0 %v378
    %1617 = vmatpush1.msra.mxu0 %v377
    %1618 = vmatprep.subr.mxu0 %v381
    %1619 = vmatpush1.msra.mxu0 %v380
    %1620 = vmatprep.subr.mxu0 %v384
    %1621 = vmatpush1.msra.mxu0 %v383
    %1622 = vmatprep.subr.mxu0 0.0
    %1623 = vmatpush1.msra.mxu0 0.0
    %1624 = vmatprep.subr.mxu0 0.0
    %1625 = vmatpush1.msra.mxu0 0.0
    %1626 = vmatprep.subr.mxu0 0.0
    %1627 = vmatpush1.msra.mxu0 0.0
    %1628 = vmatprep.subr.mxu0 0.0
    %1629 = vmatpush1.msra.mxu0 0.0
    %1630 = vmatprep.subr.mxu0 0.0
    %1631 = vmatpush1.msra.mxu0 0.0
    %1632 = vmatprep.subr.mxu0 0.0
    %1633 = vmatpush1.msra.mxu0 0.0
    %1634 = vmatprep.subr.mxu0 0.0
    %1635 = vmatpush1.msra.mxu0 0.0
    %1636 = vmatprep.subr.mxu0 0.0
    %1637 = vmatpush1.msra.mxu0 0.0
    %1638 = vmatprep.subr.mxu0 0.0
    %1639 = vmatpush1.msra.mxu0 0.0
    %1640 = vmatprep.subr.mxu0 0.0
    %1641 = vmatpush1.msra.mxu0 0.0
    %1642 = vmatprep.subr.mxu0 0.0
    %1643 = vmatpush1.msra.mxu0 0.0
    %1644 = vmatprep.subr.mxu0 0.0
    %1645 = vmatpush1.msra.mxu0 0.0
    %1646 = vmatprep.subr.mxu0 0.0
    %1647 = vmatpush1.msra.mxu0 0.0
    %1648 = vmatprep.subr.mxu0 0.0
    %1649 = vmatpush1.msra.mxu0 0.0
    %1650 = vmatprep.subr.mxu0 0.0
    %1651 = vmatpush1.msra.mxu0 0.0
    %1652 = vmatprep.subr.mxu0 0.0
    %1653 = vmatpush1.msra.mxu0 0.0
    %1654 = vmatprep.mubr.f32.mxu0 0.0
    %1655 = vmatmul.mubr.f32.gmra.mrb[0].mxu0 %v1587
    %v1656 = vpop.f32.mrb[0].mxu0
    %v1657 = vadd.f32 0.0, %v1656
    %v1658 = vpop.f32.mrb[0].mxu0
    %v1659 = vadd.f32 0.0, %v1658
    %1660 = vdwg.mxu0
    %1661 = vmatprep.subr.mxu0 0.0
    %1662 = vmatpush1.msra.mxu0 %v340
    %1663 = vmatprep.subr.mxu0 0.0
    %1664 = vmatpush1.msra.mxu0 %v343
    %1665 = vmatprep.subr.mxu0 0.0
    %1666 = vmatpush1.msra.mxu0 %v346
    %1667 = vmatprep.subr.mxu0 0.0
    %1668 = vmatpush1.msra.mxu0 %v349
    %1669 = vmatprep.subr.mxu0 0.0
    %1670 = vmatpush1.msra.mxu0 %v352
    %1671 = vmatprep.subr.mxu0 0.0
    %1672 = vmatpush1.msra.mxu0 %v355
    %1673 = vmatprep.subr.mxu0 0.0
    %1674 = vmatpush1.msra.mxu0 %v358
    %1675 = vmatprep.subr.mxu0 0.0
    %1676 = vmatpush1.msra.mxu0 %v361
    %1677 = vmatprep.subr.mxu0 0.0
    %1678 = vmatpush1.msra.mxu0 %v364
    %1679 = vmatprep.subr.mxu0 0.0
    %1680 = vmatpush1.msra.mxu0 %v367
    %1681 = vmatprep.subr.mxu0 0.0
    %1682 = vmatpush1.msra.mxu0 %v370
    %1683 = vmatprep.subr.mxu0 0.0
    %1684 = vmatpush1.msra.mxu0 %v373
    %1685 = vmatprep.subr.mxu0 0.0
    %1686 = vmatpush1.msra.mxu0 %v376
    %1687 = vmatprep.subr.mxu0 0.0
    %1688 = vmatpush1.msra.mxu0 %v379
    %1689 = vmatprep.subr.mxu0 0.0
    %1690 = vmatpush1.msra.mxu0 %v382
    %1691 = vmatprep.subr.mxu0 0.0
    %1692 = vmatpush1.msra.mxu0 %v385
    %1693 = vmatprep.subr.mxu0 0.0
    %1694 = vmatpush1.msra.mxu0 0.0
    %1695 = vmatprep.subr.mxu0 0.0
    %1696 = vmatpush1.msra.mxu0 0.0
    %1697 = vmatprep.subr.mxu0 0.0
    %1698 = vmatpush1.msra.mxu0 0.0
    %1699 = vmatprep.subr.mxu0 0.0
    %1700 = vmatpush1.msra.mxu0 0.0
    %1701 = vmatprep.subr.mxu0 0.0
    %1702 = vmatpush1.msra.mxu0 0.0
    %1703 = vmatprep.subr.mxu0 0.0
    %1704 = vmatpush1.msra.mxu0 0.0
    %1705 = vmatprep.subr.mxu0 0.0
    %1706 = vmatpush1.msra.mxu0 0.0
    %1707 = vmatprep.subr.mxu0 0.0
    %1708 = vmatpush1.msra.mxu0 0.0
    %1709 = vmatprep.subr.mxu0 0.0
    %1710 = vmatpush1.msra.mxu0 0.0
    %1711 = vmatprep.subr.mxu0 0.0
    %1712 = vmatpush1.msra.mxu0 0.0
    %1713 = vmatprep.subr.mxu0 0.0
    %1714 = vmatpush1.msra.mxu0 0.0
    %1715 = vmatprep.subr.mxu0 0.0
    %1716 = vmatpush1.msra.mxu0 0.0
    %1717 = vmatprep.subr.mxu0 0.0
    %1718 = vmatpush1.msra.mxu0 0.0
    %1719 = vmatprep.subr.mxu0 0.0
    %1720 = vmatpush1.msra.mxu0 0.0
    %1721 = vmatprep.subr.mxu0 0.0
    %1722 = vmatpush1.msra.mxu0 0.0
    %1723 = vmatprep.subr.mxu0 0.0
    %1724 = vmatpush1.msra.mxu0 0.0
    %1725 = vmatprep.mubr.f32.mxu0 0.0
    %1726 = vmatmul.mubr.f32.gmra.mrb[0].mxu0 %v1587
    %v1727 = vpop.f32.mrb[0].mxu0
    %v1728 = vadd.f32 0.0, %v1727
    %v1729 = vpop.f32.mrb[0].mxu0
    %1730 = vdwg.mxu0
    %s1731 = smul.u32 7, 3
    %s1732 = smul.addr %s1731, 8
    %s1733 = scalar_lea.vmem [#allocation3], %s1732
    %v1734 = vld [vmem:[%s1733] sm:$0xff]
    %v1735 = vadd.f32 %v1734, %v1657
    %v1736 = vxor.u32 %v1735, 2147483648
    %v1737 = vmul.f32 %v1736, 1.442695
    %v1738 = vpow.pop %v1737
    %v1739 = vadd.f32 %v1738, 1.0
    %v1740 = vrcp.pop %v1739
    %v1741 = vmul.f32 1.0, %v1740
    %v1742 = vld [vmem:[%s1733 + $0x8] sm:$0xff]
    %v1743 = vadd.f32 %v1742, %v1659
    %v1744 = vxor.u32 %v1743, 2147483648
    %v1745 = vmul.f32 %v1744, 1.442695
    %v1746 = vpow.pop %v1745
    %v1747 = vadd.f32 %v1746, 1.0
    %v1748 = vrcp.pop %v1747
    %v1749 = vmul.f32 1.0, %v1748
    %v1750 = vld [vmem:[%s1733 + $0x10] sm:$0xff]
    %v1751 = vadd.f32 %v1728, %v391
    %v1752 = vmul.f32 %v1741, %v1751
    %v1753 = vadd.f32 %v1750, %v1752
    %v1754 = vtanh.pop %v1753
    %v1755 = vsub.f32 1.0, %v1749
    %v1756 = vmul.f32 %v1755, %v1754
    %v1757 = vmul.f32 %v1749, %v1587
    %v1758 = vadd.f32 %v1756, %v1757
    %s1759 = scalar_lea.vmem [#allocation7], 56
    %1760 = vst [vmem:[%s1759] sm:$0xff] %v1758
    %1761 = vst [vmem:[#allocation2] sm:$0xff] %v1758
    // Predicated region
    $region30: #{tpu_custom_call.1} parent=1 // pred_check
      _
    $region31: #{tpu_custom_call.1} parent=1 // pred_check_branch
      %1763 = sbr.rel (0) target = $region33
    $region32: #{tpu_custom_call.1} parent=1 // pred_region
      %s1765 = ssub.s32 1024, 1024
      %1766 = vsyncadd [#allocation6], %s1765
      %s1767 = sshll.u32 [#allocation7], 4
      %s1768 = int_to_ptr.vmem [resolvable:$true] %s1767
      %1773 = dma.vmem_to_hbm [thread:$0]  %s1768, 1024, %s5, [#allocation6], 128, 128, 8
    $region33: #{tpu_custom_call.1} parent=1 // pred_fallthru
      _
    // Predicated region
    $region34: #{tpu_custom_call.1} parent=1 // pred_check
      _
    $region35: #{tpu_custom_call.1} parent=1 // pred_check_branch
      %1775 = sbr.rel (0) target = $region37
    $region36: #{tpu_custom_call.1} parent=1 // pred_region
      %1776 = dma.done [#allocation6], 1024
    $region37: #{tpu_custom_call.1} parent=1 // pred_fallthru
      _
    %1777 = vsyncpa [#allocation5], 1
    %1778 = vsyncpa [#allocation6], 1

// kernel: tpu_custom_call.1
$region0: #{tpu_custom_call.1}
  #allocation0 [shape = 'u32[]', space=smem, size = 0x4, offset = 0x4, fixed_abs, tag = 'smem constant byte address 0x4 - core index']
  #allocation1 [shape = 'u32[144,128]{1,0:T(1,128)}', space=vmem, size = 0x12000, scoped, tag = 'internal scratch']
  #allocation2 [shape = 'f32[8,128]{1,0:T(8,128)}', space=vmem, size = 0x1000, scoped, tag = 'scratch operand']
  #allocation3 [shape = 'f32[64,384]{1,0:T(8,128)}', space=vmem, size = 0x18000, scoped, tag = 'scratch operand']
  %s0 = inlined_call_operand.vmem [shape: f32[64,16], index: 0, kind: input, shape index: {}]
  %s1 = inlined_call_operand.vmem [shape: f32[16,384], index: 1, kind: input, shape index: {}]
  %s2 = inlined_call_operand.hbm [shape: f32[128,384], index: 2, kind: input, shape index: {}]
  %s3 = inlined_call_operand.vmem [shape: f32[1,384], index: 3, kind: input, shape index: {}]
  %s4 = inlined_call_operand.vmem [shape: f32[1,128], index: 4, kind: input, shape index: {}]
  %s5 = inlined_call_operand.hbm [shape: f32[64,128], index: 5, kind: output, shape index: {}]
  %s6 = sld [smem:[#allocation0]]
  $region38: #{tpu_custom_call.1} parent=0
    _
  %s8 = ssub.s32 1, %s6
  %s9 = scalar_select 0, %s8, %s6
  $region1: #{tpu_custom_call.1} parent=0
    #allocation4 [shape = 'u8[196608]{0}', space=vmem, size = 0x30000, scoped, tag = 'input window, operand 2, single buffered']
    #allocation5 [shape = 's32[1]{0}', space=sflag, size = 0x4, scoped, tag = 'scoped memory for tpu_custom_call.1']
    #allocation6 [shape = 's32[1]{0}', space=sflag, size = 0x4, scoped, tag = 'scoped memory for tpu_custom_call.1']
    #allocation7 [shape = 'u8[32768]{0}', space=vmem, size = 0x8000, scoped, tag = 'output window, operand 0, single buffered']
    %10 = vsyncpa [#allocation5], 0
    %11 = vsyncpa [#allocation6], 0
    // Predicated region
    $region2: #{tpu_custom_call.1} parent=1 // pred_check
      _
    $region3: #{tpu_custom_call.1} parent=1 // pred_check_branch
      %13 = sbr.rel (0) target = $region5
    $region4: #{tpu_custom_call.1} parent=1 // pred_region
      _
    $region5: #{tpu_custom_call.1} parent=1 // pred_fallthru
      _
    // Predicated region
    $region6: #{tpu_custom_call.1} parent=1 // pred_check
      _
    $region7: #{tpu_custom_call.1} parent=1 // pred_check_branch
      %15 = sbr.rel (0) target = $region9
    $region8: #{tpu_custom_call.1} parent=1 // pred_region
      _
    $region9: #{tpu_custom_call.1} parent=1 // pred_fallthru
      _
    // Predicated region
    $region10: #{tpu_custom_call.1} parent=1 // pred_check
      _
    $region11: #{tpu_custom_call.1} parent=1 // pred_check_branch
      %17 = sbr.rel (0) target = $region13
    $region12: #{tpu_custom_call.1} parent=1 // pred_region
      %s19 = ssub.s32 6144, 6144
      %20 = vsyncadd [#allocation5], %s19
      %s21 = sshll.u32 [#allocation4], 4
      %s22 = int_to_ptr.vmem [resolvable:$true] %s21
      %27 = dma.hbm_to_vmem [thread:$0]  %s2, 6144, %s22, [#allocation5], 384, 384, 24
    $region13: #{tpu_custom_call.1} parent=1 // pred_fallthru
      _
    // Predicated region
    $region14: #{tpu_custom_call.1} parent=1 // pred_check
      _
    $region15: #{tpu_custom_call.1} parent=1 // pred_check_branch
      %29 = sbr.rel (0) target = $region17
    $region16: #{tpu_custom_call.1} parent=1 // pred_region
      _
    $region17: #{tpu_custom_call.1} parent=1 // pred_fallthru
      _
    // Predicated region
    $region18: #{tpu_custom_call.1} parent=1 // pred_check
      _
    $region19: #{tpu_custom_call.1} parent=1 // pred_check_branch
      %31 = sbr.rel (0) target = $region21
    $region20: #{tpu_custom_call.1} parent=1 // pred_region
      _
    $region21: #{tpu_custom_call.1} parent=1 // pred_fallthru
      _
    // Predicated region
    $region22: #{tpu_custom_call.1} parent=1 // pred_check
      _
    $region23: #{tpu_custom_call.1} parent=1 // pred_check_branch
      %33 = sbr.rel (0) target = $region25
    $region24: #{tpu_custom_call.1} parent=1 // pred_region
      %34 = dma.done [#allocation5], 6144
    $region25: #{tpu_custom_call.1} parent=1 // pred_fallthru
      _
    %p35 = scmp.eq.s32.totalorder 0, 0
    // Predicated region
    $region26: #{tpu_custom_call.1} parent=1 // pred_check
      %p36 = pneg %p35
    $region27: #{tpu_custom_call.1} parent=1 // pred_check_branch
      %38 = sbr.rel (%p36) target = $region29
    $region28: #{tpu_custom_call.1} parent=1 // pred_region
      %39 = vst [vmem:[#allocation2] sm:$0xff] 0.0
    $region29: #{tpu_custom_call.1} parent=1 // pred_fallthru
      _
    %v40 = vld [vmem:[%s0] sm:$0xff]
    %v41 = vld [vmem:[%s0 + $0x8] sm:$0xff]
    %v42 = vld [vmem:[%s0 + $0x10] sm:$0xff]
    %v43 = vld [vmem:[%s0 + $0x18] sm:$0xff]
    %v44 = vld [vmem:[%s0 + $0x20] sm:$0xff]
    %v45 = vld [vmem:[%s0 + $0x28] sm:$0xff]
    %v46 = vld [vmem:[%s0 + $0x30] sm:$0xff]
    %v47 = vld [vmem:[%s0 + $0x38] sm:$0xff]
    %v48 = vld [vmem:[%s1] sm:$0xff]
    %v49 = vld [vmem:[%s1 + $0x8] sm:$0xff]
    %v50 = vld [vmem:[%s1 + $0x10] sm:$0xff]
    %v51 = vld [vmem:[%s1 + $0x18] sm:$0xff]
    %v52 = vld [vmem:[%s1 + $0x20] sm:$0xff]
    %v53 = vld [vmem:[%s1 + $0x28] sm:$0xff]
    %v54 = vld [vmem:[%s3] sm:$0x7]
    %v56 = vlaneseq
    %v57 = vshrl.u32 %v56, 7
    %v58 = vsub.s32 0, %v57
    %v59 = vrot.slane %v54, %v58
    %v60 = vlaneseq
    %v61 = vshrl.u32 %v60, 7
    %v62 = vsub.s32 1, %v61
    %v63 = vrot.slane %v54, %v62
    %v64 = vlaneseq
    %v65 = vshrl.u32 %v64, 7
    %v66 = vsub.s32 2, %v65
    %v67 = vrot.slane %v54, %v66
    %vm71 = vcmask 130048
    %v73 = vsel %vm71, %v40, 0
    %v76 = vsel %vm71, %v41, 0
    %v79 = vsel %vm71, %v42, 0
    %v82 = vsel %vm71, %v43, 0
    %v85 = vsel %vm71, %v44, 0
    %v88 = vsel %vm71, %v45, 0
    %v91 = vsel %vm71, %v46, 0
    %v94 = vsel %vm71, %v47, 0
    %96 = vmatprep.subr.mxu0 %v49
    %97 = vmatpush1.msra.mxu0 %v48
    %98 = vmatprep.subr.mxu0 %v52
    %99 = vmatpush1.msra.mxu0 %v51
    %100 = vmatprep.subr.mxu0 0.0
    %101 = vmatpush1.msra.mxu0 0.0
    %102 = vmatprep.subr.mxu0 0.0
    %103 = vmatpush1.msra.mxu0 0.0
    %104 = vmatprep.subr.mxu0 0.0
    %105 = vmatpush1.msra.mxu0 0.0
    %106 = vmatprep.subr.mxu0 0.0
    %107 = vmatpush1.msra.mxu0 0.0
    %108 = vmatprep.subr.mxu0 0.0
    %109 = vmatpush1.msra.mxu0 0.0
    %110 = vmatprep.subr.mxu0 0.0
    %111 = vmatpush1.msra.mxu0 0.0
    %112 = vmatprep.subr.mxu0 0.0
    %113 = vmatpush1.msra.mxu0 0.0
    %114 = vmatprep.subr.mxu0 0.0
    %115 = vmatpush1.msra.mxu0 0.0
    %116 = vmatprep.subr.mxu0 0.0
    %117 = vmatpush1.msra.mxu0 0.0
    %118 = vmatprep.subr.mxu0 0.0
    %119 = vmatpush1.msra.mxu0 0.0
    %120 = vmatprep.subr.mxu0 0.0
    %121 = vmatpush1.msra.mxu0 0.0
    %122 = vmatprep.subr.mxu0 0.0
    %123 = vmatpush1.msra.mxu0 0.0
    %124 = vmatprep.subr.mxu0 0.0
    %125 = vmatpush1.msra.mxu0 0.0
    %126 = vmatprep.subr.mxu0 0.0
    %127 = vmatpush1.msra.mxu0 0.0
    %128 = vmatprep.subr.mxu0 0.0
    %129 = vmatpush1.msra.mxu0 0.0
    %130 = vmatprep.subr.mxu0 0.0
    %131 = vmatpush1.msra.mxu0 0.0
    %132 = vmatprep.subr.mxu0 0.0
    %133 = vmatpush1.msra.mxu0 0.0
    %134 = vmatprep.subr.mxu0 0.0
    %135 = vmatpush1.msra.mxu0 0.0
    %136 = vmatprep.subr.mxu0 0.0
    %137 = vmatpush1.msra.mxu0 0.0
    %138 = vmatprep.subr.mxu0 0.0
    %139 = vmatpush1.msra.mxu0 0.0
    %140 = vmatprep.subr.mxu0 0.0
    %141 = vmatpush1.msra.mxu0 0.0
    %142 = vmatprep.subr.mxu0 0.0
    %143 = vmatpush1.msra.mxu0 0.0
    %144 = vmatprep.subr.mxu0 0.0
    %145 = vmatpush1.msra.mxu0 0.0
    %146 = vmatprep.subr.mxu0 0.0
    %147 = vmatpush1.msra.mxu0 0.0
    %148 = vmatprep.subr.mxu0 0.0
    %149 = vmatpush1.msra.mxu0 0.0
    %150 = vmatprep.subr.mxu0 0.0
    %151 = vmatpush1.msra.mxu0 0.0
    %152 = vmatprep.subr.mxu0 0.0
    %153 = vmatpush1.msra.mxu0 0.0
    %154 = vmatprep.subr.mxu0 0.0
    %155 = vmatpush1.msra.mxu0 0.0
    %156 = vmatprep.subr.mxu0 0.0
    %157 = vmatpush1.msra.mxu0 0.0
    %158 = vmatprep.subr.mxu0 0.0
    %159 = vmatpush1.msra.mxu0 0.0
    %160 = vmatprep.mubr.f32.mxu0 0.0
    %161 = vmatmul.mubr.f32.gmra.mrb[0].mxu0 %v73
    %v162 = vpop.f32.mrb[0].mxu0
    %v163 = vadd.f32 %v59, %v162
    %v164 = vpop.f32.mrb[0].mxu0
    %v165 = vadd.f32 %v63, %v164
    %166 = vmatprep.mubr.f32.mxu0 0.0
    %167 = vmatmul.mubr.f32.gmra.mrb[0].mxu0 %v76
    %v168 = vpop.f32.mrb[0].mxu0
    %v169 = vadd.f32 %v59, %v168
    %v170 = vpop.f32.mrb[0].mxu0
    %v171 = vadd.f32 %v63, %v170
    %172 = vmatprep.mubr.f32.mxu0 0.0
    %173 = vmatmul.mubr.f32.gmra.mrb[0].mxu0 %v79
    %v174 = vpop.f32.mrb[0].mxu0
    %v175 = vadd.f32 %v59, %v174
    %v176 = vpop.f32.mrb[0].mxu0
    %v177 = vadd.f32 %v63, %v176
    %178 = vmatprep.mubr.f32.mxu0 0.0
    %179 = vmatmul.mubr.f32.gmra.mrb[0].mxu0 %v82
    %v180 = vpop.f32.mrb[0].mxu0
    %v181 = vadd.f32 %v59, %v180
    %v182 = vpop.f32.mrb[0].mxu0
    %v183 = vadd.f32 %v63, %v182
    %184 = vmatprep.mubr.f32.mxu0 0.0
    %185 = vmatmul.mubr.f32.gmra.mrb[0].mxu0 %v85
    %v186 = vpop.f32.mrb[0].mxu0
    %v187 = vadd.f32 %v59, %v186
    %v188 = vpop.f32.mrb[0].mxu0
    %v189 = vadd.f32 %v63, %v188
    %190 = vmatprep.mubr.f32.mxu0 0.0
    %191 = vmatmul.mubr.f32.gmra.mrb[0].mxu0 %v88
    %v192 = vpop.f32.mrb[0].mxu0
    %v193 = vadd.f32 %v59, %v192
    %v194 = vpop.f32.mrb[0].mxu0
    %v195 = vadd.f32 %v63, %v194
    %196 = vmatprep.mubr.f32.mxu0 0.0
    %197 = vmatmul.mubr.f32.gmra.mrb[0].mxu0 %v91
    %v198 = vpop.f32.mrb[0].mxu0
    %v199 = vadd.f32 %v59, %v198
    %v200 = vpop.f32.mrb[0].mxu0
    %v201 = vadd.f32 %v63, %v200
    %202 = vmatprep.mubr.f32.mxu0 0.0
    %203 = vmatmul.mubr.f32.gmra.mrb[0].mxu0 %v94
    %v204 = vpop.f32.mrb[0].mxu0
    %v205 = vadd.f32 %v59, %v204
    %v206 = vpop.f32.mrb[0].mxu0
    %v207 = vadd.f32 %v63, %v206
    %208 = vdwg.mxu0
    %209 = vmatprep.subr.mxu0 0.0
    %210 = vmatpush1.msra.mxu0 %v50
    %211 = vmatprep.subr.mxu0 0.0
    %212 = vmatpush1.msra.mxu0 %v53
    %213 = vmatprep.subr.mxu0 0.0
    %214 = vmatpush1.msra.mxu0 0.0
    %215 = vmatprep.subr.mxu0 0.0
    %216 = vmatpush1.msra.mxu0 0.0
    %217 = vmatprep.subr.mxu0 0.0
    %218 = vmatpush1.msra.mxu0 0.0
    %219 = vmatprep.subr.mxu0 0.0
    %220 = vmatpush1.msra.mxu0 0.0
    %221 = vmatprep.subr.mxu0 0.0
    %222 = vmatpush1.msra.mxu0 0.0
    %223 = vmatprep.subr.mxu0 0.0
    %224 = vmatpush1.msra.mxu0 0.0
    %225 = vmatprep.subr.mxu0 0.0
    %226 = vmatpush1.msra.mxu0 0.0
    %227 = vmatprep.subr.mxu0 0.0
    %228 = vmatpush1.msra.mxu0 0.0
    %229 = vmatprep.subr.mxu0 0.0
    %230 = vmatpush1.msra.mxu0 0.0
    %231 = vmatprep.subr.mxu0 0.0
    %232 = vmatpush1.msra.mxu0 0.0
    %233 = vmatprep.subr.mxu0 0.0
    %234 = vmatpush1.msra.mxu0 0.0
    %235 = vmatprep.subr.mxu0 0.0
    %236 = vmatpush1.msra.mxu0 0.0
    %237 = vmatprep.subr.mxu0 0.0
    %238 = vmatpush1.msra.mxu0 0.0
    %239 = vmatprep.subr.mxu0 0.0
    %240 = vmatpush1.msra.mxu0 0.0
    %241 = vmatprep.subr.mxu0 0.0
    %242 = vmatpush1.msra.mxu0 0.0
    %243 = vmatprep.subr.mxu0 0.0
    %244 = vmatpush1.msra.mxu0 0.0
    %245 = vmatprep.subr.mxu0 0.0
    %246 = vmatpush1.msra.mxu0 0.0
    %247 = vmatprep.subr.mxu0 0.0
    %248 = vmatpush1.msra.mxu0 0.0
    %249 = vmatprep.subr.mxu0 0.0
    %250 = vmatpush1.msra.mxu0 0.0
    %251 = vmatprep.subr.mxu0 0.0
    %252 = vmatpush1.msra.mxu0 0.0
    %253 = vmatprep.subr.mxu0 0.0
    %254 = vmatpush1.msra.mxu0 0.0
    %255 = vmatprep.subr.mxu0 0.0
    %256 = vmatpush1.msra.mxu0 0.0
    %257 = vmatprep.subr.mxu0 0.0
    %258 = vmatpush1.msra.mxu0 0.0
    %259 = vmatprep.subr.mxu0 0.0
    %260 = vmatpush1.msra.mxu0 0.0
    %261 = vmatprep.subr.mxu0 0.0
    %262 = vmatpush1.msra.mxu0 0.0
    %263 = vmatprep.subr.mxu0 0.0
    %264 = vmatpush1.msra.mxu0 0.0
    %265 = vmatprep.subr.mxu0 0.0
    %266 = vmatpush1.msra.mxu0 0.0
    %267 = vmatprep.subr.mxu0 0.0
    %268 = vmatpush1.msra.mxu0 0.0
    %269 = vmatprep.subr.mxu0 0.0
    %270 = vmatpush1.msra.mxu0 0.0
    %271 = vmatprep.subr.mxu0 0.0
    %272 = vmatpush1.msra.mxu0 0.0
    %273 = vmatprep.mubr.f32.mxu0 0.0
    %274 = vmatmul.mubr.f32.gmra.mrb[0].mxu0 %v73
    %v275 = vpop.f32.mrb[0].mxu0
    %v276 = vadd.f32 %v67, %v275
    %v277 = vpop.f32.mrb[0].mxu0
    %278 = vmatprep.mubr.f32.mxu0 0.0
    %279 = vmatmul.mubr.f32.gmra.mrb[0].mxu0 %v76
    %v280 = vpop.f32.mrb[0].mxu0
    %v281 = vadd.f32 %v67, %v280
    %v282 = vpop.f32.mrb[0].mxu0
    %283 = vmatprep.mubr.f32.mxu0 0.0
    %284 = vmatmul.mubr.f32.gmra.mrb[0].mxu0 %v79
    %v285 = vpop.f32.mrb[0].mxu0
    %v286 = vadd.f32 %v67, %v285
    %v287 = vpop.f32.mrb[0].mxu0
    %288 = vmatprep.mubr.f32.mxu0 0.0
    %289 = vmatmul.mubr.f32.gmra.mrb[0].mxu0 %v82
    %v290 = vpop.f32.mrb[0].mxu0
    %v291 = vadd.f32 %v67, %v290
    %v292 = vpop.f32.mrb[0].mxu0
    %293 = vmatprep.mubr.f32.mxu0 0.0
    %294 = vmatmul.mubr.f32.gmra.mrb[0].mxu0 %v85
    %v295 = vpop.f32.mrb[0].mxu0
    %v296 = vadd.f32 %v67, %v295
    %v297 = vpop.f32.mrb[0].mxu0
    %298 = vmatprep.mubr.f32.mxu0 0.0
    %299 = vmatmul.mubr.f32.gmra.mrb[0].mxu0 %v88
    %v300 = vpop.f32.mrb[0].mxu0
    %v301 = vadd.f32 %v67, %v300
    %v302 = vpop.f32.mrb[0].mxu0
    %303 = vmatprep.mubr.f32.mxu0 0.0
    %304 = vmatmul.mubr.f32.gmra.mrb[0].mxu0 %v91
    %v305 = vpop.f32.mrb[0].mxu0
    %v306 = vadd.f32 %v67, %v305
    %v307 = vpop.f32.mrb[0].mxu0
    %308 = vmatprep.mubr.f32.mxu0 0.0
    %309 = vmatmul.mubr.f32.gmra.mrb[0].mxu0 %v94
    %v310 = vpop.f32.mrb[0].mxu0
    %v311 = vadd.f32 %v67, %v310
    %v312 = vpop.f32.mrb[0].mxu0
    %313 = vdwg.mxu0
    %314 = vst [vmem:[#allocation3] sm:$0xff] %v163
    %315 = vst [vmem:[#allocation3 + $0x8] sm:$0xff] %v165
    %316 = vst [vmem:[#allocation3 + $0x10] sm:$0xff] %v276
    %317 = vst [vmem:[#allocation3 + $0x18] sm:$0xff] %v169
    %318 = vst [vmem:[#allocation3 + $0x20] sm:$0xff] %v171
    %319 = vst [vmem:[#allocation3 + $0x28] sm:$0xff] %v281
    %320 = vst [vmem:[#allocation3 + $0x30] sm:$0xff] %v175
    %321 = vst [vmem:[#allocation3 + $0x38] sm:$0xff] %v177
    %322 = vst [vmem:[#allocation3 + $0x40] sm:$0xff] %v286
    %323 = vst [vmem:[#allocation3 + $0x48] sm:$0xff] %v181
    %324 = vst [vmem:[#allocation3 + $0x50] sm:$0xff] %v183
    %325 = vst [vmem:[#allocation3 + $0x58] sm:$0xff] %v291
    %326 = vst [vmem:[#allocation3 + $0x60] sm:$0xff] %v187
    %327 = vst [vmem:[#allocation3 + $0x68] sm:$0xff] %v189
    %328 = vst [vmem:[#allocation3 + $0x70] sm:$0xff] %v296
    %329 = vst [vmem:[#allocation3 + $0x78] sm:$0xff] %v193
    %330 = vst [vmem:[#allocation3 + $0x80] sm:$0xff] %v195
    %331 = vst [vmem:[#allocation3 + $0x88] sm:$0xff] %v301
    %332 = vst [vmem:[#allocation3 + $0x90] sm:$0xff] %v199
    %333 = vst [vmem:[#allocation3 + $0x98] sm:$0xff] %v201
    %334 = vst [vmem:[#allocation3 + $0xa0] sm:$0xff] %v306
    %335 = vst [vmem:[#allocation3 + $0xa8] sm:$0xff] %v205
    %336 = vst [vmem:[#allocation3 + $0xb0] sm:$0xff] %v207
    %337 = vst [vmem:[#allocation3 + $0xb8] sm:$0xff] %v311
    %v338 = vld [vmem:[#allocation4] sm:$0xff]
    %v339 = vld [vmem:[#allocation4 + $0x8] sm:$0xff]
    %v340 = vld [vmem:[#allocation4 + $0x10] sm:$0xff]
    %v341 = vld [vmem:[#allocation4 + $0x18] sm:$0xff]
    %v342 = vld [vmem:[#allocation4 + $0x20] sm:$0xff]
    %v343 = vld [vmem:[#allocation4 + $0x28] sm:$0xff]
    %v344 = vld [vmem:[#allocation4 + $0x30] sm:$0xff]
    %v345 = vld [vmem:[#allocation4 + $0x38] sm:$0xff]
    %v346 = vld [vmem:[#allocation4 + $0x40] sm:$0xff]
    %v347 = vld [vmem:[#allocation4 + $0x48] sm:$0xff]
    %v348 = vld [vmem:[#allocation4 + $0x50] sm:$0xff]
    %v349 = vld [vmem:[#allocation4 + $0x58] sm:$0xff]
    %v350 = vld [vmem:[#allocation4 + $0x60] sm:$0xff]
    %v351 = vld [vmem:[#allocation4 + $0x68] sm:$0xff]
    %v352 = vld [vmem:[#allocation4 + $0x70] sm:$0xff]
    %v353 = vld [vmem:[#allocation4 + $0x78] sm:$0xff]
    %v354 = vld [vmem:[#allocation4 + $0x80] sm:$0xff]
    %v355 = vld [vmem:[#allocation4 + $0x88] sm:$0xff]
    %v356 = vld [vmem:[#allocation4 + $0x90] sm:$0xff]
    %v357 = vld [vmem:[#allocation4 + $0x98] sm:$0xff]
    %v358 = vld [vmem:[#allocation4 + $0xa0] sm:$0xff]
    %v359 = vld [vmem:[#allocation4 + $0xa8] sm:$0xff]
    %v360 = vld [vmem:[#allocation4 + $0xb0] sm:$0xff]
    %v361 = vld [vmem:[#allocation4 + $0xb8] sm:$0xff]
    %v362 = vld [vmem:[#allocation4 + $0xc0] sm:$0xff]
    %v363 = vld [vmem:[#allocation4 + $0xc8] sm:$0xff]
    %v364 = vld [vmem:[#allocation4 + $0xd0] sm:$0xff]
    %v365 = vld [vmem:[#allocation4 + $0xd8] sm:$0xff]
    %v366 = vld [vmem:[#allocation4 + $0xe0] sm:$0xff]
    %v367 = vld [vmem:[#allocation4 + $0xe8] sm:$0xff]
    %v368 = vld [vmem:[#allocation4 + $0xf0] sm:$0xff]
    %v369 = vld [vmem:[#allocation4 + $0xf8] sm:$0xff]
    %v370 = vld [vmem:[#allocation4 + $0x100] sm:$0xff]
    %v371 = vld [vmem:[#allocation4 + $0x108] sm:$0xff]
    %v372 = vld [vmem:[#allocation4 + $0x110] sm:$0xff]
    %v373 = vld [vmem:[#allocation4 + $0x118] sm:$0xff]
    %v374 = vld [vmem:[#allocation4 + $0x120] sm:$0xff]
    %v375 = vld [vmem:[#allocation4 + $0x128] sm:$0xff]
    %v376 = vld [vmem:[#allocation4 + $0x130] sm:$0xff]
    %v377 = vld [vmem:[#allocation4 + $0x138] sm:$0xff]
    %v378 = vld [vmem:[#allocation4 + $0x140] sm:$0xff]
    %v379 = vld [vmem:[#allocation4 + $0x148] sm:$0xff]
    %v380 = vld [vmem:[#allocation4 + $0x150] sm:$0xff]
    %v381 = vld [vmem:[#allocation4 + $0x158] sm:$0xff]
    %v382 = vld [vmem:[#allocation4 + $0x160] sm:$0xff]
    %v383 = vld [vmem:[#allocation4 + $0x168] sm:$0xff]
    %v384 = vld [vmem:[#allocation4 + $0x170] sm:$0xff]
    %v385 = vld [vmem:[#allocation4 + $0x178] sm:$0xff]
    %v386 = vld [vmem:[%s4] sm:$0x1]
    %v388 = vlaneseq
    %v389 = vshrl.u32 %v388, 7
    %v390 = vsub.s32 0, %v389
    %v391 = vrot.slane %v386, %v390
    %v393 = vld [vmem:[#allocation2] sm:$0xff]
    %394 = vmatprep.subr.mxu0 %v339
    %395 = vmatpush1.msra.mxu0 %v338
    %396 = vmatprep.subr.mxu0 %v342
    %397 = vmatpush1.msra.mxu0 %v341
    %398 = vmatprep.subr.mxu0 %v345
    %399 = vmatpush1.msra.mxu0 %v344
    %400 = vmatprep.subr.mxu0 %v348
    %401 = vmatpush1.msra.mxu0 %v347
    %402 = vmatprep.subr.mxu0 %v351
    %403 = vmatpush1.msra.mxu0 %v350
    %404 = vmatprep.subr.mxu0 %v354
    %405 = vmatpush1.msra.mxu0 %v353
    %406 = vmatprep.subr.mxu0 %v357
    %407 = vmatpush1.msra.mxu0 %v356
    %408 = vmatprep.subr.mxu0 %v360
    %409 = vmatpush1.msra.mxu0 %v359
    %410 = vmatprep.subr.mxu0 %v363
    %411 = vmatpush1.msra.mxu0 %v362
    %412 = vmatprep.subr.mxu0 %v366
    %413 = vmatpush1.msra.mxu0 %v365
    %414 = vmatprep.subr.mxu0 %v369
    %415 = vmatpush1.msra.mxu0 %v368
    %416 = vmatprep.subr.mxu0 %v372
    %417 = vmatpush1.msra.mxu0 %v371
    %418 = vmatprep.subr.mxu0 %v375
    %419 = vmatpush1.msra.mxu0 %v374
    %420 = vmatprep.subr.mxu0 %v378
    %421 = vmatpush1.msra.mxu0 %v377
    %422 = vmatprep.subr.mxu0 %v381
    %423 = vmatpush1.msra.mxu0 %v380
    %424 = vmatprep.subr.mxu0 %v384
    %425 = vmatpush1.msra.mxu0 %v383
    %426 = vmatprep.subr.mxu0 0.0
    %427 = vmatpush1.msra.mxu0 0.0
    %428 = vmatprep.subr.mxu0 0.0
    %429 = vmatpush1.msra.mxu0 0.0
    %430 = vmatprep.subr.mxu0 0.0
    %431 = vmatpush1.msra.mxu0 0.0
    %432 = vmatprep.subr.mxu0 0.0
    %433 = vmatpush1.msra.mxu0 0.0
    %434 = vmatprep.subr.mxu0 0.0
    %435 = vmatpush1.msra.mxu0 0.0
    %436 = vmatprep.subr.mxu0 0.0
    %437 = vmatpush1.msra.mxu0 0.0
    %438 = vmatprep.subr.mxu0 0.0
    %439 = vmatpush1.msra.mxu0 0.0
    %440 = vmatprep.subr.mxu0 0.0
    %441 = vmatpush1.msra.mxu0 0.0
    %442 = vmatprep.subr.mxu0 0.0
    %443 = vmatpush1.msra.mxu0 0.0
    %444 = vmatprep.subr.mxu0 0.0
    %445 = vmatpush1.msra.mxu0 0.0
    %446 = vmatprep.subr.mxu0 0.0
    %447 = vmatpush1.msra.mxu0 0.0
    %448 = vmatprep.subr.mxu0 0.0
    %449 = vmatpush1.msra.mxu0 0.0
    %450 = vmatprep.subr.mxu0 0.0
    %451 = vmatpush1.msra.mxu0 0.0
    %452 = vmatprep.subr.mxu0 0.0
    %453 = vmatpush1.msra.mxu0 0.0
    %454 = vmatprep.subr.mxu0 0.0
    %455 = vmatpush1.msra.mxu0 0.0
    %456 = vmatprep.subr.mxu0 0.0
    %457 = vmatpush1.msra.mxu0 0.0
    %458 = vmatprep.mubr.f32.mxu0 0.0
    %459 = vmatmul.mubr.f32.gmra.mrb[0].mxu0 %v393
    %v460 = vpop.f32.mrb[0].mxu0
    %v461 = vadd.f32 0.0, %v460
    %v462 = vpop.f32.mrb[0].mxu0
    %v463 = vadd.f32 0.0, %v462
    %464 = vdwg.mxu0
    %465 = vmatprep.subr.mxu0 0.0
    %466 = vmatpush1.msra.mxu0 %v340
    %467 = vmatprep.subr.mxu0 0.0
    %468 = vmatpush1.msra.mxu0 %v343
    %469 = vmatprep.subr.mxu0 0.0
    %470 = vmatpush1.msra.mxu0 %v346
    %471 = vmatprep.subr.mxu0 0.0
    %472 = vmatpush1.msra.mxu0 %v349
    %473 = vmatprep.subr.mxu0 0.0
    %474 = vmatpush1.msra.mxu0 %v352
    %475 = vmatprep.subr.mxu0 0.0
    %476 = vmatpush1.msra.mxu0 %v355
    %477 = vmatprep.subr.mxu0 0.0
    %478 = vmatpush1.msra.mxu0 %v358
    %479 = vmatprep.subr.mxu0 0.0
    %480 = vmatpush1.msra.mxu0 %v361
    %481 = vmatprep.subr.mxu0 0.0
    %482 = vmatpush1.msra.mxu0 %v364
    %483 = vmatprep.subr.mxu0 0.0
    %484 = vmatpush1.msra.mxu0 %v367
    %485 = vmatprep.subr.mxu0 0.0
    %486 = vmatpush1.msra.mxu0 %v370
    %487 = vmatprep.subr.mxu0 0.0
    %488 = vmatpush1.msra.mxu0 %v373
    %489 = vmatprep.subr.mxu0 0.0
    %490 = vmatpush1.msra.mxu0 %v376
    %491 = vmatprep.subr.mxu0 0.0
    %492 = vmatpush1.msra.mxu0 %v379
    %493 = vmatprep.subr.mxu0 0.0
    %494 = vmatpush1.msra.mxu0 %v382
    %495 = vmatprep.subr.mxu0 0.0
    %496 = vmatpush1.msra.mxu0 %v385
    %497 = vmatprep.subr.mxu0 0.0
    %498 = vmatpush1.msra.mxu0 0.0
    %499 = vmatprep.subr.mxu0 0.0
    %500 = vmatpush1.msra.mxu0 0.0
    %501 = vmatprep.subr.mxu0 0.0
    %502 = vmatpush1.msra.mxu0 0.0
    %503 = vmatprep.subr.mxu0 0.0
    %504 = vmatpush1.msra.mxu0 0.0
    %505 = vmatprep.subr.mxu0 0.0
    %506 = vmatpush1.msra.mxu0 0.0
    %507 = vmatprep.subr.mxu0 0.0
    %508 = vmatpush1.msra.mxu0 0.0
    %509 = vmatprep.subr.mxu0 0.0
    %510 = vmatpush1.msra.mxu0 0.0
    %511 = vmatprep.subr.mxu0 0.0
    %512 = vmatpush1.msra.mxu0 0.0
    %513 = vmatprep.subr.mxu0 0.0
    %514 = vmatpush1.msra.mxu0 0.0
    %515 = vmatprep.subr.mxu0 0.0
    %516 = vmatpush1.msra.mxu0 0.0
    %517 = vmatprep.subr.mxu0 0.0
    %518 = vmatpush1.msra.mxu0 0.0
    %519 = vmatprep.subr.mxu0 0.0
    %520 = vmatpush1.msra.mxu0 0.0
    %521 = vmatprep.subr.mxu0 0.0
    %522 = vmatpush1.msra.mxu0 0.0
    %523 = vmatprep.subr.mxu0 0.0
    %524 = vmatpush1.msra.mxu0 0.0
    %525 = vmatprep.subr.mxu0 0.0
    %526 = vmatpush1.msra.mxu0 0.0
    %527 = vmatprep.subr.mxu0 0.0
    %528 = vmatpush1.msra.mxu0 0.0
    %529 = vmatprep.mubr.f32.mxu0 0.0
    %530 = vmatmul.mubr.f32.gmra.mrb[0].mxu0 %v393
    %v531 = vpop.f32.mrb[0].mxu0
    %v532 = vadd.f32 0.0, %v531
    %v533 = vpop.f32.mrb[0].mxu0
    %534 = vdwg.mxu0
    %s535 = smul.u32 0, 3
    %s536 = smul.addr %s535, 8
    %s537 = scalar_lea.vmem [#allocation3], %s536
    %v538 = vld [vmem:[%s537] sm:$0xff]
    %v539 = vadd.f32 %v538, %v461
    %v540 = vxor.u32 %v539, 2147483648
    %v541 = vmul.f32 %v540, 1.442695
    %v542 = vpow.pop %v541
    %v543 = vadd.f32 %v542, 1.0
    %v544 = vrcp.pop %v543
    %v545 = vmul.f32 1.0, %v544
    %v546 = vld [vmem:[%s537 + $0x8] sm:$0xff]
    %v547 = vadd.f32 %v546, %v463
    %v548 = vxor.u32 %v547, 2147483648
    %v549 = vmul.f32 %v548, 1.442695
    %v550 = vpow.pop %v549
    %v551 = vadd.f32 %v550, 1.0
    %v552 = vrcp.pop %v551
    %v553 = vmul.f32 1.0, %v552
    %v554 = vld [vmem:[%s537 + $0x10] sm:$0xff]
    %v555 = vadd.f32 %v532, %v391
    %v556 = vmul.f32 %v545, %v555
    %v557 = vadd.f32 %v554, %v556
    %v558 = vtanh.pop %v557
    %v559 = vsub.f32 1.0, %v553
    %v560 = vmul.f32 %v559, %v558
    %v561 = vmul.f32 %v553, %v393
    %v562 = vadd.f32 %v560, %v561
    %563 = vst [vmem:[#allocation7] sm:$0xff] %v562
    %564 = vmatprep.subr.mxu0 %v339
    %565 = vmatpush1.msra.mxu0 %v338
    %566 = vmatprep.subr.mxu0 %v342
    %567 = vmatpush1.msra.mxu0 %v341
    %568 = vmatprep.subr.mxu0 %v345
    %569 = vmatpush1.msra.mxu0 %v344
    %570 = vmatprep.subr.mxu0 %v348
    %571 = vmatpush1.msra.mxu0 %v347
    %572 = vmatprep.subr.mxu0 %v351
    %573 = vmatpush1.msra.mxu0 %v350
    %574 = vmatprep.subr.mxu0 %v354
    %575 = vmatpush1.msra.mxu0 %v353
    %576 = vmatprep.subr.mxu0 %v357
    %577 = vmatpush1.msra.mxu0 %v356
    %578 = vmatprep.subr.mxu0 %v360
    %579 = vmatpush1.msra.mxu0 %v359
    %580 = vmatprep.subr.mxu0 %v363
    %581 = vmatpush1.msra.mxu0 %v362
    %582 = vmatprep.subr.mxu0 %v366
    %583 = vmatpush1.msra.mxu0 %v365
    %584 = vmatprep.subr.mxu0 %v369
    %585 = vmatpush1.msra.mxu0 %v368
    %586 = vmatprep.subr.mxu0 %v372
    %587 = vmatpush1.msra.mxu0 %v371
    %588 = vmatprep.subr.mxu0 %v375
    %589 = vmatpush1.msra.mxu0 %v374
    %590 = vmatprep.subr.mxu0 %v378
    %591 = vmatpush1.msra.mxu0 %v377
    %592 = vmatprep.subr.mxu0 %v381
    %593 = vmatpush1.msra.mxu0 %v380
    %594 = vmatprep.subr.mxu0 %v384
    %595 = vmatpush1.msra.mxu0 %v383
    %596 = vmatprep.subr.mxu0 0.0
    %597 = vmatpush1.msra.mxu0 0.0
    %598 = vmatprep.subr.mxu0 0.0
    %599 = vmatpush1.msra.mxu0 0.0
    %600 = vmatprep.subr.mxu0 0.0
    %601 = vmatpush1.msra.mxu0 0.0
    %602 = vmatprep.subr.mxu0 0.0
    %603 = vmatpush1.msra.mxu0 0.0
    %604 = vmatprep.subr.mxu0 0.0
    %605 = vmatpush1.msra.mxu0 0.0
    %606 = vmatprep.subr.mxu0 0.0
    %607 = vmatpush1.msra.mxu0 0.0
    %608 = vmatprep.subr.mxu0 0.0
    %609 = vmatpush1.msra.mxu0 0.0
    %610 = vmatprep.subr.mxu0 0.0
    %611 = vmatpush1.msra.mxu0 0.0
    %612 = vmatprep.subr.mxu0 0.0
    %613 = vmatpush1.msra.mxu0 0.0
    %614 = vmatprep.subr.mxu0 0.0
    %615 = vmatpush1.msra.mxu0 0.0
    %616 = vmatprep.subr.mxu0 0.0
    %617 = vmatpush1.msra.mxu0 0.0
    %618 = vmatprep.subr.mxu0 0.0
    %619 = vmatpush1.msra.mxu0 0.0
    %620 = vmatprep.subr.mxu0 0.0
    %621 = vmatpush1.msra.mxu0 0.0
    %622 = vmatprep.subr.mxu0 0.0
    %623 = vmatpush1.msra.mxu0 0.0
    %624 = vmatprep.subr.mxu0 0.0
    %625 = vmatpush1.msra.mxu0 0.0
    %626 = vmatprep.subr.mxu0 0.0
    %627 = vmatpush1.msra.mxu0 0.0
    %628 = vmatprep.mubr.f32.mxu0 0.0
    %629 = vmatmul.mubr.f32.gmra.mrb[0].mxu0 %v562
    %v630 = vpop.f32.mrb[0].mxu0
    %v631 = vadd.f32 0.0, %v630
    %v632 = vpop.f32.mrb[0].mxu0
    %v633 = vadd.f32 0.0, %v632
    %634 = vdwg.mxu0
    %635 = vmatprep.subr.mxu0 0.0
    %636 = vmatpush1.msra.mxu0 %v340
    %637 = vmatprep.subr.mxu0 0.0
    %638 = vmatpush1.msra.mxu0 %v343
    %639 = vmatprep.subr.mxu0 0.0
    %640 = vmatpush1.msra.mxu0 %v346
    %641 = vmatprep.subr.mxu0 0.0
    %642 = vmatpush1.msra.mxu0 %v349
    %643 = vmatprep.subr.mxu0 0.0
    %644 = vmatpush1.msra.mxu0 %v352
    %645 = vmatprep.subr.mxu0 0.0
    %646 = vmatpush1.msra.mxu0 %v355
    %647 = vmatprep.subr.mxu0 0.0
    %648 = vmatpush1.msra.mxu0 %v358
    %649 = vmatprep.subr.mxu0 0.0
    %650 = vmatpush1.msra.mxu0 %v361
    %651 = vmatprep.subr.mxu0 0.0
    %652 = vmatpush1.msra.mxu0 %v364
    %653 = vmatprep.subr.mxu0 0.0
    %654 = vmatpush1.msra.mxu0 %v367
    %655 = vmatprep.subr.mxu0 0.0
    %656 = vmatpush1.msra.mxu0 %v370
    %657 = vmatprep.subr.mxu0 0.0
    %658 = vmatpush1.msra.mxu0 %v373
    %659 = vmatprep.subr.mxu0 0.0
    %660 = vmatpush1.msra.mxu0 %v376
    %661 = vmatprep.subr.mxu0 0.0
    %662 = vmatpush1.msra.mxu0 %v379
    %663 = vmatprep.subr.mxu0 0.0
    %664 = vmatpush1.msra.mxu0 %v382
    %665 = vmatprep.subr.mxu0 0.0
    %666 = vmatpush1.msra.mxu0 %v385
    %667 = vmatprep.subr.mxu0 0.0
    %668 = vmatpush1.msra.mxu0 0.0
    %669 = vmatprep.subr.mxu0 0.0
    %670 = vmatpush1.msra.mxu0 0.0
    %671 = vmatprep.subr.mxu0 0.0
    %672 = vmatpush1.msra.mxu0 0.0
    %673 = vmatprep.subr.mxu0 0.0
    %674 = vmatpush1.msra.mxu0 0.0
    %675 = vmatprep.subr.mxu0 0.0
    %676 = vmatpush1.msra.mxu0 0.0
    %677 = vmatprep.subr.mxu0 0.0
    %678 = vmatpush1.msra.mxu0 0.0
    %679 = vmatprep.subr.mxu0 0.0
    %680 = vmatpush1.msra.mxu0 0.0
    %681 = vmatprep.subr.mxu0 0.0
    %682 = vmatpush1.msra.mxu0 0.0
    %683 = vmatprep.subr.mxu0 0.0
    %684 = vmatpush1.msra.mxu0 0.0
    %685 = vmatprep.subr.mxu0 0.0
    %686 = vmatpush1.msra.mxu0 0.0
    %687 = vmatprep.subr.mxu0 0.0
    %688 = vmatpush1.msra.mxu0 0.0
    %689 = vmatprep.subr.mxu0 0.0
    %690 = vmatpush1.msra.mxu0 0.0
    %691 = vmatprep.subr.mxu0 0.0
    %692 = vmatpush1.msra.mxu0 0.0
    %693 = vmatprep.subr.mxu0 0.0
    %694 = vmatpush1.msra.mxu0 0.0
    %695 = vmatprep.subr.mxu0 0.0
    %696 = vmatpush1.msra.mxu0 0.0
    %697 = vmatprep.subr.mxu0 0.0
    %698 = vmatpush1.msra.mxu0 0.0
    %699 = vmatprep.mubr.f32.mxu0 0.0
    %700 = vmatmul.mubr.f32.gmra.mrb[0].mxu0 %v562
    %v701 = vpop.f32.mrb[0].mxu0
    %v702 = vadd.f32 0.0, %v701
    %v703 = vpop.f32.mrb[0].mxu0
    %704 = vdwg.mxu0
    %s705 = smul.u32 1, 3
    %s706 = smul.addr %s705, 8
    %s707 = scalar_lea.vmem [#allocation3], %s706
    %v708 = vld [vmem:[%s707] sm:$0xff]
    %v709 = vadd.f32 %v708, %v631
    %v710 = vxor.u32 %v709, 2147483648
    %v711 = vmul.f32 %v710, 1.442695
    %v712 = vpow.pop %v711
    %v713 = vadd.f32 %v712, 1.0
    %v714 = vrcp.pop %v713
    %v715 = vmul.f32 1.0, %v714
    %v716 = vld [vmem:[%s707 + $0x8] sm:$0xff]
    %v717 = vadd.f32 %v716, %v633
    %v718 = vxor.u32 %v717, 2147483648
    %v719 = vmul.f32 %v718, 1.442695
    %v720 = vpow.pop %v719
    %v721 = vadd.f32 %v720, 1.0
    %v722 = vrcp.pop %v721
    %v723 = vmul.f32 1.0, %v722
    %v724 = vld [vmem:[%s707 + $0x10] sm:$0xff]
    %v725 = vadd.f32 %v702, %v391
    %v726 = vmul.f32 %v715, %v725
    %v727 = vadd.f32 %v724, %v726
    %v728 = vtanh.pop %v727
    %v729 = vsub.f32 1.0, %v723
    %v730 = vmul.f32 %v729, %v728
    %v731 = vmul.f32 %v723, %v562
    %v732 = vadd.f32 %v730, %v731
    %s733 = scalar_lea.vmem [#allocation7], 8
    %734 = vst [vmem:[%s733] sm:$0xff] %v732
    %735 = vmatprep.subr.mxu0 %v339
    %736 = vmatpush1.msra.mxu0 %v338
    %737 = vmatprep.subr.mxu0 %v342
    %738 = vmatpush1.msra.mxu0 %v341
    %739 = vmatprep.subr.mxu0 %v345
    %740 = vmatpush1.msra.mxu0 %v344
    %741 = vmatprep.subr.mxu0 %v348
    %742 = vmatpush1.msra.mxu0 %v347
    %743 = vmatprep.subr.mxu0 %v351
    %744 = vmatpush1.msra.mxu0 %v350
    %745 = vmatprep.subr.mxu0 %v354
    %746 = vmatpush1.msra.mxu0 %v353
    %747 = vmatprep.subr.mxu0 %v357
    %748 = vmatpush1.msra.mxu0 %v356
    %749 = vmatprep.subr.mxu0 %v360
    %750 = vmatpush1.msra.mxu0 %v359
    %751 = vmatprep.subr.mxu0 %v363
    %752 = vmatpush1.msra.mxu0 %v362
    %753 = vmatprep.subr.mxu0 %v366
    %754 = vmatpush1.msra.mxu0 %v365
    %755 = vmatprep.subr.mxu0 %v369
    %756 = vmatpush1.msra.mxu0 %v368
    %757 = vmatprep.subr.mxu0 %v372
    %758 = vmatpush1.msra.mxu0 %v371
    %759 = vmatprep.subr.mxu0 %v375
    %760 = vmatpush1.msra.mxu0 %v374
    %761 = vmatprep.subr.mxu0 %v378
    %762 = vmatpush1.msra.mxu0 %v377
    %763 = vmatprep.subr.mxu0 %v381
    %764 = vmatpush1.msra.mxu0 %v380
    %765 = vmatprep.subr.mxu0 %v384
    %766 = vmatpush1.msra.mxu0 %v383
    %767 = vmatprep.subr.mxu0 0.0
    %768 = vmatpush1.msra.mxu0 0.0
    %769 = vmatprep.subr.mxu0 0.0
    %770 = vmatpush1.msra.mxu0 0.0
    %771 = vmatprep.subr.mxu0 0.0
    %772 = vmatpush1.msra.mxu0 0.0
    %773 = vmatprep.subr.mxu0 0.0
    %774 = vmatpush1.msra.mxu0 0.0
    %775 = vmatprep.subr.mxu0 0.0
    %776 = vmatpush1.msra.mxu0 0.0
    %777 = vmatprep.subr.mxu0 0.0
    %778 = vmatpush1.msra.mxu0 0.0
    %779 = vmatprep.subr.mxu0 0.0
    %780 = vmatpush1.msra.mxu0 0.0
    %781 = vmatprep.subr.mxu0 0.0
    %782 = vmatpush1.msra.mxu0 0.0
    %783 = vmatprep.subr.mxu0 0.0
    %784 = vmatpush1.msra.mxu0 0.0
    %785 = vmatprep.subr.mxu0 0.0
    %786 = vmatpush1.msra.mxu0 0.0
    %787 = vmatprep.subr.mxu0 0.0
    %788 = vmatpush1.msra.mxu0 0.0
    %789 = vmatprep.subr.mxu0 0.0
    %790 = vmatpush1.msra.mxu0 0.0
    %791 = vmatprep.subr.mxu0 0.0
    %792 = vmatpush1.msra.mxu0 0.0
    %793 = vmatprep.subr.mxu0 0.0
    %794 = vmatpush1.msra.mxu0 0.0
    %795 = vmatprep.subr.mxu0 0.0
    %796 = vmatpush1.msra.mxu0 0.0
    %797 = vmatprep.subr.mxu0 0.0
    %798 = vmatpush1.msra.mxu0 0.0
    %799 = vmatprep.mubr.f32.mxu0 0.0
    %800 = vmatmul.mubr.f32.gmra.mrb[0].mxu0 %v732
    %v801 = vpop.f32.mrb[0].mxu0
    %v802 = vadd.f32 0.0, %v801
    %v803 = vpop.f32.mrb[0].mxu0
    %v804 = vadd.f32 0.0, %v803
    %805 = vdwg.mxu0
    %806 = vmatprep.subr.mxu0 0.0
    %807 = vmatpush1.msra.mxu0 %v340
    %808 = vmatprep.subr.mxu0 0.0
    %809 = vmatpush1.msra.mxu0 %v343
    %810 = vmatprep.subr.mxu0 0.0
    %811 = vmatpush1.msra.mxu0 %v346
    %812 = vmatprep.subr.mxu0 0.0
    %813 = vmatpush1.msra.mxu0 %v349
    %814 = vmatprep.subr.mxu0 0.0
    %815 = vmatpush1.msra.mxu0 %v352
    %816 = vmatprep.subr.mxu0 0.0
    %817 = vmatpush1.msra.mxu0 %v355
    %818 = vmatprep.subr.mxu0 0.0
    %819 = vmatpush1.msra.mxu0 %v358
    %820 = vmatprep.subr.mxu0 0.0
    %821 = vmatpush1.msra.mxu0 %v361
    %822 = vmatprep.subr.mxu0 0.0
    %823 = vmatpush1.msra.mxu0 %v364
    %824 = vmatprep.subr.mxu0 0.0
    %825 = vmatpush1.msra.mxu0 %v367
    %826 = vmatprep.subr.mxu0 0.0
    %827 = vmatpush1.msra.mxu0 %v370
    %828 = vmatprep.subr.mxu0 0.0
    %829 = vmatpush1.msra.mxu0 %v373
    %830 = vmatprep.subr.mxu0 0.0
    %831 = vmatpush1.msra.mxu0 %v376
    %832 = vmatprep.subr.mxu0 0.0
    %833 = vmatpush1.msra.mxu0 %v379
    %834 = vmatprep.subr.mxu0 0.0
    %835 = vmatpush1.msra.mxu0 %v382
    %836 = vmatprep.subr.mxu0 0.0
    %837 = vmatpush1.msra.mxu0 %v385
    %838 = vmatprep.subr.mxu0 0.0
    %839 = vmatpush1.msra.mxu0 0.0
    %840 = vmatprep.subr.mxu0 0.0
    %841 = vmatpush1.msra.mxu0 0.0
    %842 = vmatprep.subr.mxu0 0.0
    %843 = vmatpush1.msra.mxu0 0.0
    %844 = vmatprep.subr.mxu0 0.0
    %845 = vmatpush1.msra.mxu0 0.0
    %846 = vmatprep.subr.mxu0 0.0
    %847 = vmatpush1.msra.mxu0 0.0
    %848 = vmatprep.subr.mxu0 0.0
    %849 = vmatpush1.msra.mxu0 0.0
    %850 = vmatprep.subr.mxu0 0.0
    %851 = vmatpush1.msra.mxu0 0.0
    %852 = vmatprep.subr.mxu0 0.0
    %853 = vmatpush1.msra.mxu0 0.0
    %854 = vmatprep.subr.mxu0 0.0
    %855 = vmatpush1.msra.mxu0 0.0
    %856 = vmatprep.subr.mxu0 0.0
    %857 = vmatpush1.msra.mxu0 0.0
    %858 = vmatprep.subr.mxu0 0.0
    %859 = vmatpush1.msra.mxu0 0.0
    %860 = vmatprep.subr.mxu0 0.0
    %861 = vmatpush1.msra.mxu0 0.0
    %862 = vmatprep.subr.mxu0 0.0
    %863 = vmatpush1.msra.mxu0 0.0
    %864 = vmatprep.subr.mxu0 0.0
    %865 = vmatpush1.msra.mxu0 0.0
    %866 = vmatprep.subr.mxu0 0.0
    %867 = vmatpush1.msra.mxu0 0.0
    %868 = vmatprep.subr.mxu0 0.0
    %869 = vmatpush1.msra.mxu0 0.0
    %870 = vmatprep.mubr.f32.mxu0 0.0
    %871 = vmatmul.mubr.f32.gmra.mrb[0].mxu0 %v732
    %v872 = vpop.f32.mrb[0].mxu0
    %v873 = vadd.f32 0.0, %v872
    %v874 = vpop.f32.mrb[0].mxu0
    %875 = vdwg.mxu0
    %s876 = smul.u32 2, 3
    %s877 = smul.addr %s876, 8
    %s878 = scalar_lea.vmem [#allocation3], %s877
    %v879 = vld [vmem:[%s878] sm:$0xff]
    %v880 = vadd.f32 %v879, %v802
    %v881 = vxor.u32 %v880, 2147483648
    %v882 = vmul.f32 %v881, 1.442695
    %v883 = vpow.pop %v882
    %v884 = vadd.f32 %v883, 1.0
    %v885 = vrcp.pop %v884
    %v886 = vmul.f32 1.0, %v885
    %v887 = vld [vmem:[%s878 + $0x8] sm:$0xff]
    %v888 = vadd.f32 %v887, %v804
    %v889 = vxor.u32 %v888, 2147483648
    %v890 = vmul.f32 %v889, 1.442695
    %v891 = vpow.pop %v890
    %v892 = vadd.f32 %v891, 1.0
    %v893 = vrcp.pop %v892
    %v894 = vmul.f32 1.0, %v893
    %v895 = vld [vmem:[%s878 + $0x10] sm:$0xff]
    %v896 = vadd.f32 %v873, %v391
    %v897 = vmul.f32 %v886, %v896
    %v898 = vadd.f32 %v895, %v897
    %v899 = vtanh.pop %v898
    %v900 = vsub.f32 1.0, %v894
    %v901 = vmul.f32 %v900, %v899
    %v902 = vmul.f32 %v894, %v732
    %v903 = vadd.f32 %v901, %v902
    %s904 = scalar_lea.vmem [#allocation7], 16
    %905 = vst [vmem:[%s904] sm:$0xff] %v903
    %906 = vmatprep.subr.mxu0 %v339
    %907 = vmatpush1.msra.mxu0 %v338
    %908 = vmatprep.subr.mxu0 %v342
    %909 = vmatpush1.msra.mxu0 %v341
    %910 = vmatprep.subr.mxu0 %v345
    %911 = vmatpush1.msra.mxu0 %v344
    %912 = vmatprep.subr.mxu0 %v348
    %913 = vmatpush1.msra.mxu0 %v347
    %914 = vmatprep.subr.mxu0 %v351
    %915 = vmatpush1.msra.mxu0 %v350
    %916 = vmatprep.subr.mxu0 %v354
    %917 = vmatpush1.msra.mxu0 %v353
    %918 = vmatprep.subr.mxu0 %v357
    %919 = vmatpush1.msra.mxu0 %v356
    %920 = vmatprep.subr.mxu0 %v360
    %921 = vmatpush1.msra.mxu0 %v359
    %922 = vmatprep.subr.mxu0 %v363
    %923 = vmatpush1.msra.mxu0 %v362
    %924 = vmatprep.subr.mxu0 %v366
    %925 = vmatpush1.msra.mxu0 %v365
    %926 = vmatprep.subr.mxu0 %v369
    %927 = vmatpush1.msra.mxu0 %v368
    %928 = vmatprep.subr.mxu0 %v372
    %929 = vmatpush1.msra.mxu0 %v371
    %930 = vmatprep.subr.mxu0 %v375
    %931 = vmatpush1.msra.mxu0 %v374
    %932 = vmatprep.subr.mxu0 %v378
    %933 = vmatpush1.msra.mxu0 %v377
    %934 = vmatprep.subr.mxu0 %v381
    %935 = vmatpush1.msra.mxu0 %v380
    %936 = vmatprep.subr.mxu0 %v384
    %937 = vmatpush1.msra.mxu0 %v383
    %938 = vmatprep.subr.mxu0 0.0
    %939 = vmatpush1.msra.mxu0 0.0
    %940 = vmatprep.subr.mxu0 0.0
    %941 = vmatpush1.msra.mxu0 0.0
    %942 = vmatprep.subr.mxu0 0.0
    %943 = vmatpush1.msra.mxu0 0.0
    %944 = vmatprep.subr.mxu0 0.0
    %945 = vmatpush1.msra.mxu0 0.0
    %946 = vmatprep.subr.mxu0 0.0
    %947 = vmatpush1.msra.mxu0 0.0
    %948 = vmatprep.subr.mxu0 0.0
    %949 = vmatpush1.msra.mxu0 0.0
    %950 = vmatprep.subr.mxu0 0.0
    %951 = vmatpush1.msra.mxu0 0.0
    %952 = vmatprep.subr.mxu0 0.0
    %953 = vmatpush1.msra.mxu0 0.0
    %954 = vmatprep.subr.mxu0 0.0
    %955 = vmatpush1.msra.mxu0 0.0
    %956 = vmatprep.subr.mxu0 0.0
    %957 = vmatpush1.msra.mxu0 0.0
    %958 = vmatprep.subr.mxu0 0.0
    %959 = vmatpush1.msra.mxu0 0.0
    %960 = vmatprep.subr.mxu0 0.0
    %961 = vmatpush1.msra.mxu0 0.0
    %962 = vmatprep.subr.mxu0 0.0
    %963 = vmatpush1.msra.mxu0 0.0
    %964 = vmatprep.subr.mxu0 0.0
    %965 = vmatpush1.msra.mxu0 0.0
    %966 = vmatprep.subr.mxu0 0.0
    %967 = vmatpush1.msra.mxu0 0.0
    %968 = vmatprep.subr.mxu0 0.0
    %969 = vmatpush1.msra.mxu0 0.0
    %970 = vmatprep.mubr.f32.mxu0 0.0
    %971 = vmatmul.mubr.f32.gmra.mrb[0].mxu0 %v903
    %v972 = vpop.f32.mrb[0].mxu0
    %v973 = vadd.f32 0.0, %v972
    %v974 = vpop.f32.mrb[0].mxu0
    %v975 = vadd.f32 0.0, %v974
    %976 = vdwg.mxu0
    %977 = vmatprep.subr.mxu0 0.0
    %978 = vmatpush1.msra.mxu0 %v340
    %979 = vmatprep.subr.mxu0 0.0
    %980 = vmatpush1.msra.mxu0 %v343
    %981 = vmatprep.subr.mxu0 0.0
    %982 = vmatpush1.msra.mxu0 %v346
    %983 = vmatprep.subr.mxu0 0.0
    %984 = vmatpush1.msra.mxu0 %v349
    %985 = vmatprep.subr.mxu0 0.0
    %986 = vmatpush1.msra.mxu0 %v352
    %987 = vmatprep.subr.mxu0 0.0
    %988 = vmatpush1.msra.mxu0 %v355
    %989 = vmatprep.subr.mxu0 0.0
    %990 = vmatpush1.msra.mxu0 %v358
    %991 = vmatprep.subr.mxu0 0.0
    %992 = vmatpush1.msra.mxu0 %v361
    %993 = vmatprep.subr.mxu0 0.0
    %994 = vmatpush1.msra.mxu0 %v364
    %995 = vmatprep.subr.mxu0 0.0
    %996 = vmatpush1.msra.mxu0 %v367
    %997 = vmatprep.subr.mxu0 0.0
    %998 = vmatpush1.msra.mxu0 %v370
    %999 = vmatprep.subr.mxu0 0.0
    %1000 = vmatpush1.msra.mxu0 %v373
    %1001 = vmatprep.subr.mxu0 0.0
    %1002 = vmatpush1.msra.mxu0 %v376
    %1003 = vmatprep.subr.mxu0 0.0
    %1004 = vmatpush1.msra.mxu0 %v379
    %1005 = vmatprep.subr.mxu0 0.0
    %1006 = vmatpush1.msra.mxu0 %v382
    %1007 = vmatprep.subr.mxu0 0.0
    %1008 = vmatpush1.msra.mxu0 %v385
    %1009 = vmatprep.subr.mxu0 0.0
    %1010 = vmatpush1.msra.mxu0 0.0
    %1011 = vmatprep.subr.mxu0 0.0
    %1012 = vmatpush1.msra.mxu0 0.0
    %1013 = vmatprep.subr.mxu0 0.0
    %1014 = vmatpush1.msra.mxu0 0.0
    %1015 = vmatprep.subr.mxu0 0.0
    %1016 = vmatpush1.msra.mxu0 0.0
    %1017 = vmatprep.subr.mxu0 0.0
    %1018 = vmatpush1.msra.mxu0 0.0
    %1019 = vmatprep.subr.mxu0 0.0
    %1020 = vmatpush1.msra.mxu0 0.0
    %1021 = vmatprep.subr.mxu0 0.0
    %1022 = vmatpush1.msra.mxu0 0.0
    %1023 = vmatprep.subr.mxu0 0.0
    %1024 = vmatpush1.msra.mxu0 0.0
    %1025 = vmatprep.subr.mxu0 0.0
    %1026 = vmatpush1.msra.mxu0 0.0
    %1027 = vmatprep.subr.mxu0 0.0
    %1028 = vmatpush1.msra.mxu0 0.0
    %1029 = vmatprep.subr.mxu0 0.0
    %1030 = vmatpush1.msra.mxu0 0.0
    %1031 = vmatprep.subr.mxu0 0.0
    %1032 = vmatpush1.msra.mxu0 0.0
    %1033 = vmatprep.subr.mxu0 0.0
    %1034 = vmatpush1.msra.mxu0 0.0
    %1035 = vmatprep.subr.mxu0 0.0
    %1036 = vmatpush1.msra.mxu0 0.0
    %1037 = vmatprep.subr.mxu0 0.0
    %1038 = vmatpush1.msra.mxu0 0.0
    %1039 = vmatprep.subr.mxu0 0.0
    %1040 = vmatpush1.msra.mxu0 0.0
    %1041 = vmatprep.mubr.f32.mxu0 0.0
    %1042 = vmatmul.mubr.f32.gmra.mrb[0].mxu0 %v903
    %v1043 = vpop.f32.mrb[0].mxu0
    %v1044 = vadd.f32 0.0, %v1043
    %v1045 = vpop.f32.mrb[0].mxu0
    %1046 = vdwg.mxu0
    %s1047 = smul.u32 3, 3
    %s1048 = smul.addr %s1047, 8
    %s1049 = scalar_lea.vmem [#allocation3], %s1048
    %v1050 = vld [vmem:[%s1049] sm:$0xff]
    %v1051 = vadd.f32 %v1050, %v973
    %v1052 = vxor.u32 %v1051, 2147483648
    %v1053 = vmul.f32 %v1052, 1.442695
    %v1054 = vpow.pop %v1053
    %v1055 = vadd.f32 %v1054, 1.0
    %v1056 = vrcp.pop %v1055
    %v1057 = vmul.f32 1.0, %v1056
    %v1058 = vld [vmem:[%s1049 + $0x8] sm:$0xff]
    %v1059 = vadd.f32 %v1058, %v975
    %v1060 = vxor.u32 %v1059, 2147483648
    %v1061 = vmul.f32 %v1060, 1.442695
    %v1062 = vpow.pop %v1061
    %v1063 = vadd.f32 %v1062, 1.0
    %v1064 = vrcp.pop %v1063
    %v1065 = vmul.f32 1.0, %v1064
    %v1066 = vld [vmem:[%s1049 + $0x10] sm:$0xff]
    %v1067 = vadd.f32 %v1044, %v391
    %v1068 = vmul.f32 %v1057, %v1067
    %v1069 = vadd.f32 %v1066, %v1068
    %v1070 = vtanh.pop %v1069
    %v1071 = vsub.f32 1.0, %v1065
    %v1072 = vmul.f32 %v1071, %v1070
    %v1073 = vmul.f32 %v1065, %v903
    %v1074 = vadd.f32 %v1072, %v1073
    %s1075 = scalar_lea.vmem [#allocation7], 24
    %1076 = vst [vmem:[%s1075] sm:$0xff] %v1074
    %1077 = vmatprep.subr.mxu0 %v339
    %1078 = vmatpush1.msra.mxu0 %v338
    %1079 = vmatprep.subr.mxu0 %v342
    %1080 = vmatpush1.msra.mxu0 %v341
    %1081 = vmatprep.subr.mxu0 %v345
    %1082 = vmatpush1.msra.mxu0 %v344
    %1083 = vmatprep.subr.mxu0 %v348
    %1084 = vmatpush1.msra.mxu0 %v347
    %1085 = vmatprep.subr.mxu0 %v351
    %1086 = vmatpush1.msra.mxu0 %v350
    %1087 = vmatprep.subr.mxu0 %v354
    %1088 = vmatpush1.msra.mxu0 %v353
    %1089 = vmatprep.subr.mxu0 %v357
    %1090 = vmatpush1.msra.mxu0 %v356
    %1091 = vmatprep.subr.mxu0 %v360
    %1092 = vmatpush1.msra.mxu0 %v359
    %1093 = vmatprep.subr.mxu0 %v363
    %1094 = vmatpush1.msra.mxu0 %v362
    %1095 = vmatprep.subr.mxu0 %v366
    %1096 = vmatpush1.msra.mxu0 %v365
    %1097 = vmatprep.subr.mxu0 %v369
    %1098 = vmatpush1.msra.mxu0 %v368
    %1099 = vmatprep.subr.mxu0 %v372
    %1100 = vmatpush1.msra.mxu0 %v371
    %1101 = vmatprep.subr.mxu0 %v375
    %1102 = vmatpush1.msra.mxu0 %v374
    %1103 = vmatprep.subr.mxu0 %v378
    %1104 = vmatpush1.msra.mxu0 %v377
    %1105 = vmatprep.subr.mxu0 %v381
    %1106 = vmatpush1.msra.mxu0 %v380
    %1107 = vmatprep.subr.mxu0 %v384
    %1108 = vmatpush1.msra.mxu0 %v383
    %1109 = vmatprep.subr.mxu0 0.0
    %1110 = vmatpush1.msra.mxu0 0.0
    %1111 = vmatprep.subr.mxu0 0.0
    %1112 = vmatpush1.msra.mxu0 0.0
    %1113 = vmatprep.subr.mxu0 0.0
    %1114 = vmatpush1.msra.mxu0 0.0
    %1115 = vmatprep.subr.mxu0 0.0
    %1116 = vmatpush1.msra.mxu0 0.0
    %1117 = vmatprep.subr.mxu0 0.0
    %1118 = vmatpush1.msra.mxu0 0.0
    %1119 = vmatprep.subr.mxu0 0.0
    %1120 = vmatpush1.msra.mxu0 0.0
    %1121 = vmatprep.subr.mxu0 0.0
    %1122 = vmatpush1.msra.mxu0 0.0
    %1123 = vmatprep.subr.mxu0 0.0
    %1124 = vmatpush1.msra.mxu0 0.0
    %1125 = vmatprep.subr.mxu0 0.0
    %1126 = vmatpush1.msra.mxu0 0.0
    %1127 = vmatprep.subr.mxu0 0.0
    %1128 = vmatpush1.msra.mxu0 0.0
    %1129 = vmatprep.subr.mxu0 0.0
    %1130 = vmatpush1.msra.mxu0 0.0
    %1131 = vmatprep.subr.mxu0 0.0
    %1132 = vmatpush1.msra.mxu0 0.0
    %1133 = vmatprep.subr.mxu0 0.0
    %1134 = vmatpush1.msra.mxu0 0.0
    %1135 = vmatprep.subr.mxu0 0.0
    %1136 = vmatpush1.msra.mxu0 0.0
    %1137 = vmatprep.subr.mxu0 0.0
    %1138 = vmatpush1.msra.mxu0 0.0
    %1139 = vmatprep.subr.mxu0 0.0
    %1140 = vmatpush1.msra.mxu0 0.0
    %1141 = vmatprep.mubr.f32.mxu0 0.0
    %1142 = vmatmul.mubr.f32.gmra.mrb[0].mxu0 %v1074
    %v1143 = vpop.f32.mrb[0].mxu0
    %v1144 = vadd.f32 0.0, %v1143
    %v1145 = vpop.f32.mrb[0].mxu0
    %v1146 = vadd.f32 0.0, %v1145
    %1147 = vdwg.mxu0
    %1148 = vmatprep.subr.mxu0 0.0
    %1149 = vmatpush1.msra.mxu0 %v340
    %1150 = vmatprep.subr.mxu0 0.0
    %1151 = vmatpush1.msra.mxu0 %v343
    %1152 = vmatprep.subr.mxu0 0.0
    %1153 = vmatpush1.msra.mxu0 %v346
    %1154 = vmatprep.subr.mxu0 0.0
    %1155 = vmatpush1.msra.mxu0 %v349
    %1156 = vmatprep.subr.mxu0 0.0
    %1157 = vmatpush1.msra.mxu0 %v352
    %1158 = vmatprep.subr.mxu0 0.0
    %1159 = vmatpush1.msra.mxu0 %v355
    %1160 = vmatprep.subr.mxu0 0.0
    %1161 = vmatpush1.msra.mxu0 %v358
    %1162 = vmatprep.subr.mxu0 0.0
    %1163 = vmatpush1.msra.mxu0 %v361
    %1164 = vmatprep.subr.mxu0 0.0
    %1165 = vmatpush1.msra.mxu0 %v364
    %1166 = vmatprep.subr.mxu0 0.0
    %1167 = vmatpush1.msra.mxu0 %v367
    %1168 = vmatprep.subr.mxu0 0.0
    %1169 = vmatpush1.msra.mxu0 %v370
    %1170 = vmatprep.subr.mxu0 0.0
    %1171 = vmatpush1.msra.mxu0 %v373
    %1172 = vmatprep.subr.mxu0 0.0
    %1173 = vmatpush1.msra.mxu0 %v376
    %1174 = vmatprep.subr.mxu0 0.0
    %1175 = vmatpush1.msra.mxu0 %v379
    %1176 = vmatprep.subr.mxu0 0.0
    %1177 = vmatpush1.msra.mxu0 %v382
    %1178 = vmatprep.subr.mxu0 0.0
    %1179 = vmatpush1.msra.mxu0 %v385
    %1180 = vmatprep.subr.mxu0 0.0
    %1181 = vmatpush1.msra.mxu0 0.0
    %1182 = vmatprep.subr.mxu0 0.0
    %1183 = vmatpush1.msra.mxu0 0.0
    %1184 = vmatprep.subr.mxu0 0.0
    %1185 = vmatpush1.msra.mxu0 0.0
    %1186 = vmatprep.subr.mxu0 0.0
    %1187 = vmatpush1.msra.mxu0 0.0
    %1188 = vmatprep.subr.mxu0 0.0
    %1189 = vmatpush1.msra.mxu0 0.0
    %1190 = vmatprep.subr.mxu0 0.0
    %1191 = vmatpush1.msra.mxu0 0.0
    %1192 = vmatprep.subr.mxu0 0.0
    %1193 = vmatpush1.msra.mxu0 0.0
    %1194 = vmatprep.subr.mxu0 0.0
    %1195 = vmatpush1.msra.mxu0 0.0
    %1196 = vmatprep.subr.mxu0 0.0
    %1197 = vmatpush1.msra.mxu0 0.0
    %1198 = vmatprep.subr.mxu0 0.0
    %1199 = vmatpush1.msra.mxu0 0.0
    %1200 = vmatprep.subr.mxu0 0.0
    %1201 = vmatpush1.msra.mxu0 0.0
    %1202 = vmatprep.subr.mxu0 0.0
    %1203 = vmatpush1.msra.mxu0 0.0
    %1204 = vmatprep.subr.mxu0 0.0
    %1205 = vmatpush1.msra.mxu0 0.0
    %1206 = vmatprep.subr.mxu0 0.0
    %1207 = vmatpush1.msra.mxu0 0.0
    %1208 = vmatprep.subr.mxu0 0.0
    %1209 = vmatpush1.msra.mxu0 0.0
    %1210 = vmatprep.subr.mxu0 0.0
    %1211 = vmatpush1.msra.mxu0 0.0
    %1212 = vmatprep.mubr.f32.mxu0 0.0
    %1213 = vmatmul.mubr.f32.gmra.mrb[0].mxu0 %v1074
    %v1214 = vpop.f32.mrb[0].mxu0
    %v1215 = vadd.f32 0.0, %v1214
    %v1216 = vpop.f32.mrb[0].mxu0
    %1217 = vdwg.mxu0
    %s1218 = smul.u32 4, 3
    %s1219 = smul.addr %s1218, 8
    %s1220 = scalar_lea.vmem [#allocation3], %s1219
    %v1221 = vld [vmem:[%s1220] sm:$0xff]
    %v1222 = vadd.f32 %v1221, %v1144
    %v1223 = vxor.u32 %v1222, 2147483648
    %v1224 = vmul.f32 %v1223, 1.442695
    %v1225 = vpow.pop %v1224
    %v1226 = vadd.f32 %v1225, 1.0
    %v1227 = vrcp.pop %v1226
    %v1228 = vmul.f32 1.0, %v1227
    %v1229 = vld [vmem:[%s1220 + $0x8] sm:$0xff]
    %v1230 = vadd.f32 %v1229, %v1146
    %v1231 = vxor.u32 %v1230, 2147483648
    %v1232 = vmul.f32 %v1231, 1.442695
    %v1233 = vpow.pop %v1232
    %v1234 = vadd.f32 %v1233, 1.0
    %v1235 = vrcp.pop %v1234
    %v1236 = vmul.f32 1.0, %v1235
    %v1237 = vld [vmem:[%s1220 + $0x10] sm:$0xff]
    %v1238 = vadd.f32 %v1215, %v391
    %v1239 = vmul.f32 %v1228, %v1238
    %v1240 = vadd.f32 %v1237, %v1239
    %v1241 = vtanh.pop %v1240
    %v1242 = vsub.f32 1.0, %v1236
    %v1243 = vmul.f32 %v1242, %v1241
    %v1244 = vmul.f32 %v1236, %v1074
    %v1245 = vadd.f32 %v1243, %v1244
    %s1246 = scalar_lea.vmem [#allocation7], 32
    %1247 = vst [vmem:[%s1246] sm:$0xff] %v1245
    %1248 = vmatprep.subr.mxu0 %v339
    %1249 = vmatpush1.msra.mxu0 %v338
    %1250 = vmatprep.subr.mxu0 %v342
    %1251 = vmatpush1.msra.mxu0 %v341
    %1252 = vmatprep.subr.mxu0 %v345
    %1253 = vmatpush1.msra.mxu0 %v344
    %1254 = vmatprep.subr.mxu0 %v348
    %1255 = vmatpush1.msra.mxu0 %v347
    %1256 = vmatprep.subr.mxu0 %v351
    %1257 = vmatpush1.msra.mxu0 %v350
    %1258 = vmatprep.subr.mxu0 %v354
    %1259 = vmatpush1.msra.mxu0 %v353
    %1260 = vmatprep.subr.mxu0 %v357
    %1261 = vmatpush1.msra.mxu0 %v356
    %1262 = vmatprep.subr.mxu0 %v360
    %1263 = vmatpush1.msra.mxu0 %v359
    %1264 = vmatprep.subr.mxu0 %v363
    %1265 = vmatpush1.msra.mxu0 %v362
    %1266 = vmatprep.subr.mxu0 %v366
    %1267 = vmatpush1.msra.mxu0 %v365
    %1268 = vmatprep.subr.mxu0 %v369
    %1269 = vmatpush1.msra.mxu0 %v368
    %1270 = vmatprep.subr.mxu0 %v372
    %1271 = vmatpush1.msra.mxu0 %v371
    %1272 = vmatprep.subr.mxu0 %v375
    %1273 = vmatpush1.msra.mxu0 %v374
    %1274 = vmatprep.subr.mxu0 %v378
    %1275 = vmatpush1.msra.mxu0 %v377
    %1276 = vmatprep.subr.mxu0 %v381
    %1277 = vmatpush1.msra.mxu0 %v380
    %1278 = vmatprep.subr.mxu0 %v384
    %1279 = vmatpush1.msra.mxu0 %v383
    %1280 = vmatprep.subr.mxu0 0.0
    %1281 = vmatpush1.msra.mxu0 0.0
    %1282 = vmatprep.subr.mxu0 0.0
    %1283 = vmatpush1.msra.mxu0 0.0
    %1284 = vmatprep.subr.mxu0 0.0
    %1285 = vmatpush1.msra.mxu0 0.0
    %1286 = vmatprep.subr.mxu0 0.0
    %1287 = vmatpush1.msra.mxu0 0.0
    %1288 = vmatprep.subr.mxu0 0.0
    %1289 = vmatpush1.msra.mxu0 0.0
    %1290 = vmatprep.subr.mxu0 0.0
    %1291 = vmatpush1.msra.mxu0 0.0
    %1292 = vmatprep.subr.mxu0 0.0
    %1293 = vmatpush1.msra.mxu0 0.0
    %1294 = vmatprep.subr.mxu0 0.0
    %1295 = vmatpush1.msra.mxu0 0.0
    %1296 = vmatprep.subr.mxu0 0.0
    %1297 = vmatpush1.msra.mxu0 0.0
    %1298 = vmatprep.subr.mxu0 0.0
    %1299 = vmatpush1.msra.mxu0 0.0
    %1300 = vmatprep.subr.mxu0 0.0
    %1301 = vmatpush1.msra.mxu0 0.0
    %1302 = vmatprep.subr.mxu0 0.0
    %1303 = vmatpush1.msra.mxu0 0.0
    %1304 = vmatprep.subr.mxu0 0.0
    %1305 = vmatpush1.msra.mxu0 0.0
    %1306 = vmatprep.subr.mxu0 0.0
    %1307 = vmatpush1.msra.mxu0 0.0
    %1308 = vmatprep.subr.mxu0 0.0
    %1309 = vmatpush1.msra.mxu0 0.0
    %1310 = vmatprep.subr.mxu0 0.0
    %1311 = vmatpush1.msra.mxu0 0.0
    %1312 = vmatprep.mubr.f32.mxu0 0.0
    %1313 = vmatmul.mubr.f32.gmra.mrb[0].mxu0 %v1245
    %v1314 = vpop.f32.mrb[0].mxu0
    %v1315 = vadd.f32 0.0, %v1314
    %v1316 = vpop.f32.mrb[0].mxu0
    %v1317 = vadd.f32 0.0, %v1316
    %1318 = vdwg.mxu0
    %1319 = vmatprep.subr.mxu0 0.0
    %1320 = vmatpush1.msra.mxu0 %v340
    %1321 = vmatprep.subr.mxu0 0.0
    %1322 = vmatpush1.msra.mxu0 %v343
    %1323 = vmatprep.subr.mxu0 0.0
    %1324 = vmatpush1.msra.mxu0 %v346
    %1325 = vmatprep.subr.mxu0 0.0
    %1326 = vmatpush1.msra.mxu0 %v349
    %1327 = vmatprep.subr.mxu0 0.0
    %1328 = vmatpush1.msra.mxu0 %v352
    %1329 = vmatprep.subr.mxu0 0.0
    %1330 = vmatpush1.msra.mxu0 %v355
    %1331 = vmatprep.subr.mxu0 0.0
    %1332 = vmatpush1.msra.mxu0 %v358
    %1333 = vmatprep.subr.mxu0 0.0
    %1334 = vmatpush1.msra.mxu0 %v361
    %1335 = vmatprep.subr.mxu0 0.0
    %1336 = vmatpush1.msra.mxu0 %v364
    %1337 = vmatprep.subr.mxu0 0.0
    %1338 = vmatpush1.msra.mxu0 %v367
    %1339 = vmatprep.subr.mxu0 0.0
    %1340 = vmatpush1.msra.mxu0 %v370
    %1341 = vmatprep.subr.mxu0 0.0
    %1342 = vmatpush1.msra.mxu0 %v373
    %1343 = vmatprep.subr.mxu0 0.0
    %1344 = vmatpush1.msra.mxu0 %v376
    %1345 = vmatprep.subr.mxu0 0.0
    %1346 = vmatpush1.msra.mxu0 %v379
    %1347 = vmatprep.subr.mxu0 0.0
    %1348 = vmatpush1.msra.mxu0 %v382
    %1349 = vmatprep.subr.mxu0 0.0
    %1350 = vmatpush1.msra.mxu0 %v385
    %1351 = vmatprep.subr.mxu0 0.0
    %1352 = vmatpush1.msra.mxu0 0.0
    %1353 = vmatprep.subr.mxu0 0.0
    %1354 = vmatpush1.msra.mxu0 0.0
    %1355 = vmatprep.subr.mxu0 0.0
    %1356 = vmatpush1.msra.mxu0 0.0
    %1357 = vmatprep.subr.mxu0 0.0
    %1358 = vmatpush1.msra.mxu0 0.0
    %1359 = vmatprep.subr.mxu0 0.0
    %1360 = vmatpush1.msra.mxu0 0.0
    %1361 = vmatprep.subr.mxu0 0.0
    %1362 = vmatpush1.msra.mxu0 0.0
    %1363 = vmatprep.subr.mxu0 0.0
    %1364 = vmatpush1.msra.mxu0 0.0
    %1365 = vmatprep.subr.mxu0 0.0
    %1366 = vmatpush1.msra.mxu0 0.0
    %1367 = vmatprep.subr.mxu0 0.0
    %1368 = vmatpush1.msra.mxu0 0.0
    %1369 = vmatprep.subr.mxu0 0.0
    %1370 = vmatpush1.msra.mxu0 0.0
    %1371 = vmatprep.subr.mxu0 0.0
    %1372 = vmatpush1.msra.mxu0 0.0
    %1373 = vmatprep.subr.mxu0 0.0
    %1374 = vmatpush1.msra.mxu0 0.0
    %1375 = vmatprep.subr.mxu0 0.0
    %1376 = vmatpush1.msra.mxu0 0.0
    %1377 = vmatprep.subr.mxu0 0.0
    %1378 = vmatpush1.msra.mxu0 0.0
    %1379 = vmatprep.subr.mxu0 0.0
    %1380 = vmatpush1.msra.mxu0 0.0
    %1381 = vmatprep.subr.mxu0 0.0
    %1382 = vmatpush1.msra.mxu0 0.0
    %1383 = vmatprep.mubr.f32.mxu0 0.0
    %1384 = vmatmul.mubr.f32.gmra.mrb[0].mxu0 %v1245
    %v1385 = vpop.f32.mrb[0].mxu0
    %v1386 = vadd.f32 0.0, %v1385
    %v1387 = vpop.f32.mrb[0].mxu0
    %1388 = vdwg.mxu0
    %s1389 = smul.u32 5, 3
    %s1390 = smul.addr %s1389, 8
    %s1391 = scalar_lea.vmem [#allocation3], %s1390
    %v1392 = vld [vmem:[%s1391] sm:$0xff]
    %v1393 = vadd.f32 %v1392, %v1315
    %v1394 = vxor.u32 %v1393, 2147483648
    %v1395 = vmul.f32 %v1394, 1.442695
    %v1396 = vpow.pop %v1395
    %v1397 = vadd.f32 %v1396, 1.0
    %v1398 = vrcp.pop %v1397
    %v1399 = vmul.f32 1.0, %v1398
    %v1400 = vld [vmem:[%s1391 + $0x8] sm:$0xff]
    %v1401 = vadd.f32 %v1400, %v1317
    %v1402 = vxor.u32 %v1401, 2147483648
    %v1403 = vmul.f32 %v1402, 1.442695
    %v1404 = vpow.pop %v1403
    %v1405 = vadd.f32 %v1404, 1.0
    %v1406 = vrcp.pop %v1405
    %v1407 = vmul.f32 1.0, %v1406
    %v1408 = vld [vmem:[%s1391 + $0x10] sm:$0xff]
    %v1409 = vadd.f32 %v1386, %v391
    %v1410 = vmul.f32 %v1399, %v1409
    %v1411 = vadd.f32 %v1408, %v1410
    %v1412 = vtanh.pop %v1411
    %v1413 = vsub.f32 1.0, %v1407
    %v1414 = vmul.f32 %v1413, %v1412
    %v1415 = vmul.f32 %v1407, %v1245
    %v1416 = vadd.f32 %v1414, %v1415
    %s1417 = scalar_lea.vmem [#allocation7], 40
    %1418 = vst [vmem:[%s1417] sm:$0xff] %v1416
    %1419 = vmatprep.subr.mxu0 %v339
    %1420 = vmatpush1.msra.mxu0 %v338
    %1421 = vmatprep.subr.mxu0 %v342
    %1422 = vmatpush1.msra.mxu0 %v341
    %1423 = vmatprep.subr.mxu0 %v345
    %1424 = vmatpush1.msra.mxu0 %v344
    %1425 = vmatprep.subr.mxu0 %v348
    %1426 = vmatpush1.msra.mxu0 %v347
    %1427 = vmatprep.subr.mxu0 %v351
    %1428 = vmatpush1.msra.mxu0 %v350
    %1429 = vmatprep.subr.mxu0 %v354
    %1430 = vmatpush1.msra.mxu0 %v353
    %1431 = vmatprep.subr.mxu0 %v357
    %1432 = vmatpush1.msra.mxu0 %v356
    %1433 = vmatprep.subr.mxu0 %v360
    %1434 = vmatpush1.msra.mxu0 %v359
    %1435 = vmatprep.subr.mxu0 %v363
    %1436 = vmatpush1.msra.mxu0 %v362
    %1437 = vmatprep.subr.mxu0 %v366
    %1438 = vmatpush1.msra.mxu0 %v365
    %1439 = vmatprep.subr.mxu0 %v369
    %1440 = vmatpush1.msra.mxu0 %v368
    %1441 = vmatprep.subr.mxu0 %v372
    %1442 = vmatpush1.msra.mxu0 %v371
    %1443 = vmatprep.subr.mxu0 %v375
    %1444 = vmatpush1.msra.mxu0 %v374
    %1445 = vmatprep.subr.mxu0 %v378
    %1446 = vmatpush1.msra.mxu0 %v377
    %1447 = vmatprep.subr.mxu0 %v381
    %1448 = vmatpush1.msra.mxu0 %v380
    %1449 = vmatprep.subr.mxu0 %v384
    %1450 = vmatpush1.msra.mxu0 %v383
    %1451 = vmatprep.subr.mxu0 0.0
    %1452 = vmatpush1.msra.mxu0 0.0
    %1453 = vmatprep.subr.mxu0 0.0
    %1454 = vmatpush1.msra.mxu0 0.0
    %1455 = vmatprep.subr.mxu0 0.0
    %1456 = vmatpush1.msra.mxu0 0.0
    %1457 = vmatprep.subr.mxu0 0.0
    %1458 = vmatpush1.msra.mxu0 0.0
    %1459 = vmatprep.subr.mxu0 0.0
    %1460 = vmatpush1.msra.mxu0 0.0
    %1461 = vmatprep.subr.mxu0 0.0
    %1462 = vmatpush1.msra.mxu0 0.0
    %1463 = vmatprep.subr.mxu0 0.0
    %1464 = vmatpush1.msra.mxu0 0.0
    %1465 = vmatprep.subr.mxu0 0.0
    %1466 = vmatpush1.msra.mxu0 0.0
    %1467 = vmatprep.subr.mxu0 0.0
    %1468 = vmatpush1.msra.mxu0 0.0
    %1469 = vmatprep.subr.mxu0 0.0
    %1470 = vmatpush1.msra.mxu0 0.0
    %1471 = vmatprep.subr.mxu0 0.0
    %1472 = vmatpush1.msra.mxu0 0.0
    %1473 = vmatprep.subr.mxu0 0.0
    %1474 = vmatpush1.msra.mxu0 0.0
    %1475 = vmatprep.subr.mxu0 0.0
    %1476 = vmatpush1.msra.mxu0 0.0
    %1477 = vmatprep.subr.mxu0 0.0
    %1478 = vmatpush1.msra.mxu0 0.0
    %1479 = vmatprep.subr.mxu0 0.0
    %1480 = vmatpush1.msra.mxu0 0.0
    %1481 = vmatprep.subr.mxu0 0.0
    %1482 = vmatpush1.msra.mxu0 0.0
    %1483 = vmatprep.mubr.f32.mxu0 0.0
    %1484 = vmatmul.mubr.f32.gmra.mrb[0].mxu0 %v1416
    %v1485 = vpop.f32.mrb[0].mxu0
    %v1486 = vadd.f32 0.0, %v1485
    %v1487 = vpop.f32.mrb[0].mxu0
    %v1488 = vadd.f32 0.0, %v1487
    %1489 = vdwg.mxu0
    %1490 = vmatprep.subr.mxu0 0.0
    %1491 = vmatpush1.msra.mxu0 %v340
    %1492 = vmatprep.subr.mxu0 0.0
    %1493 = vmatpush1.msra.mxu0 %v343
    %1494 = vmatprep.subr.mxu0 0.0
    %1495 = vmatpush1.msra.mxu0 %v346
    %1496 = vmatprep.subr.mxu0 0.0
    %1497 = vmatpush1.msra.mxu0 %v349
    %1498 = vmatprep.subr.mxu0 0.0
    %1499 = vmatpush1.msra.mxu0 %v352
    %1500 = vmatprep.subr.mxu0 0.0
    %1501 = vmatpush1.msra.mxu0 %v355
    %1502 = vmatprep.subr.mxu0 0.0
    %1503 = vmatpush1.msra.mxu0 %v358
    %1504 = vmatprep.subr.mxu0 0.0
    %1505 = vmatpush1.msra.mxu0 %v361
    %1506 = vmatprep.subr.mxu0 0.0
    %1507 = vmatpush1.msra.mxu0 %v364
    %1508 = vmatprep.subr.mxu0 0.0
    %1509 = vmatpush1.msra.mxu0 %v367
    %1510 = vmatprep.subr.mxu0 0.0
    %1511 = vmatpush1.msra.mxu0 %v370
    %1512 = vmatprep.subr.mxu0 0.0
    %1513 = vmatpush1.msra.mxu0 %v373
    %1514 = vmatprep.subr.mxu0 0.0
    %1515 = vmatpush1.msra.mxu0 %v376
    %1516 = vmatprep.subr.mxu0 0.0
    %1517 = vmatpush1.msra.mxu0 %v379
    %1518 = vmatprep.subr.mxu0 0.0
    %1519 = vmatpush1.msra.mxu0 %v382
    %1520 = vmatprep.subr.mxu0 0.0
    %1521 = vmatpush1.msra.mxu0 %v385
    %1522 = vmatprep.subr.mxu0 0.0
    %1523 = vmatpush1.msra.mxu0 0.0
    %1524 = vmatprep.subr.mxu0 0.0
    %1525 = vmatpush1.msra.mxu0 0.0
    %1526 = vmatprep.subr.mxu0 0.0
    %1527 = vmatpush1.msra.mxu0 0.0
    %1528 = vmatprep.subr.mxu0 0.0
    %1529 = vmatpush1.msra.mxu0 0.0
    %1530 = vmatprep.subr.mxu0 0.0
    %1531 = vmatpush1.msra.mxu0 0.0
    %1532 = vmatprep.subr.mxu0 0.0
    %1533 = vmatpush1.msra.mxu0 0.0
    %1534 = vmatprep.subr.mxu0 0.0
    %1535 = vmatpush1.msra.mxu0 0.0
    %1536 = vmatprep.subr.mxu0 0.0
    %1537 = vmatpush1.msra.mxu0 0.0
    %1538 = vmatprep.subr.mxu0 0.0
    %1539 = vmatpush1.msra.mxu0 0.0
    %1540 = vmatprep.subr.mxu0 0.0
    %1541 = vmatpush1.msra.mxu0 0.0
    %1542 = vmatprep.subr.mxu0 0.0
    %1543 = vmatpush1.msra.mxu0 0.0
    %1544 = vmatprep.subr.mxu0 0.0
    %1545 = vmatpush1.msra.mxu0 0.0
    %1546 = vmatprep.subr.mxu0 0.0
    %1547 = vmatpush1.msra.mxu0 0.0
    %1548 = vmatprep.subr.mxu0 0.0
    %1549 = vmatpush1.msra.mxu0 0.0
    %1550 = vmatprep.subr.mxu0 0.0
    %1551 = vmatpush1.msra.mxu0 0.0
    %1552 = vmatprep.subr.mxu0 0.0
    %1553 = vmatpush1.msra.mxu0 0.0
    %1554 = vmatprep.mubr.f32.mxu0 0.0
    %1555 = vmatmul.mubr.f32.gmra.mrb[0].mxu0 %v1416
    %v1556 = vpop.f32.mrb[0].mxu0
    %v1557 = vadd.f32 0.0, %v1556
    %v1558 = vpop.f32.mrb[0].mxu0
    %1559 = vdwg.mxu0
    %s1560 = smul.u32 6, 3
    %s1561 = smul.addr %s1560, 8
    %s1562 = scalar_lea.vmem [#allocation3], %s1561
    %v1563 = vld [vmem:[%s1562] sm:$0xff]
    %v1564 = vadd.f32 %v1563, %v1486
    %v1565 = vxor.u32 %v1564, 2147483648
    %v1566 = vmul.f32 %v1565, 1.442695
    %v1567 = vpow.pop %v1566
    %v1568 = vadd.f32 %v1567, 1.0
    %v1569 = vrcp.pop %v1568
    %v1570 = vmul.f32 1.0, %v1569
    %v1571 = vld [vmem:[%s1562 + $0x8] sm:$0xff]
    %v1572 = vadd.f32 %v1571, %v1488
    %v1573 = vxor.u32 %v1572, 2147483648
    %v1574 = vmul.f32 %v1573, 1.442695
    %v1575 = vpow.pop %v1574
    %v1576 = vadd.f32 %v1575, 1.0
    %v1577 = vrcp.pop %v1576
    %v1578 = vmul.f32 1.0, %v1577
    %v1579 = vld [vmem:[%s1562 + $0x10] sm:$0xff]
    %v1580 = vadd.f32 %v1557, %v391
    %v1581 = vmul.f32 %v1570, %v1580
    %v1582 = vadd.f32 %v1579, %v1581
    %v1583 = vtanh.pop %v1582
    %v1584 = vsub.f32 1.0, %v1578
    %v1585 = vmul.f32 %v1584, %v1583
    %v1586 = vmul.f32 %v1578, %v1416
    %v1587 = vadd.f32 %v1585, %v1586
    %s1588 = scalar_lea.vmem [#allocation7], 48
    %1589 = vst [vmem:[%s1588] sm:$0xff] %v1587
    %1590 = vmatprep.subr.mxu0 %v339
    %1591 = vmatpush1.msra.mxu0 %v338
    %1592 = vmatprep.subr.mxu0 %v342
    %1593 = vmatpush1.msra.mxu0 %v341
    %1594 = vmatprep.subr.mxu0 %v345
    %1595 = vmatpush1.msra.mxu0 %v344
    %1596 = vmatprep.subr.mxu0 %v348
    %1597 = vmatpush1.msra.mxu0 %v347
    %1598 = vmatprep.subr.mxu0 %v351
    %1599 = vmatpush1.msra.mxu0 %v350
    %1600 = vmatprep.subr.mxu0 %v354
    %1601 = vmatpush1.msra.mxu0 %v353
    %1602 = vmatprep.subr.mxu0 %v357
    %1603 = vmatpush1.msra.mxu0 %v356
    %1604 = vmatprep.subr.mxu0 %v360
    %1605 = vmatpush1.msra.mxu0 %v359
    %1606 = vmatprep.subr.mxu0 %v363
    %1607 = vmatpush1.msra.mxu0 %v362
    %1608 = vmatprep.subr.mxu0 %v366
    %1609 = vmatpush1.msra.mxu0 %v365
    %1610 = vmatprep.subr.mxu0 %v369
    %1611 = vmatpush1.msra.mxu0 %v368
    %1612 = vmatprep.subr.mxu0 %v372
    %1613 = vmatpush1.msra.mxu0 %v371
    %1614 = vmatprep.subr.mxu0 %v375
    %1615 = vmatpush1.msra.mxu0 %v374
    %1616 = vmatprep.subr.mxu0 %v378
    %1617 = vmatpush1.msra.mxu0 %v377
    %1618 = vmatprep.subr.mxu0 %v381
    %1619 = vmatpush1.msra.mxu0 %v380
    %1620 = vmatprep.subr.mxu0 %v384
    %1621 = vmatpush1.msra.mxu0 %v383
    %1622 = vmatprep.subr.mxu0 0.0
    %1623 = vmatpush1.msra.mxu0 0.0
    %1624 = vmatprep.subr.mxu0 0.0
    %1625 = vmatpush1.msra.mxu0 0.0
    %1626 = vmatprep.subr.mxu0 0.0
    %1627 = vmatpush1.msra.mxu0 0.0
    %1628 = vmatprep.subr.mxu0 0.0
    %1629 = vmatpush1.msra.mxu0 0.0
    %1630 = vmatprep.subr.mxu0 0.0
    %1631 = vmatpush1.msra.mxu0 0.0
    %1632 = vmatprep.subr.mxu0 0.0
    %1633 = vmatpush1.msra.mxu0 0.0
    %1634 = vmatprep.subr.mxu0 0.0
    %1635 = vmatpush1.msra.mxu0 0.0
    %1636 = vmatprep.subr.mxu0 0.0
    %1637 = vmatpush1.msra.mxu0 0.0
    %1638 = vmatprep.subr.mxu0 0.0
    %1639 = vmatpush1.msra.mxu0 0.0
    %1640 = vmatprep.subr.mxu0 0.0
    %1641 = vmatpush1.msra.mxu0 0.0
    %1642 = vmatprep.subr.mxu0 0.0
    %1643 = vmatpush1.msra.mxu0 0.0
    %1644 = vmatprep.subr.mxu0 0.0
    %1645 = vmatpush1.msra.mxu0 0.0
    %1646 = vmatprep.subr.mxu0 0.0
    %1647 = vmatpush1.msra.mxu0 0.0
    %1648 = vmatprep.subr.mxu0 0.0
    %1649 = vmatpush1.msra.mxu0 0.0
    %1650 = vmatprep.subr.mxu0 0.0
    %1651 = vmatpush1.msra.mxu0 0.0
    %1652 = vmatprep.subr.mxu0 0.0
    %1653 = vmatpush1.msra.mxu0 0.0
    %1654 = vmatprep.mubr.f32.mxu0 0.0
    %1655 = vmatmul.mubr.f32.gmra.mrb[0].mxu0 %v1587
    %v1656 = vpop.f32.mrb[0].mxu0
    %v1657 = vadd.f32 0.0, %v1656
    %v1658 = vpop.f32.mrb[0].mxu0
    %v1659 = vadd.f32 0.0, %v1658
    %1660 = vdwg.mxu0
    %1661 = vmatprep.subr.mxu0 0.0
    %1662 = vmatpush1.msra.mxu0 %v340
    %1663 = vmatprep.subr.mxu0 0.0
    %1664 = vmatpush1.msra.mxu0 %v343
    %1665 = vmatprep.subr.mxu0 0.0
    %1666 = vmatpush1.msra.mxu0 %v346
    %1667 = vmatprep.subr.mxu0 0.0
    %1668 = vmatpush1.msra.mxu0 %v349
    %1669 = vmatprep.subr.mxu0 0.0
    %1670 = vmatpush1.msra.mxu0 %v352
    %1671 = vmatprep.subr.mxu0 0.0
    %1672 = vmatpush1.msra.mxu0 %v355
    %1673 = vmatprep.subr.mxu0 0.0
    %1674 = vmatpush1.msra.mxu0 %v358
    %1675 = vmatprep.subr.mxu0 0.0
    %1676 = vmatpush1.msra.mxu0 %v361
    %1677 = vmatprep.subr.mxu0 0.0
    %1678 = vmatpush1.msra.mxu0 %v364
    %1679 = vmatprep.subr.mxu0 0.0
    %1680 = vmatpush1.msra.mxu0 %v367
    %1681 = vmatprep.subr.mxu0 0.0
    %1682 = vmatpush1.msra.mxu0 %v370
    %1683 = vmatprep.subr.mxu0 0.0
    %1684 = vmatpush1.msra.mxu0 %v373
    %1685 = vmatprep.subr.mxu0 0.0
    %1686 = vmatpush1.msra.mxu0 %v376
    %1687 = vmatprep.subr.mxu0 0.0
    %1688 = vmatpush1.msra.mxu0 %v379
    %1689 = vmatprep.subr.mxu0 0.0
    %1690 = vmatpush1.msra.mxu0 %v382
    %1691 = vmatprep.subr.mxu0 0.0
    %1692 = vmatpush1.msra.mxu0 %v385
    %1693 = vmatprep.subr.mxu0 0.0
    %1694 = vmatpush1.msra.mxu0 0.0
    %1695 = vmatprep.subr.mxu0 0.0
    %1696 = vmatpush1.msra.mxu0 0.0
    %1697 = vmatprep.subr.mxu0 0.0
    %1698 = vmatpush1.msra.mxu0 0.0
    %1699 = vmatprep.subr.mxu0 0.0
    %1700 = vmatpush1.msra.mxu0 0.0
    %1701 = vmatprep.subr.mxu0 0.0
    %1702 = vmatpush1.msra.mxu0 0.0
    %1703 = vmatprep.subr.mxu0 0.0
    %1704 = vmatpush1.msra.mxu0 0.0
    %1705 = vmatprep.subr.mxu0 0.0
    %1706 = vmatpush1.msra.mxu0 0.0
    %1707 = vmatprep.subr.mxu0 0.0
    %1708 = vmatpush1.msra.mxu0 0.0
    %1709 = vmatprep.subr.mxu0 0.0
    %1710 = vmatpush1.msra.mxu0 0.0
    %1711 = vmatprep.subr.mxu0 0.0
    %1712 = vmatpush1.msra.mxu0 0.0
    %1713 = vmatprep.subr.mxu0 0.0
    %1714 = vmatpush1.msra.mxu0 0.0
    %1715 = vmatprep.subr.mxu0 0.0
    %1716 = vmatpush1.msra.mxu0 0.0
    %1717 = vmatprep.subr.mxu0 0.0
    %1718 = vmatpush1.msra.mxu0 0.0
    %1719 = vmatprep.subr.mxu0 0.0
    %1720 = vmatpush1.msra.mxu0 0.0
    %1721 = vmatprep.subr.mxu0 0.0
    %1722 = vmatpush1.msra.mxu0 0.0
    %1723 = vmatprep.subr.mxu0 0.0
    %1724 = vmatpush1.msra.mxu0 0.0
    %1725 = vmatprep.mubr.f32.mxu0 0.0
    %1726 = vmatmul.mubr.f32.gmra.mrb[0].mxu0 %v1587
    %v1727 = vpop.f32.mrb[0].mxu0
    %v1728 = vadd.f32 0.0, %v1727
    %v1729 = vpop.f32.mrb[0].mxu0
    %1730 = vdwg.mxu0
    %s1731 = smul.u32 7, 3
    %s1732 = smul.addr %s1731, 8
    %s1733 = scalar_lea.vmem [#allocation3], %s1732
    %v1734 = vld [vmem:[%s1733] sm:$0xff]
    %v1735 = vadd.f32 %v1734, %v1657
    %v1736 = vxor.u32 %v1735, 2147483648
    %v1737 = vmul.f32 %v1736, 1.442695
    %v1738 = vpow.pop %v1737
    %v1739 = vadd.f32 %v1738, 1.0
    %v1740 = vrcp.pop %v1739
    %v1741 = vmul.f32 1.0, %v1740
    %v1742 = vld [vmem:[%s1733 + $0x8] sm:$0xff]
    %v1743 = vadd.f32 %v1742, %v1659
    %v1744 = vxor.u32 %v1743, 2147483648
    %v1745 = vmul.f32 %v1744, 1.442695
    %v1746 = vpow.pop %v1745
    %v1747 = vadd.f32 %v1746, 1.0
    %v1748 = vrcp.pop %v1747
    %v1749 = vmul.f32 1.0, %v1748
    %v1750 = vld [vmem:[%s1733 + $0x10] sm:$0xff]
    %v1751 = vadd.f32 %v1728, %v391
    %v1752 = vmul.f32 %v1741, %v1751
    %v1753 = vadd.f32 %v1750, %v1752
    %v1754 = vtanh.pop %v1753
    %v1755 = vsub.f32 1.0, %v1749
    %v1756 = vmul.f32 %v1755, %v1754
    %v1757 = vmul.f32 %v1749, %v1587
    %v1758 = vadd.f32 %v1756, %v1757
    %s1759 = scalar_lea.vmem [#allocation7], 56
    %1760 = vst [vmem:[%s1759] sm:$0xff] %v1758
    %1761 = vst [vmem:[#allocation2] sm:$0xff] %v1758
    // Predicated region
    $region30: #{tpu_custom_call.1} parent=1 // pred_check
      _
    $region31: #{tpu_custom_call.1} parent=1 // pred_check_branch
      %1763 = sbr.rel (0) target = $region33
    $region32: #{tpu_custom_call.1} parent=1 // pred_region
      %s1765 = ssub.s32 1024, 1024
      %1766 = vsyncadd [#allocation6], %s1765
      %s1767 = sshll.u32 [#allocation7], 4
      %s1768 = int_to_ptr.vmem [resolvable:$true] %s1767
      %1773 = dma.vmem_to_hbm [thread:$0]  %s1768, 1024, %s5, [#allocation6], 128, 128, 8
    $region33: #{tpu_custom_call.1} parent=1 // pred_fallthru
      _
    // Predicated region
    $region34: #{tpu_custom_call.1} parent=1 // pred_check
      _
    $region35: #{tpu_custom_call.1} parent=1 // pred_check_branch
      %1775 = sbr.rel (0) target = $region37
    $region36: #{tpu_custom_call.1} parent=1 // pred_region
      %1776 = dma.done [#allocation6], 1024
    $region37: #{tpu_custom_call.1} parent=1 // pred_fallthru
      _
    %1777 = vsyncpa [#allocation5], 1
    %1778 = vsyncpa [#allocation6], 1

</llo_original>
